<compile_context>
chip_gen: v5e
topology: v5e:2x2
jax: 0.10.0
libtpu: 0.0.40
codegen_flags: <defaults>
</compile_context>

<pallas_src>
import functools

import jax
import jax.numpy as jnp
from jax.experimental import pallas as pl
from jax.experimental.pallas import tpu as pltpu


def _round_up(x, m):
    return (x + m - 1) // m * m


def conv_stats_kernel(x_ref, w1_ref, b1_ref, w2_ref, b2_ref,
                      y_ref, stats_ref, c1_ref, *, tile_h, img_h):
    # x_ref:     (1, H+4, W+2, Cp) bf16  spatially pre-padded input (resident per batch)
    # w1_ref:    (9, Cp, Cp)       bf16  conv1 taps, j = kh*3+kw, layout [ci, co]
    # b1_ref:    (1, Cp)           f32
    # w2_ref:    (9, Cp, Cp)       bf16  conv2 taps
    # b2_ref:    (1, Cp)           f32
    # y_ref:     (1, tH, W, Cp)    bf16  pre-BN double-conv output tile
    # stats_ref: (1, 1, 2, Cp)     f32   per-tile per-channel [sum, sum_sq]
    # c1_ref:    (tH+2, W+2, Cp)   bf16  conv1 halo tile scratch (border cols zero)
    tH = tile_h
    H = img_h
    W = y_ref.shape[2]
    Cp = y_ref.shape[3]

    i = pl.program_id(1)
    r0 = pl.multiple_of(i * tH, tH)          # first output row of this tile

    # ---- conv1 on (tH+2) halo rows x W cols: 9 shift-accumulate MXU matmuls ----
    xs = x_ref[pl.ds(0, 1), pl.ds(r0, tH + 4), :, :][0]   # (tH+4, W+2, Cp) bf16
    acc1 = jnp.zeros(((tH + 2) * W, Cp), jnp.float32)
    for dh in range(3):
        for dw in range(3):
            op = xs[dh:dh + tH + 2, dw:dw + W, :].reshape((tH + 2) * W, Cp)
            acc1 += jnp.dot(op, w1_ref[dh * 3 + dw],
                            preferred_element_type=jnp.float32)
    acc1 = acc1 + b1_ref[...]

    # conv2's SAME padding treats out-of-image conv1 outputs as zero (NOT as a
    # conv over zero-padded input), so zero the halo rows that fall outside.
    k = jax.lax.broadcasted_iota(jnp.int32, (tH + 2, 1, 1), 0)
    g = r0 - 1 + k                                         # global conv1 output row
    valid = (g >= 0) & (g < H)
    c1 = jnp.where(valid, acc1.reshape(tH + 2, W, Cp), 0.0)

    # Stage the conv1 tile; only the two halo columns are zero-filled (cheap).
    c1_ref[:, 1:W + 1, :] = c1.astype(jnp.bfloat16)
    c1_ref[:, 0:1, :] = jnp.zeros((tH + 2, 1, Cp), jnp.bfloat16)
    c1_ref[:, W + 1:W + 2, :] = jnp.zeros((tH + 2, 1, Cp), jnp.bfloat16)

    # ---- conv2 on the exact tile: 9 shift-accumulate MXU matmuls ----
    acc2 = jnp.zeros((tH * W, Cp), jnp.float32)
    for dh in range(3):
        for dw in range(3):
            op = c1_ref[dh:dh + tH, dw:dw + W, :].reshape(tH * W, Cp)
            acc2 += jnp.dot(op, w2_ref[dh * 3 + dw],
                            preferred_element_type=jnp.float32)
    acc2 = acc2 + b2_ref[...]

    # bf16 inter-pass intermediate (stats stay f32, var clamped in the wrapper).
    y_ref[...] = acc2.astype(jnp.bfloat16).reshape(1, tH, W, Cp)

    s = jnp.sum(acc2, axis=0, keepdims=True)                       # (1, Cp)
    ss = jnp.sum(acc2 * acc2, axis=0, keepdims=True)               # (1, Cp)
    stats_ref[:, :, 0:1, :] = s.reshape(1, 1, 1, Cp)
    stats_ref[:, :, 1:2, :] = ss.reshape(1, 1, 1, Cp)


def bn_upconv_kernel(y_ref, scale_ref, shift_ref, wt_ref, bt_ref, out_ref):
    # y_ref:     (1, tH, W, Cp)  bf16  pre-BN activations
    # scale_ref: (1, Cp)         f32   gamma * rsqrt(var + eps)
    # shift_ref: (1, Cp)         f32   beta - mean * scale
    # wt_ref:    (Cp, Tp)        bf16  fused transpose-conv taps (tap-major lanes)
    # bt_ref:    (1, Tp)         f32   tiled transpose-conv bias (zero-padded)
    # out_ref:   (1, tH, W, Tp)  f32   lane-dense fused tap slab
    _, tH, W, Cp = y_ref.shape
    Tp = out_ref.shape[3]

    y = y_ref[...].reshape(tH * W, Cp).astype(jnp.float32)
    z = jnp.maximum(y * scale_ref[...] + shift_ref[...], 0.0)      # BN + relu
    t = jnp.dot(z.astype(jnp.bfloat16), wt_ref[...],
                preferred_element_type=jnp.float32) + bt_ref[...]  # (tH*W, Tp)
    out_ref[...] = jnp.maximum(t, 0.0).reshape(1, tH, W, Tp)


def upblock_forward(x1, x2, params, eps=1e-5, tile_h=8):
    """x1, x2: NCHW float32.  Returns NCHW float32 of shape (N, Cout, 2H, 2W)."""
    x = jnp.concatenate([x2, x1], axis=1)                 # torch.cat([x2, x1], dim=1)
    x = jnp.transpose(x, (0, 2, 3, 1))                    # NCHW -> NHWC
    N, H, W, C = x.shape
    O = params['wt'].shape[1]

    Cp = max(128, _round_up(C, 128))                      # lane-padded channels
    Tp = max(128, _round_up(4 * O, 128))                  # lane-padded fused taps

    tH = tile_h if H % tile_h == 0 else H
    nH = H // tH

    # Spatial pre-pad (2 halo rows for the fused double conv, 1 halo col) +
    # channel lane-pad (zeros) + bf16 for the MXU.
    xp = jnp.pad(x, ((0, 0), (2, 2), (1, 1), (0, Cp - C))).astype(jnp.bfloat16)

    # Conv taps: OIHW -> (kh, kw, ci, co) -> (9, Cp, Cp), zero-padded, bf16.
    def conv_taps(w):
        t = jnp.transpose(w, (2, 3, 1, 0))                            # (3,3,Ci,Co)
        t = jnp.pad(t, ((0, 0), (0, 0), (0, Cp - C), (0, Cp - C)))
        return t.reshape(9, Cp, Cp).astype(jnp.bfloat16)

    w1 = conv_taps(params['w1'])
    w2 = conv_taps(params['w2'])
    b1 = jnp.pad(params['b1'], (0, Cp - C)).reshape(1, Cp).astype(jnp.float32)
    b2 = jnp.pad(params['b2'], (0, Cp - C)).reshape(1, Cp).astype(jnp.float32)

    # Fused transpose-conv taps: (Ci, Co, kh, kw) -> (Ci, kh, kw, Co) -> (Cp, Tp).
    wt = jnp.transpose(params['wt'], (0, 2, 3, 1)).reshape(C, 4 * O)
    wt = jnp.pad(wt, ((0, Cp - C), (0, Tp - 4 * O))).astype(jnp.bfloat16)
    bt = jnp.pad(jnp.tile(params['bt'], 4), (0, Tp - 4 * O)).reshape(1, Tp)
    bt = bt.astype(jnp.float32)

    cparams = pltpu.CompilerParams(
        dimension_semantics=("parallel", "parallel"),
        vmem_limit_bytes=48 * 1024 * 1024,   # > v6e 32 MiB default, < v7x 64 MiB/TC
    )

    # Pass 1: fused double conv (shift-accumulate MXU matmuls, no im2col scratch)
    #         + per-tile f32 BN partial sums; y emitted in bf16.
    kernel1 = functools.partial(conv_stats_kernel, tile_h=tH, img_h=H)
    y, stats = pl.pallas_call(
        kernel1,
        grid=(N, nH),
        in_specs=[
            pl.BlockSpec((1, H + 4, W + 2, Cp), lambda n, i: (n, 0, 0, 0)),
            pl.BlockSpec((9, Cp, Cp), lambda n, i: (0, 0, 0)),
            pl.BlockSpec((1, Cp), lambda n, i: (0, 0)),
            pl.BlockSpec((9, Cp, Cp), lambda n, i: (0, 0, 0)),
            pl.BlockSpec((1, Cp), lambda n, i: (0, 0)),
        ],
        out_specs=(
            pl.BlockSpec((1, tH, W, Cp), lambda n, i: (n, i, 0, 0)),
            pl.BlockSpec((1, 1, 2, Cp), lambda n, i: (n, i, 0, 0)),
        ),
        out_shape=(
            jax.ShapeDtypeStruct((N, H, W, Cp), jnp.bfloat16),
            jax.ShapeDtypeStruct((N, nH, 2, Cp), jnp.float32),
        ),
        scratch_shapes=[pltpu.VMEM((tH + 2, W + 2, Cp), jnp.bfloat16)],
        compiler_params=cparams,
    )(xp, w1, b1, w2, b2)

    # Global BatchNorm2d (training-mode batch stats) from per-tile f32 partials.
    cnt = jnp.float32(N * H * W)
    mean = jnp.sum(stats[:, :, 0, :], axis=(0, 1)) / cnt
    var = jnp.maximum(jnp.sum(stats[:, :, 1, :], axis=(0, 1)) / cnt - mean * mean, 0.0)
    gamma = jnp.pad(params['gamma'], (0, Cp - C))
    beta = jnp.pad(params['beta'], (0, Cp - C))
    scale = (gamma * jax.lax.rsqrt(var + eps)).reshape(1, Cp).astype(jnp.float32)
    shift = (beta - mean * scale[0]).reshape(1, Cp).astype(jnp.float32)

    # Pass 2: BN affine + relu + fused 4-tap transpose conv + relu (lane-dense slab).
    out = pl.pallas_call(
        bn_upconv_kernel,
        grid=(N, nH),
        in_specs=[
            pl.BlockSpec((1, tH, W, Cp), lambda n, i: (n, i, 0, 0)),
            pl.BlockSpec((1, Cp), lambda n, i: (0, 0)),
            pl.BlockSpec((1, Cp), lambda n, i: (0, 0)),
            pl.BlockSpec((Cp, Tp), lambda n, i: (0, 0)),
            pl.BlockSpec((1, Tp), lambda n, i: (0, 0)),
        ],
        out_specs=pl.BlockSpec((1, tH, W, Tp), lambda n, i: (n, i, 0, 0)),
        out_shape=jax.ShapeDtypeStruct((N, H, W, Tp), jnp.float32),
        compiler_params=cparams,
    )(y, scale, shift, wt, bt)

    # (n, h, w, (kh, kw, o)) -> (n, 2h+kh, 2w+kw, o) -> NCHW.
    out = out[..., :4 * O].reshape(N, H, W, 2, 2, O)
    out = jnp.transpose(out, (0, 1, 3, 2, 4, 5)).reshape(N, 2 * H, 2 * W, O)
    return jnp.transpose(out, (0, 3, 1, 2))


def upblock_reference(x1, x2, p):
    """Pure-JAX/XLA f32 reference of the same forward pass (NCHW in/out)."""
    x = jnp.concatenate([x2, x1], axis=1)
    x = jnp.transpose(x, (0, 2, 3, 1))

    def conv(x, w, b):
        w = jnp.transpose(w, (2, 3, 1, 0))
        y = jax.lax.conv_general_dilated(
            x, w, (1, 1), 'SAME', dimension_numbers=('NHWC', 'HWIO', 'NHWC'))
        return y + b

    y = conv(x, p['w1'], p['b1'])
    y = conv(y, p['w2'], p['b2'])
    mean = y.mean(axis=(0, 1, 2))
    var = ((y - mean) ** 2).mean(axis=(0, 1, 2))
    y = (y - mean) / jnp.sqrt(var + 1e-5) * p['gamma'] + p['beta']
    y = jnp.maximum(y, 0.0)
    t = jnp.einsum('nhwc,cokl->nhkwlo', y, p['wt']) + p['bt']
    N, H, W, _ = y.shape
    O = p['wt'].shape[1]
    out = jnp.maximum(t.reshape(N, 2 * H, 2 * W, O), 0.0)
    return jnp.transpose(out, (0, 3, 1, 2))


def init_params(key, in_ch, out_ch):
    k = jax.random.split(key, 8)
    s = 0.1
    return dict(
        w1=s * jax.random.normal(k[0], (in_ch, in_ch, 3, 3), jnp.float32),   # OIHW
        b1=s * jax.random.normal(k[1], (in_ch,), jnp.float32),
        w2=s * jax.random.normal(k[2], (in_ch, in_ch, 3, 3), jnp.float32),   # OIHW
        b2=s * jax.random.normal(k[3], (in_ch,), jnp.float32),
        gamma=1.0 + s * jax.random.normal(k[4], (in_ch,), jnp.float32),      # BN weight
        beta=s * jax.random.normal(k[5], (in_ch,), jnp.float32),             # BN bias
        wt=s * jax.random.normal(k[6], (in_ch, out_ch, 2, 2), jnp.float32),  # (Cin,Cout,kH,kW)
        bt=s * jax.random.normal(k[7], (out_ch,), jnp.float32),
    )


if __name__ == "__main__":
    key = jax.random.PRNGKey(0)
    k1, k2, kp = jax.random.split(key, 3)
    in_channels, out_channels = 8, 4      # UpBlock(8, 4); x1/x2 carry 4 channels each
    x1 = jax.random.normal(k1, (2, 4, 16, 16), jnp.float32)
    x2 = jax.random.normal(k2, (2, 4, 16, 16), jnp.float32)
    params = init_params(kp, in_channels, out_channels)

    out = jax.block_until_ready(upblock_forward(x1, x2, params))
    assert out.shape == (2, out_channels, 32, 32), out.shape

    ref = upblock_reference(x1, x2, params)
    max_err = float(jnp.max(jnp.abs(out - ref)))
    # bf16 MXU operands + bf16 inter-pass intermediate (f32 accumulation / f32
    # BN stats) -> loosened tolerance vs the all-f32 reference.
    assert jnp.allclose(out, ref, atol=4e-2, rtol=4e-2), max_err

    print("KERNEL_OK")
</pallas_src>

<mosaic_0001>
module attributes {stable_mosaic.version = 11 : i64} {
  func.func @conv_stats_kernel(%arg0: i32, %arg1: i32, %arg2: memref<1x20x18x128xbf16, #tpu.memory_space<vmem>>, %arg3: memref<9x128x128xbf16, #tpu.memory_space<vmem>>, %arg4: memref<1x128xf32, #tpu.memory_space<vmem>>, %arg5: memref<9x128x128xbf16, #tpu.memory_space<vmem>>, %arg6: memref<1x128xf32, #tpu.memory_space<vmem>>, %arg7: memref<1x8x16x128xbf16, #tpu.memory_space<vmem>>, %arg8: memref<1x1x2x128xf32, #tpu.memory_space<vmem>>, %arg9: memref<10x18x128xbf16, #tpu.memory_space<vmem>>) attributes {dimension_semantics = [#tpu.dimension_semantics<parallel>, #tpu.dimension_semantics<parallel>], iteration_bounds = array<i64: 2, 2>, scalar_prefetch = 0 : i64, scratch_operands = 1 : i64, tpu.core_type = #tpu.core_type<tc>, window_params = [{transform_indices = @transform_0, window_bounds = array<i64: 1, 20, 18, 128>}, {pipeline_mode = #tpu.pipeline_mode<synchronous>, transform_indices = @transform_1, window_bounds = array<i64: 9, 128, 128>}, {pipeline_mode = #tpu.pipeline_mode<synchronous>, transform_indices = @transform_2, window_bounds = array<i64: 1, 128>}, {pipeline_mode = #tpu.pipeline_mode<synchronous>, transform_indices = @transform_3, window_bounds = array<i64: 9, 128, 128>}, {pipeline_mode = #tpu.pipeline_mode<synchronous>, transform_indices = @transform_4, window_bounds = array<i64: 1, 128>}, {transform_indices = @transform_5, window_bounds = array<i64: 1, 8, 16, 128>}, {transform_indices = @transform_6, window_bounds = array<i64: 1, 1, 2, 128>}]} {
    %c8_i32 = arith.constant 8 : i32
    %0 = arith.muli %arg1, %c8_i32 : i32
    %1 = tpu.assume_multiple %0, 8 : i32
    %c0 = arith.constant 0 : index
    %2 = arith.index_cast %1 : i32 to index
    %c0_0 = arith.constant 0 : index
    %c0_1 = arith.constant 0 : index
    %3 = vector.load %arg2[%c0, %2, %c0_0, %c0_1] : memref<1x20x18x128xbf16, #tpu.memory_space<vmem>>, vector<1x12x18x128xbf16>
    %4 = vector.shape_cast %3 : vector<1x12x18x128xbf16> to vector<12x18x128xbf16>
    %cst = arith.constant 0.000000e+00 : f32
    %5 = vector.broadcast %cst : f32 to vector<160x128xf32>
    %6 = vector.extract_strided_slice %4 {offsets = [0, 0, 0], sizes = [10, 16, 128], strides = [1, 1, 1]} : vector<12x18x128xbf16> to vector<10x16x128xbf16>
    %7 = vector.shape_cast %6 : vector<10x16x128xbf16> to vector<160x128xbf16>
    %c0_2 = arith.constant 0 : index
    %c0_3 = arith.constant 0 : index
    %c0_4 = arith.constant 0 : index
    %8 = vector.load %arg3[%c0_2, %c0_3, %c0_4] : memref<9x128x128xbf16, #tpu.memory_space<vmem>>, vector<1x128x128xbf16>
    %9 = vector.shape_cast %8 : vector<1x128x128xbf16> to vector<128x128xbf16>
    %cst_5 = arith.constant dense<0.000000e+00> : vector<160x128xf32>
    %10 = tpu.matmul %7, %9, %cst_5 {dimension_numbers = #tpu.dot_dimension_numbers<[1], [0], [0], [1], [0, 0, 1, 1], [], []>} : vector<160x128xbf16>, vector<128x128xbf16>, vector<160x128xf32> -> vector<160x128xf32>
    %11 = arith.addf %5, %10 : vector<160x128xf32>
    %12 = vector.extract_strided_slice %4 {offsets = [0, 1, 0], sizes = [10, 16, 128], strides = [1, 1, 1]} : vector<12x18x128xbf16> to vector<10x16x128xbf16>
    %13 = vector.shape_cast %12 : vector<10x16x128xbf16> to vector<160x128xbf16>
    %c1 = arith.constant 1 : index
    %c0_6 = arith.constant 0 : index
    %c0_7 = arith.constant 0 : index
    %14 = vector.load %arg3[%c1, %c0_6, %c0_7] : memref<9x128x128xbf16, #tpu.memory_space<vmem>>, vector<1x128x128xbf16>
    %15 = vector.shape_cast %14 : vector<1x128x128xbf16> to vector<128x128xbf16>
    %cst_8 = arith.constant dense<0.000000e+00> : vector<160x128xf32>
    %16 = tpu.matmul %13, %15, %cst_8 {dimension_numbers = #tpu.dot_dimension_numbers<[1], [0], [0], [1], [0, 0, 1, 1], [], []>} : vector<160x128xbf16>, vector<128x128xbf16>, vector<160x128xf32> -> vector<160x128xf32>
    %17 = arith.addf %11, %16 : vector<160x128xf32>
    %18 = vector.extract_strided_slice %4 {offsets = [0, 2, 0], sizes = [10, 16, 128], strides = [1, 1, 1]} : vector<12x18x128xbf16> to vector<10x16x128xbf16>
    %19 = vector.shape_cast %18 : vector<10x16x128xbf16> to vector<160x128xbf16>
    %c2 = arith.constant 2 : index
    %c0_9 = arith.constant 0 : index
    %c0_10 = arith.constant 0 : index
    %20 = vector.load %arg3[%c2, %c0_9, %c0_10] : memref<9x128x128xbf16, #tpu.memory_space<vmem>>, vector<1x128x128xbf16>
    %21 = vector.shape_cast %20 : vector<1x128x128xbf16> to vector<128x128xbf16>
    %cst_11 = arith.constant dense<0.000000e+00> : vector<160x128xf32>
    %22 = tpu.matmul %19, %21, %cst_11 {dimension_numbers = #tpu.dot_dimension_numbers<[1], [0], [0], [1], [0, 0, 1, 1], [], []>} : vector<160x128xbf16>, vector<128x128xbf16>, vector<160x128xf32> -> vector<160x128xf32>
    %23 = arith.addf %17, %22 : vector<160x128xf32>
    %24 = vector.extract_strided_slice %4 {offsets = [1, 0, 0], sizes = [10, 16, 128], strides = [1, 1, 1]} : vector<12x18x128xbf16> to vector<10x16x128xbf16>
    %25 = vector.shape_cast %24 : vector<10x16x128xbf16> to vector<160x128xbf16>
    %c3 = arith.constant 3 : index
    %c0_12 = arith.constant 0 : index
    %c0_13 = arith.constant 0 : index
    %26 = vector.load %arg3[%c3, %c0_12, %c0_13] : memref<9x128x128xbf16, #tpu.memory_space<vmem>>, vector<1x128x128xbf16>
    %27 = vector.shape_cast %26 : vector<1x128x128xbf16> to vector<128x128xbf16>
    %cst_14 = arith.constant dense<0.000000e+00> : vector<160x128xf32>
    %28 = tpu.matmul %25, %27, %cst_14 {dimension_numbers = #tpu.dot_dimension_numbers<[1], [0], [0], [1], [0, 0, 1, 1], [], []>} : vector<160x128xbf16>, vector<128x128xbf16>, vector<160x128xf32> -> vector<160x128xf32>
    %29 = arith.addf %23, %28 : vector<160x128xf32>
    %30 = vector.extract_strided_slice %4 {offsets = [1, 1, 0], sizes = [10, 16, 128], strides = [1, 1, 1]} : vector<12x18x128xbf16> to vector<10x16x128xbf16>
    %31 = vector.shape_cast %30 : vector<10x16x128xbf16> to vector<160x128xbf16>
    %c4 = arith.constant 4 : index
    %c0_15 = arith.constant 0 : index
    %c0_16 = arith.constant 0 : index
    %32 = vector.load %arg3[%c4, %c0_15, %c0_16] : memref<9x128x128xbf16, #tpu.memory_space<vmem>>, vector<1x128x128xbf16>
    %33 = vector.shape_cast %32 : vector<1x128x128xbf16> to vector<128x128xbf16>
    %cst_17 = arith.constant dense<0.000000e+00> : vector<160x128xf32>
    %34 = tpu.matmul %31, %33, %cst_17 {dimension_numbers = #tpu.dot_dimension_numbers<[1], [0], [0], [1], [0, 0, 1, 1], [], []>} : vector<160x128xbf16>, vector<128x128xbf16>, vector<160x128xf32> -> vector<160x128xf32>
    %35 = arith.addf %29, %34 : vector<160x128xf32>
    %36 = vector.extract_strided_slice %4 {offsets = [1, 2, 0], sizes = [10, 16, 128], strides = [1, 1, 1]} : vector<12x18x128xbf16> to vector<10x16x128xbf16>
    %37 = vector.shape_cast %36 : vector<10x16x128xbf16> to vector<160x128xbf16>
    %c5 = arith.constant 5 : index
    %c0_18 = arith.constant 0 : index
    %c0_19 = arith.constant 0 : index
    %38 = vector.load %arg3[%c5, %c0_18, %c0_19] : memref<9x128x128xbf16, #tpu.memory_space<vmem>>, vector<1x128x128xbf16>
    %39 = vector.shape_cast %38 : vector<1x128x128xbf16> to vector<128x128xbf16>
    %cst_20 = arith.constant dense<0.000000e+00> : vector<160x128xf32>
    %40 = tpu.matmul %37, %39, %cst_20 {dimension_numbers = #tpu.dot_dimension_numbers<[1], [0], [0], [1], [0, 0, 1, 1], [], []>} : vector<160x128xbf16>, vector<128x128xbf16>, vector<160x128xf32> -> vector<160x128xf32>
    %41 = arith.addf %35, %40 : vector<160x128xf32>
    %42 = vector.extract_strided_slice %4 {offsets = [2, 0, 0], sizes = [10, 16, 128], strides = [1, 1, 1]} : vector<12x18x128xbf16> to vector<10x16x128xbf16>
    %43 = vector.shape_cast %42 : vector<10x16x128xbf16> to vector<160x128xbf16>
    %c6 = arith.constant 6 : index
    %c0_21 = arith.constant 0 : index
    %c0_22 = arith.constant 0 : index
    %44 = vector.load %arg3[%c6, %c0_21, %c0_22] : memref<9x128x128xbf16, #tpu.memory_space<vmem>>, vector<1x128x128xbf16>
    %45 = vector.shape_cast %44 : vector<1x128x128xbf16> to vector<128x128xbf16>
    %cst_23 = arith.constant dense<0.000000e+00> : vector<160x128xf32>
    %46 = tpu.matmul %43, %45, %cst_23 {dimension_numbers = #tpu.dot_dimension_numbers<[1], [0], [0], [1], [0, 0, 1, 1], [], []>} : vector<160x128xbf16>, vector<128x128xbf16>, vector<160x128xf32> -> vector<160x128xf32>
    %47 = arith.addf %41, %46 : vector<160x128xf32>
    %48 = vector.extract_strided_slice %4 {offsets = [2, 1, 0], sizes = [10, 16, 128], strides = [1, 1, 1]} : vector<12x18x128xbf16> to vector<10x16x128xbf16>
    %49 = vector.shape_cast %48 : vector<10x16x128xbf16> to vector<160x128xbf16>
    %c7 = arith.constant 7 : index
    %c0_24 = arith.constant 0 : index
    %c0_25 = arith.constant 0 : index
    %50 = vector.load %arg3[%c7, %c0_24, %c0_25] : memref<9x128x128xbf16, #tpu.memory_space<vmem>>, vector<1x128x128xbf16>
    %51 = vector.shape_cast %50 : vector<1x128x128xbf16> to vector<128x128xbf16>
    %cst_26 = arith.constant dense<0.000000e+00> : vector<160x128xf32>
    %52 = tpu.matmul %49, %51, %cst_26 {dimension_numbers = #tpu.dot_dimension_numbers<[1], [0], [0], [1], [0, 0, 1, 1], [], []>} : vector<160x128xbf16>, vector<128x128xbf16>, vector<160x128xf32> -> vector<160x128xf32>
    %53 = arith.addf %47, %52 : vector<160x128xf32>
    %54 = vector.extract_strided_slice %4 {offsets = [2, 2, 0], sizes = [10, 16, 128], strides = [1, 1, 1]} : vector<12x18x128xbf16> to vector<10x16x128xbf16>
    %55 = vector.shape_cast %54 : vector<10x16x128xbf16> to vector<160x128xbf16>
    %c8 = arith.constant 8 : index
    %c0_27 = arith.constant 0 : index
    %c0_28 = arith.constant 0 : index
    %56 = vector.load %arg3[%c8, %c0_27, %c0_28] : memref<9x128x128xbf16, #tpu.memory_space<vmem>>, vector<1x128x128xbf16>
    %57 = vector.shape_cast %56 : vector<1x128x128xbf16> to vector<128x128xbf16>
    %cst_29 = arith.constant dense<0.000000e+00> : vector<160x128xf32>
    %58 = tpu.matmul %55, %57, %cst_29 {dimension_numbers = #tpu.dot_dimension_numbers<[1], [0], [0], [1], [0, 0, 1, 1], [], []>} : vector<160x128xbf16>, vector<128x128xbf16>, vector<160x128xf32> -> vector<160x128xf32>
    %59 = arith.addf %53, %58 : vector<160x128xf32>
    %c0_30 = arith.constant 0 : index
    %c0_31 = arith.constant 0 : index
    %60 = vector.load %arg4[%c0_30, %c0_31] : memref<1x128xf32, #tpu.memory_space<vmem>>, vector<1x128xf32>
    %61 = vector.broadcast %60 : vector<1x128xf32> to vector<160x128xf32>
    %62 = arith.addf %59, %61 : vector<160x128xf32>
    %63 = tpu.iota {dimensions = array<i32: 0>} : vector<10x1x1xi32>
    %c1_i32 = arith.constant 1 : i32
    %64 = arith.subi %1, %c1_i32 : i32
    %65 = vector.broadcast %64 : i32 to vector<10x1x1xi32>
    %66 = arith.addi %65, %63 : vector<10x1x1xi32>
    %c0_i32 = arith.constant 0 : i32
    %67 = vector.broadcast %c0_i32 : i32 to vector<10x1x1xi32>
    %68 = arith.cmpi sge, %66, %67 : vector<10x1x1xi32>
    %c16_i32 = arith.constant 16 : i32
    %69 = vector.broadcast %c16_i32 : i32 to vector<10x1x1xi32>
    %70 = arith.cmpi slt, %66, %69 : vector<10x1x1xi32>
    %71 = arith.andi %68, %70 : vector<10x1x1xi1>
    %72 = vector.shape_cast %62 : vector<160x128xf32> to vector<10x16x128xf32>
    %cst_32 = arith.constant 0.000000e+00 : f32
    %73 = vector.shape_cast %71 : vector<10x1x1xi1> to vector<10x1x1xi1>
    %74 = vector.broadcast %73 : vector<10x1x1xi1> to vector<10x16x128xi1>
    %75 = vector.broadcast %cst_32 : f32 to vector<10x16x128xf32>
    %76 = arith.select %74, %72, %75 : vector<10x16x128xi1>, vector<10x16x128xf32>
    %77 = arith.truncf %76 : vector<10x16x128xf32> to vector<10x16x128xbf16>
    %c0_33 = arith.constant 0 : index
    %c1_34 = arith.constant 1 : index
    %c0_35 = arith.constant 0 : index
    %78 = vector.load %arg9[%c0_33, %c1_34, %c0_35] : memref<10x18x128xbf16, #tpu.memory_space<vmem>>, vector<10x16x128xbf16>
    tpu.vector_store %arg9[%c0_33, %c1_34, %c0_35], %77 {strides = array<i32>} : memref<10x18x128xbf16, #tpu.memory_space<vmem>>, vector<10x16x128xbf16>,
    %cst_36 = arith.constant 0.000000e+00 : bf16
    %79 = vector.broadcast %cst_36 : bf16 to vector<10x1x128xbf16>
    %c0_37 = arith.constant 0 : index
    %c0_38 = arith.constant 0 : index
    %c0_39 = arith.constant 0 : index
    %80 = vector.load %arg9[%c0_37, %c0_38, %c0_39] : memref<10x18x128xbf16, #tpu.memory_space<vmem>>, vector<10x1x128xbf16>
    tpu.vector_store %arg9[%c0_37, %c0_38, %c0_39], %79 {strides = array<i32>} : memref<10x18x128xbf16, #tpu.memory_space<vmem>>, vector<10x1x128xbf16>,
    %cst_40 = arith.constant 0.000000e+00 : bf16
    %81 = vector.broadcast %cst_40 : bf16 to vector<10x1x128xbf16>
    %c0_41 = arith.constant 0 : index
    %c17 = arith.constant 17 : index
    %c0_42 = arith.constant 0 : index
    %82 = vector.load %arg9[%c0_41, %c17, %c0_42] : memref<10x18x128xbf16, #tpu.memory_space<vmem>>, vector<10x1x128xbf16>
    tpu.vector_store %arg9[%c0_41, %c17, %c0_42], %81 {strides = array<i32>} : memref<10x18x128xbf16, #tpu.memory_space<vmem>>, vector<10x1x128xbf16>,
    %cst_43 = arith.constant 0.000000e+00 : f32
    %83 = vector.broadcast %cst_43 : f32 to vector<128x128xf32>
    %c0_44 = arith.constant 0 : index
    %c0_45 = arith.constant 0 : index
    %c0_46 = arith.constant 0 : index
    %84 = vector.load %arg9[%c0_44, %c0_45, %c0_46] : memref<10x18x128xbf16, #tpu.memory_space<vmem>>, vector<8x16x128xbf16>
    %85 = vector.shape_cast %84 : vector<8x16x128xbf16> to vector<128x128xbf16>
    %c0_47 = arith.constant 0 : index
    %c0_48 = arith.constant 0 : index
    %c0_49 = arith.constant 0 : index
    %86 = vector.load %arg5[%c0_47, %c0_48, %c0_49] : memref<9x128x128xbf16, #tpu.memory_space<vmem>>, vector<1x128x128xbf16>
    %87 = vector.shape_cast %86 : vector<1x128x128xbf16> to vector<128x128xbf16>
    %cst_50 = arith.constant dense<0.000000e+00> : vector<128x128xf32>
    %88 = tpu.matmul %85, %87, %cst_50 {dimension_numbers = #tpu.dot_dimension_numbers<[1], [0], [0], [1], [0, 0, 1, 1], [], []>} : vector<128x128xbf16>, vector<128x128xbf16>, vector<128x128xf32> -> vector<128x128xf32>
    %89 = arith.addf %83, %88 : vector<128x128xf32>
    %c0_51 = arith.constant 0 : index
    %c1_52 = arith.constant 1 : index
    %c0_53 = arith.constant 0 : index
    %90 = vector.load %arg9[%c0_51, %c1_52, %c0_53] : memref<10x18x128xbf16, #tpu.memory_space<vmem>>, vector<8x16x128xbf16>
    %91 = vector.shape_cast %90 : vector<8x16x128xbf16> to vector<128x128xbf16>
    %c1_54 = arith.constant 1 : index
    %c0_55 = arith.constant 0 : index
    %c0_56 = arith.constant 0 : index
    %92 = vector.load %arg5[%c1_54, %c0_55, %c0_56] : memref<9x128x128xbf16, #tpu.memory_space<vmem>>, vector<1x128x128xbf16>
    %93 = vector.shape_cast %92 : vector<1x128x128xbf16> to vector<128x128xbf16>
    %cst_57 = arith.constant dense<0.000000e+00> : vector<128x128xf32>
    %94 = tpu.matmul %91, %93, %cst_57 {dimension_numbers = #tpu.dot_dimension_numbers<[1], [0], [0], [1], [0, 0, 1, 1], [], []>} : vector<128x128xbf16>, vector<128x128xbf16>, vector<128x128xf32> -> vector<128x128xf32>
    %95 = arith.addf %89, %94 : vector<128x128xf32>
    %c0_58 = arith.constant 0 : index
    %c2_59 = arith.constant 2 : index
    %c0_60 = arith.constant 0 : index
    %96 = vector.load %arg9[%c0_58, %c2_59, %c0_60] : memref<10x18x128xbf16, #tpu.memory_space<vmem>>, vector<8x16x128xbf16>
    %97 = vector.shape_cast %96 : vector<8x16x128xbf16> to vector<128x128xbf16>
    %c2_61 = arith.constant 2 : index
    %c0_62 = arith.constant 0 : index
    %c0_63 = arith.constant 0 : index
    %98 = vector.load %arg5[%c2_61, %c0_62, %c0_63] : memref<9x128x128xbf16, #tpu.memory_space<vmem>>, vector<1x128x128xbf16>
    %99 = vector.shape_cast %98 : vector<1x128x128xbf16> to vector<128x128xbf16>
    %cst_64 = arith.constant dense<0.000000e+00> : vector<128x128xf32>
    %100 = tpu.matmul %97, %99, %cst_64 {dimension_numbers = #tpu.dot_dimension_numbers<[1], [0], [0], [1], [0, 0, 1, 1], [], []>} : vector<128x128xbf16>, vector<128x128xbf16>, vector<128x128xf32> -> vector<128x128xf32>
    %101 = arith.addf %95, %100 : vector<128x128xf32>
    %c1_65 = arith.constant 1 : index
    %c0_66 = arith.constant 0 : index
    %c0_67 = arith.constant 0 : index
    %102 = vector.load %arg9[%c1_65, %c0_66, %c0_67] : memref<10x18x128xbf16, #tpu.memory_space<vmem>>, vector<8x16x128xbf16>
    %103 = vector.shape_cast %102 : vector<8x16x128xbf16> to vector<128x128xbf16>
    %c3_68 = arith.constant 3 : index
    %c0_69 = arith.constant 0 : index
    %c0_70 = arith.constant 0 : index
    %104 = vector.load %arg5[%c3_68, %c0_69, %c0_70] : memref<9x128x128xbf16, #tpu.memory_space<vmem>>, vector<1x128x128xbf16>
    %105 = vector.shape_cast %104 : vector<1x128x128xbf16> to vector<128x128xbf16>
    %cst_71 = arith.constant dense<0.000000e+00> : vector<128x128xf32>
    %106 = tpu.matmul %103, %105, %cst_71 {dimension_numbers = #tpu.dot_dimension_numbers<[1], [0], [0], [1], [0, 0, 1, 1], [], []>} : vector<128x128xbf16>, vector<128x128xbf16>, vector<128x128xf32> -> vector<128x128xf32>
    %107 = arith.addf %101, %106 : vector<128x128xf32>
    %c1_72 = arith.constant 1 : index
    %c1_73 = arith.constant 1 : index
    %c0_74 = arith.constant 0 : index
    %108 = vector.load %arg9[%c1_72, %c1_73, %c0_74] : memref<10x18x128xbf16, #tpu.memory_space<vmem>>, vector<8x16x128xbf16>
    %109 = vector.shape_cast %108 : vector<8x16x128xbf16> to vector<128x128xbf16>
    %c4_75 = arith.constant 4 : index
    %c0_76 = arith.constant 0 : index
    %c0_77 = arith.constant 0 : index
    %110 = vector.load %arg5[%c4_75, %c0_76, %c0_77] : memref<9x128x128xbf16, #tpu.memory_space<vmem>>, vector<1x128x128xbf16>
    %111 = vector.shape_cast %110 : vector<1x128x128xbf16> to vector<128x128xbf16>
    %cst_78 = arith.constant dense<0.000000e+00> : vector<128x128xf32>
    %112 = tpu.matmul %109, %111, %cst_78 {dimension_numbers = #tpu.dot_dimension_numbers<[1], [0], [0], [1], [0, 0, 1, 1], [], []>} : vector<128x128xbf16>, vector<128x128xbf16>, vector<128x128xf32> -> vector<128x128xf32>
    %113 = arith.addf %107, %112 : vector<128x128xf32>
    %c1_79 = arith.constant 1 : index
    %c2_80 = arith.constant 2 : index
    %c0_81 = arith.constant 0 : index
    %114 = vector.load %arg9[%c1_79, %c2_80, %c0_81] : memref<10x18x128xbf16, #tpu.memory_space<vmem>>, vector<8x16x128xbf16>
    %115 = vector.shape_cast %114 : vector<8x16x128xbf16> to vector<128x128xbf16>
    %c5_82 = arith.constant 5 : index
    %c0_83 = arith.constant 0 : index
    %c0_84 = arith.constant 0 : index
    %116 = vector.load %arg5[%c5_82, %c0_83, %c0_84] : memref<9x128x128xbf16, #tpu.memory_space<vmem>>, vector<1x128x128xbf16>
    %117 = vector.shape_cast %116 : vector<1x128x128xbf16> to vector<128x128xbf16>
    %cst_85 = arith.constant dense<0.000000e+00> : vector<128x128xf32>
    %118 = tpu.matmul %115, %117, %cst_85 {dimension_numbers = #tpu.dot_dimension_numbers<[1], [0], [0], [1], [0, 0, 1, 1], [], []>} : vector<128x128xbf16>, vector<128x128xbf16>, vector<128x128xf32> -> vector<128x128xf32>
    %119 = arith.addf %113, %118 : vector<128x128xf32>
    %c2_86 = arith.constant 2 : index
    %c0_87 = arith.constant 0 : index
    %c0_88 = arith.constant 0 : index
    %120 = vector.load %arg9[%c2_86, %c0_87, %c0_88] : memref<10x18x128xbf16, #tpu.memory_space<vmem>>, vector<8x16x128xbf16>
    %121 = vector.shape_cast %120 : vector<8x16x128xbf16> to vector<128x128xbf16>
    %c6_89 = arith.constant 6 : index
    %c0_90 = arith.constant 0 : index
    %c0_91 = arith.constant 0 : index
    %122 = vector.load %arg5[%c6_89, %c0_90, %c0_91] : memref<9x128x128xbf16, #tpu.memory_space<vmem>>, vector<1x128x128xbf16>
    %123 = vector.shape_cast %122 : vector<1x128x128xbf16> to vector<128x128xbf16>
    %cst_92 = arith.constant dense<0.000000e+00> : vector<128x128xf32>
    %124 = tpu.matmul %121, %123, %cst_92 {dimension_numbers = #tpu.dot_dimension_numbers<[1], [0], [0], [1], [0, 0, 1, 1], [], []>} : vector<128x128xbf16>, vector<128x128xbf16>, vector<128x128xf32> -> vector<128x128xf32>
    %125 = arith.addf %119, %124 : vector<128x128xf32>
    %c2_93 = arith.constant 2 : index
    %c1_94 = arith.constant 1 : index
    %c0_95 = arith.constant 0 : index
    %126 = vector.load %arg9[%c2_93, %c1_94, %c0_95] : memref<10x18x128xbf16, #tpu.memory_space<vmem>>, vector<8x16x128xbf16>
    %127 = vector.shape_cast %126 : vector<8x16x128xbf16> to vector<128x128xbf16>
    %c7_96 = arith.constant 7 : index
    %c0_97 = arith.constant 0 : index
    %c0_98 = arith.constant 0 : index
    %128 = vector.load %arg5[%c7_96, %c0_97, %c0_98] : memref<9x128x128xbf16, #tpu.memory_space<vmem>>, vector<1x128x128xbf16>
    %129 = vector.shape_cast %128 : vector<1x128x128xbf16> to vector<128x128xbf16>
    %cst_99 = arith.constant dense<0.000000e+00> : vector<128x128xf32>
    %130 = tpu.matmul %127, %129, %cst_99 {dimension_numbers = #tpu.dot_dimension_numbers<[1], [0], [0], [1], [0, 0, 1, 1], [], []>} : vector<128x128xbf16>, vector<128x128xbf16>, vector<128x128xf32> -> vector<128x128xf32>
    %131 = arith.addf %125, %130 : vector<128x128xf32>
    %c2_100 = arith.constant 2 : index
    %c2_101 = arith.constant 2 : index
    %c0_102 = arith.constant 0 : index
    %132 = vector.load %arg9[%c2_100, %c2_101, %c0_102] : memref<10x18x128xbf16, #tpu.memory_space<vmem>>, vector<8x16x128xbf16>
    %133 = vector.shape_cast %132 : vector<8x16x128xbf16> to vector<128x128xbf16>
    %c8_103 = arith.constant 8 : index
    %c0_104 = arith.constant 0 : index
    %c0_105 = arith.constant 0 : index
    %134 = vector.load %arg5[%c8_103, %c0_104, %c0_105] : memref<9x128x128xbf16, #tpu.memory_space<vmem>>, vector<1x128x128xbf16>
    %135 = vector.shape_cast %134 : vector<1x128x128xbf16> to vector<128x128xbf16>
    %cst_106 = arith.constant dense<0.000000e+00> : vector<128x128xf32>
    %136 = tpu.matmul %133, %135, %cst_106 {dimension_numbers = #tpu.dot_dimension_numbers<[1], [0], [0], [1], [0, 0, 1, 1], [], []>} : vector<128x128xbf16>, vector<128x128xbf16>, vector<128x128xf32> -> vector<128x128xf32>
    %137 = arith.addf %131, %136 : vector<128x128xf32>
    %c0_107 = arith.constant 0 : index
    %c0_108 = arith.constant 0 : index
    %138 = vector.load %arg6[%c0_107, %c0_108] : memref<1x128xf32, #tpu.memory_space<vmem>>, vector<1x128xf32>
    %139 = vector.broadcast %138 : vector<1x128xf32> to vector<128x128xf32>
    %140 = arith.addf %137, %139 : vector<128x128xf32>
    %141 = arith.truncf %140 : vector<128x128xf32> to vector<128x128xbf16>
    %142 = vector.shape_cast %141 : vector<128x128xbf16> to vector<1x8x16x128xbf16>
    %c0_109 = arith.constant 0 : index
    %c0_110 = arith.constant 0 : index
    %c0_111 = arith.constant 0 : index
    %c0_112 = arith.constant 0 : index
    %143 = vector.load %arg7[%c0_109, %c0_110, %c0_111, %c0_112] : memref<1x8x16x128xbf16, #tpu.memory_space<vmem>>, vector<1x8x16x128xbf16>
    tpu.vector_store %arg7[%c0_109, %c0_110, %c0_111, %c0_112], %142 {strides = array<i32>} : memref<1x8x16x128xbf16, #tpu.memory_space<vmem>>, vector<1x8x16x128xbf16>,
    %cst_113 = arith.constant dense<0.000000e+00> : vector<128xf32>
    %144 = vector.multi_reduction <add>, %140, %cst_113 [0] : vector<128x128xf32> to vector<128xf32>
    %145 = vector.shape_cast %144 : vector<128xf32> to vector<1x128xf32>
    %146 = arith.mulf %140, %140 : vector<128x128xf32>
    %cst_114 = arith.constant dense<0.000000e+00> : vector<128xf32>
    %147 = vector.multi_reduction <add>, %146, %cst_114 [0] : vector<128x128xf32> to vector<128xf32>
    %148 = vector.shape_cast %147 : vector<128xf32> to vector<1x128xf32>
    %149 = vector.shape_cast %145 : vector<1x128xf32> to vector<1x1x1x128xf32>
    %c0_115 = arith.constant 0 : index
    %c0_116 = arith.constant 0 : index
    %c0_117 = arith.constant 0 : index
    %c0_118 = arith.constant 0 : index
    %150 = vector.load %arg8[%c0_115, %c0_116, %c0_117, %c0_118] : memref<1x1x2x128xf32, #tpu.memory_space<vmem>>, vector<1x1x1x128xf32>
    tpu.vector_store %arg8[%c0_115, %c0_116, %c0_117, %c0_118], %149 {strides = array<i32>} : memref<1x1x2x128xf32, #tpu.memory_space<vmem>>, vector<1x1x1x128xf32>,
    %151 = vector.shape_cast %148 : vector<1x128xf32> to vector<1x1x1x128xf32>
    %c0_119 = arith.constant 0 : index
    %c0_120 = arith.constant 0 : index
    %c1_121 = arith.constant 1 : index
    %c0_122 = arith.constant 0 : index
    %152 = vector.load %arg8[%c0_119, %c0_120, %c1_121, %c0_122] : memref<1x1x2x128xf32, #tpu.memory_space<vmem>>, vector<1x1x1x128xf32>
    tpu.vector_store %arg8[%c0_119, %c0_120, %c1_121, %c0_122], %151 {strides = array<i32>} : memref<1x1x2x128xf32, #tpu.memory_space<vmem>>, vector<1x1x1x128xf32>,
    return
  }
  func.func @transform_0(%arg0: i32, %arg1: i32) -> (i32, i32, i32, i32) {
    %c0_i32 = arith.constant 0 : i32
    %c0_i32_0 = arith.constant 0 : i32
    %c0_i32_1 = arith.constant 0 : i32
    %c0_i32_2 = arith.constant 0 : i32
    return %arg0, %c0_i32, %c0_i32_0, %c0_i32_1 : i32, i32, i32, i32
  }
  func.func @transform_1(%arg0: i32, %arg1: i32) -> (i32, i32, i32) {
    %c0_i32 = arith.constant 0 : i32
    %c0_i32_0 = arith.constant 0 : i32
    %c0_i32_1 = arith.constant 0 : i32
    %c0_i32_2 = arith.constant 0 : i32
    return %c0_i32, %c0_i32_0, %c0_i32_1 : i32, i32, i32
  }
  func.func @transform_2(%arg0: i32, %arg1: i32) -> (i32, i32) {
    %c0_i32 = arith.constant 0 : i32
    %c0_i32_0 = arith.constant 0 : i32
    %c0_i32_1 = arith.constant 0 : i32
    return %c0_i32, %c0_i32_0 : i32, i32
  }
  func.func @transform_3(%arg0: i32, %arg1: i32) -> (i32, i32, i32) {
    %c0_i32 = arith.constant 0 : i32
    %c0_i32_0 = arith.constant 0 : i32
    %c0_i32_1 = arith.constant 0 : i32
    %c0_i32_2 = arith.constant 0 : i32
    return %c0_i32, %c0_i32_0, %c0_i32_1 : i32, i32, i32
  }
  func.func @transform_4(%arg0: i32, %arg1: i32) -> (i32, i32) {
    %c0_i32 = arith.constant 0 : i32
    %c0_i32_0 = arith.constant 0 : i32
    %c0_i32_1 = arith.constant 0 : i32
    return %c0_i32, %c0_i32_0 : i32, i32
  }
  func.func @transform_5(%arg0: i32, %arg1: i32) -> (i32, i32, i32, i32) {
    %c0_i32 = arith.constant 0 : i32
    %c0_i32_0 = arith.constant 0 : i32
    %c0_i32_1 = arith.constant 0 : i32
    return %arg0, %arg1, %c0_i32, %c0_i32_0 : i32, i32, i32, i32
  }
  func.func @transform_6(%arg0: i32, %arg1: i32) -> (i32, i32, i32, i32) {
    %c0_i32 = arith.constant 0 : i32
    %c0_i32_0 = arith.constant 0 : i32
    %c0_i32_1 = arith.constant 0 : i32
    return %arg0, %arg1, %c0_i32, %c0_i32_0 : i32, i32, i32, i32
  }
}

</mosaic_0001>

<llo_original>
// kernel: tpu_custom_call.1
$region0: #{tpu_custom_call.1}
  #allocation0 [shape = 'u32[]', space=smem, size = 0x4, offset = 0x4, fixed_abs, tag = 'smem constant byte address 0x4 - core index']
  #allocation1 [shape = 'u32[72,128]{1,0:T(1,128)}', space=vmem, size = 0x9000, scoped, tag = 'internal scratch']
  #allocation2 [shape = 'bf16[10,18,128]{2,1,0:T(8,128)(2,1)}', space=vmem, size = 0xf000, scoped, tag = 'scratch operand']
  %s0 = inlined_call_operand.vmem [shape: bf16[2,20,18,128], index: 0, kind: input, shape index: {}]
  %s1 = inlined_call_operand.vmem [shape: bf16[9,128,128], index: 1, kind: input, shape index: {}]
  %s2 = inlined_call_operand.vmem [shape: f32[1,128], index: 2, kind: input, shape index: {}]
  %s3 = inlined_call_operand.hbm [shape: bf16[9,128,128], index: 3, kind: input, shape index: {}]
  %s4 = inlined_call_operand.vmem [shape: f32[1,128], index: 4, kind: input, shape index: {}]
  %s5 = inlined_call_operand.hbm [shape: bf16[2,16,16,128], index: 5, kind: output, shape index: {0}]
  %s6 = inlined_call_operand.hbm [shape: f32[2,2,2,128], index: 6, kind: output, shape index: {1}]
  %7 = xla_tuple %s5, %s6
  %s8 = sld [smem:[#allocation0]]
  $region65: #{tpu_custom_call.1} parent=0
    _
  %s10 = ssub.s32 1, %s8
  %s11 = scalar_select 0, %s10, %s8
  $region1: #{tpu_custom_call.1} parent=0
    #allocation3 [shape = 'u8[294912]{0}', space=vmem, size = 0x48000, scoped, tag = 'input window, operand 3, single buffered']
    #allocation4 [shape = 's32[2]{0}', space=sflag, size = 0x8, scoped, tag = 'scoped memory for tpu_custom_call.1']
    #allocation5 [shape = 's32[2]{0}', space=sflag, size = 0x8, scoped, tag = 'scoped memory for tpu_custom_call.1']
    #allocation6 [shape = 'u8[65536]{0}', space=vmem, size = 0x10000, scoped, tag = 'output window, operand 0']
    #allocation7 [shape = 'u8[2048]{0}', space=vmem, size = 0x800, scoped, tag = 'output window, operand 1']
    #allocation8 [shape = 's32[2]{0}', space=sflag, size = 0x8, scoped, tag = 'scoped memory for tpu_custom_call.1']
    %12 = vsyncpa [#allocation4], 0
    %13 = vsyncpa [#allocation5], 0
    %s14 = scalar_lea.sflag [#allocation5], 1
    %15 = vsyncpa %s14, 0
    %16 = vsyncpa [#allocation8], 0
    %s17 = scalar_lea.sflag [#allocation8], 1
    %18 = vsyncpa %s17, 0
    loop: start=0, step=1, limit=6
    $region2: #{tpu_custom_call.1} parent=1 // loop_pre_header
      _
    $region3: #{tpu_custom_call.1} parent=1 // loop_header
      %s20 = sphi 0, %s24
      %p21 = scmp.ge.s32.totalorder %s20, 6
      %s27 = sphi 0, %s39
      %s28 = sphi 0, %s35
      %s29 = sphi 0, %s27
      %s30 = sphi 0, %s28
      %s31 = sphi 0, %s29
      %s32 = sphi 0, %s30
      %s42 = sphi 0, %s44
      %s45 = sphi 0, %s42
      %s46 = sphi 0, %s45
      %s62 = sphi 0, %s46
      %s66 = sphi 0, %s66
      %s68 = sphi 0, %s66
      %s69 = sphi 0, %s68
      %s83 = sphi 0, %s69
      %s87 = sphi 0, %s87
      %s89 = sphi 0, %s87
      %s90 = sphi 0, %s89
      %s104 = sphi 0, %s90
      %s108 = sphi 0, %s108
      %s110 = sphi 0, %s108
      %s111 = sphi 0, %s110
      %s125 = sphi 0, %s111
      %s129 = sphi 0, %s129
      %s131 = sphi 0, %s129
      %s132 = sphi 0, %s131
      %s146 = sphi 0, %s132
      %s154 = sphi 0, %s156
      %s157 = sphi 0, %s154
      %s158 = sphi 0, %s157
      %s174 = sphi 0, %s158
      %s182 = sphi 0, %s184
      %s185 = sphi 0, %s182
      %s186 = sphi 0, %s185
      %s202 = sphi 0, %s186
    $region4: #{tpu_custom_call.1} parent=1 // loop_header_branch
      %23 = sbr.rel (%p21) target = $region8
    $region5: #{tpu_custom_call.1} parent=1 // loop_body
      %s25 = ssub.s32 %s20, 1
      %s26 = ssub.s32 %s20, 2
      %s33 = sadd.s32 1, %s28
      %p34 = scmp.ge.s32.totalorder %s33, 2
      %s35 = scalar_select %p34, 0, %s33
      %s36 = sadd.s32 1, %s27
      %s37 = scalar_select %p34, %s36, %s27
      %p38 = scmp.ge.s32.totalorder %s37, 2
      %s39 = scalar_select %p38, 0, %s37
      %s40 = ssub.s32 %s27, %s39
      %p41 = scmp.eq.s32.totalorder %s40, 0
      %s43 = sadd.s32 %s42, 1
      %s44 = scalar_select %p41, %s42, %s43
      %p47 = pneg %p41
      %p48 = scmp.eq.s32.totalorder %s20, 3
      %p49 = por %p47, %p48
      %p50 = scmp.ne.s32.totalorder %s42, %s45
      %p51 = scmp.eq.s32.totalorder %s20, 0
      %p52 = por %p50, %p51
      %p53 = scmp.ne.s32.totalorder %s42, %s45
      %p54 = scmp.eq.s32.totalorder %s25, 3
      %p55 = por %p53, %p54
      %p56 = scmp.ne.s32.totalorder %s45, %s46
      %p57 = scmp.eq.s32.totalorder %s25, 0
      %p58 = por %p56, %p57
      %p59 = scmp.ne.s32.totalorder %s45, %s46
      %p60 = scmp.eq.s32.totalorder %s26, 3
      %p61 = por %p59, %p60
      %p63 = scmp.ne.s32.totalorder %s46, %s62
      %p64 = scmp.eq.s32.totalorder %s26, 0
      %p65 = por %p63, %p64
      %s67 = sadd.s32 %s66, 1
      %p70 = scmp.eq.s32.totalorder %s20, 3
      %p71 = scmp.ne.s32.totalorder %s66, %s68
      %p72 = scmp.eq.s32.totalorder %s20, 0
      %p73 = por %p71, %p72
      %p74 = scmp.ne.s32.totalorder %s66, %s68
      %p75 = scmp.eq.s32.totalorder %s25, 3
      %p76 = por %p74, %p75
      %p77 = scmp.ne.s32.totalorder %s68, %s69
      %p78 = scmp.eq.s32.totalorder %s25, 0
      %p79 = por %p77, %p78
      %p80 = scmp.ne.s32.totalorder %s68, %s69
      %p81 = scmp.eq.s32.totalorder %s26, 3
      %p82 = por %p80, %p81
      %p84 = scmp.ne.s32.totalorder %s69, %s83
      %p85 = scmp.eq.s32.totalorder %s26, 0
      %p86 = por %p84, %p85
      %s88 = sadd.s32 %s87, 1
      %p91 = scmp.eq.s32.totalorder %s20, 3
      %p92 = scmp.ne.s32.totalorder %s87, %s89
      %p93 = scmp.eq.s32.totalorder %s20, 0
      %p94 = por %p92, %p93
      %p95 = scmp.ne.s32.totalorder %s87, %s89
      %p96 = scmp.eq.s32.totalorder %s25, 3
      %p97 = por %p95, %p96
      %p98 = scmp.ne.s32.totalorder %s89, %s90
      %p99 = scmp.eq.s32.totalorder %s25, 0
      %p100 = por %p98, %p99
      %p101 = scmp.ne.s32.totalorder %s89, %s90
      %p102 = scmp.eq.s32.totalorder %s26, 3
      %p103 = por %p101, %p102
      %p105 = scmp.ne.s32.totalorder %s90, %s104
      %p106 = scmp.eq.s32.totalorder %s26, 0
      %p107 = por %p105, %p106
      %s109 = sadd.s32 %s108, 1
      %p112 = scmp.eq.s32.totalorder %s20, 3
      %p113 = scmp.ne.s32.totalorder %s108, %s110
      %p114 = scmp.eq.s32.totalorder %s20, 0
      %p115 = por %p113, %p114
      %p116 = scmp.ne.s32.totalorder %s108, %s110
      %p117 = scmp.eq.s32.totalorder %s25, 3
      %p118 = por %p116, %p117
      %p119 = scmp.ne.s32.totalorder %s110, %s111
      %p120 = scmp.eq.s32.totalorder %s25, 0
      %p121 = por %p119, %p120
      %p122 = scmp.ne.s32.totalorder %s110, %s111
      %p123 = scmp.eq.s32.totalorder %s26, 3
      %p124 = por %p122, %p123
      %p126 = scmp.ne.s32.totalorder %s111, %s125
      %p127 = scmp.eq.s32.totalorder %s26, 0
      %p128 = por %p126, %p127
      %s130 = sadd.s32 %s129, 1
      %p133 = scmp.eq.s32.totalorder %s20, 3
      %p134 = scmp.ne.s32.totalorder %s129, %s131
      %p135 = scmp.eq.s32.totalorder %s20, 0
      %p136 = por %p134, %p135
      %p137 = scmp.ne.s32.totalorder %s129, %s131
      %p138 = scmp.eq.s32.totalorder %s25, 3
      %p139 = por %p137, %p138
      %p140 = scmp.ne.s32.totalorder %s131, %s132
      %p141 = scmp.eq.s32.totalorder %s25, 0
      %p142 = por %p140, %p141
      %p143 = scmp.ne.s32.totalorder %s131, %s132
      %p144 = scmp.eq.s32.totalorder %s26, 3
      %p145 = por %p143, %p144
      %p147 = scmp.ne.s32.totalorder %s132, %s146
      %p148 = scmp.eq.s32.totalorder %s26, 0
      %p149 = por %p147, %p148
      %s150 = ssub.s32 %s27, %s39
      %s151 = ssub.s32 %s28, %s35
      %s152 = sor.u32 %s150, %s151
      %p153 = scmp.eq.s32.totalorder %s152, 0
      %s155 = sadd.s32 %s154, 1
      %s156 = scalar_select %p153, %s154, %s155
      %p159 = pneg %p153
      %p160 = scmp.eq.s32.totalorder %s20, 3
      %p161 = por %p159, %p160
      %p162 = scmp.ne.s32.totalorder %s154, %s157
      %p163 = scmp.eq.s32.totalorder %s20, 0
      %p164 = por %p162, %p163
      %p165 = scmp.ne.s32.totalorder %s154, %s157
      %p166 = scmp.eq.s32.totalorder %s25, 3
      %p167 = por %p165, %p166
      %p168 = scmp.ne.s32.totalorder %s157, %s158
      %p169 = scmp.eq.s32.totalorder %s25, 0
      %p170 = por %p168, %p169
      %p171 = scmp.ne.s32.totalorder %s157, %s158
      %p172 = scmp.eq.s32.totalorder %s26, 3
      %p173 = por %p171, %p172
      %p175 = scmp.ne.s32.totalorder %s158, %s174
      %p176 = scmp.eq.s32.totalorder %s26, 0
      %p177 = por %p175, %p176
      %s178 = ssub.s32 %s27, %s39
      %s179 = ssub.s32 %s28, %s35
      %s180 = sor.u32 %s178, %s179
      %p181 = scmp.eq.s32.totalorder %s180, 0
      %s183 = sadd.s32 %s182, 1
      %s184 = scalar_select %p181, %s182, %s183
      %p187 = pneg %p181
      %p188 = scmp.eq.s32.totalorder %s20, 3
      %p189 = por %p187, %p188
      %p190 = scmp.ne.s32.totalorder %s182, %s185
      %p191 = scmp.eq.s32.totalorder %s20, 0
      %p192 = por %p190, %p191
      %p193 = scmp.ne.s32.totalorder %s182, %s185
      %p194 = scmp.eq.s32.totalorder %s25, 3
      %p195 = por %p193, %p194
      %p196 = scmp.ne.s32.totalorder %s185, %s186
      %p197 = scmp.eq.s32.totalorder %s25, 0
      %p198 = por %p196, %p197
      %p199 = scmp.ne.s32.totalorder %s185, %s186
      %p200 = scmp.eq.s32.totalorder %s26, 3
      %p201 = por %p199, %p200
      %p203 = scmp.ne.s32.totalorder %s186, %s202
      %p204 = scmp.eq.s32.totalorder %s26, 0
      %p205 = por %p203, %p204
      %p206 = scmp.le.s32.totalorder 1, %s20
      %p207 = scmp.lt.s32.totalorder %s20, 5
      %p208 = pnand %p206, %p207
      %p209 = pneg %p208
      // Predicated region
      $region9: #{tpu_custom_call.1} parent=5 // pred_check
        _
      $region10: #{tpu_custom_call.1} parent=5 // pred_check_branch
        %211 = sbr.rel (%p208) target = $region12
      $region11: #{tpu_custom_call.1} parent=5 // pred_region
        %s212 = ssub.s32 %s20, 1
        // Predicated region
        $region13: #{tpu_custom_call.1} parent=11 // pred_check
          %p213 = pneg %p79
        $region14: #{tpu_custom_call.1} parent=11 // pred_check_branch
          %215 = sbr.rel (%p213) target = $region16
        $region15: #{tpu_custom_call.1} parent=11 // pred_region
          _
        $region16: #{tpu_custom_call.1} parent=11 // pred_fallthru
          _
        // Predicated region
        $region17: #{tpu_custom_call.1} parent=11 // pred_check
          %p216 = pneg %p100
        $region18: #{tpu_custom_call.1} parent=11 // pred_check_branch
          %218 = sbr.rel (%p216) target = $region20
        $region19: #{tpu_custom_call.1} parent=11 // pred_region
          _
        $region20: #{tpu_custom_call.1} parent=11 // pred_fallthru
          _
        // Predicated region
        $region21: #{tpu_custom_call.1} parent=11 // pred_check
          %p219 = pneg %p121
        $region22: #{tpu_custom_call.1} parent=11 // pred_check_branch
          %221 = sbr.rel (%p219) target = $region24
        $region23: #{tpu_custom_call.1} parent=11 // pred_region
          %223 = vsyncadd [#allocation4], 0
          %s224 = sshll.u32 %s3, 4
          %s225 = int_to_ptr.hbm [resolvable:$true] %s224
          %s226 = sshll.u32 [#allocation3], 4
          %s227 = int_to_ptr.vmem [resolvable:$true] %s226
          %232 = dma.hbm_to_vmem [thread:$0]  %s225, 9216, %s227, [#allocation4], 64, 64, 4
        $region24: #{tpu_custom_call.1} parent=11 // pred_fallthru
          _
        // Predicated region
        $region25: #{tpu_custom_call.1} parent=11 // pred_check
          %p233 = pneg %p142
        $region26: #{tpu_custom_call.1} parent=11 // pred_check_branch
          %235 = sbr.rel (%p233) target = $region28
        $region27: #{tpu_custom_call.1} parent=11 // pred_region
          _
        $region28: #{tpu_custom_call.1} parent=11 // pred_fallthru
          _
      $region12: #{tpu_custom_call.1} parent=5 // pred_fallthru
        _
      %p236 = scmp.lt.s32.totalorder %s20, 4
      // Predicated region
      $region29: #{tpu_custom_call.1} parent=5 // pred_check
        %p237 = pneg %p236
      $region30: #{tpu_custom_call.1} parent=5 // pred_check_branch
        %239 = sbr.rel (%p237) target = $region32
      $region31: #{tpu_custom_call.1} parent=5 // pred_region
        // Predicated region
        $region33: #{tpu_custom_call.1} parent=31 // pred_check
          %p240 = pneg %p52
        $region34: #{tpu_custom_call.1} parent=31 // pred_check_branch
          %242 = sbr.rel (%p240) target = $region36
        $region35: #{tpu_custom_call.1} parent=31 // pred_region
          %p243 = scmp.lt.s32.totalorder %s27, 1
          %s244 = scalar_select %p243, %s27, 1
          %s245 = smul.addr %s244, 60
          %s246 = smul.addr %s245, 4
          %s247 = scalar_lea.vmem %s0, %s246
        $region36: #{tpu_custom_call.1} parent=31 // pred_fallthru
          _
      $region32: #{tpu_custom_call.1} parent=5 // pred_fallthru
        _
      %p248 = scmp.le.s32.totalorder 1, %s20
      %p249 = scmp.lt.s32.totalorder %s20, 5
      %p250 = pnand %p248, %p249
      %p251 = pneg %p250
      // Predicated region
      $region37: #{tpu_custom_call.1} parent=5 // pred_check
        _
      $region38: #{tpu_custom_call.1} parent=5 // pred_check_branch
        %253 = sbr.rel (%p250) target = $region40
      $region39: #{tpu_custom_call.1} parent=5 // pred_region
        %s254 = ssub.s32 %s20, 1
        // Predicated region
        $region41: #{tpu_custom_call.1} parent=39 // pred_check
          %p255 = pneg %p121
        $region42: #{tpu_custom_call.1} parent=39 // pred_check_branch
          %257 = sbr.rel (%p255) target = $region44
        $region43: #{tpu_custom_call.1} parent=39 // pred_region
          %259 = dma.done [#allocation4], 9216
        $region44: #{tpu_custom_call.1} parent=39 // pred_fallthru
          _
        %p260 = scmp.lt.s32.totalorder %s29, 1
        %s261 = scalar_select %p260, %s29, 1
        %s262 = smul.addr %s261, 60
        %s263 = smul.addr %s262, 4
        %s264 = scalar_lea.vmem %s0, %s263
        %p265 = pneg %p58
        %p266 = pneg %p55
        %p267 = pneg %p79
        %p268 = pneg %p76
        %p269 = pneg %p100
        %p270 = pneg %p97
        %p271 = pneg %p121
        %p272 = pneg %p118
        %p273 = pneg %p142
        %p274 = pneg %p139
        %p275 = pneg %p170
        %p276 = pneg %p167
        %s277 = sand.u32 %s157, 1
        %s278 = scalar_lea.sflag [#allocation5], %s277
        %s279 = sand.u32 %s157, 1
        %s280 = smul.addr %s279, 64
        %s281 = scalar_lea.vmem [#allocation6], %s280
        %p282 = pneg %p198
        %p283 = pneg %p195
        %s284 = sand.u32 %s185, 1
        %s285 = scalar_lea.sflag [#allocation8], %s284
        %s286 = sand.u32 %s185, 1
        %s287 = smul.addr %s286, 2
        %s288 = scalar_lea.vmem [#allocation7], %s287
        %p289 = scmp.lt.s32.totalorder %s29, 1
        %s290 = scalar_select %p289, %s29, 1
        %s291 = smul.addr %s290, 60
        %s292 = smul.addr %s291, 4
        %s293 = scalar_lea.vmem %s0, %s292
        %s294 = smul.u32 8, %s30
        %s296 = smul.u32 %s30, 8
        %s297 = smul.u32 %s296, 3
        %s298 = smul.addr %s297, 4
        %s299 = scalar_lea.vmem %s293, %s298
        %v300 = vld [vmem:[%s299] sm:$0xf]
        %v301 = vld [vmem:[%s299 + $0x4] sm:$0xf]
        %v302 = vld [vmem:[%s299 + $0x8] sm:$0x1]
        %v303 = vld [vmem:[%s299 + $0xc] sm:$0xf]
        %v304 = vld [vmem:[%s299 + $0x10] sm:$0xf]
        %v305 = vld [vmem:[%s299 + $0x14] sm:$0x1]
        %v306 = vld [vmem:[%s299 + $0x18] sm:$0xf]
        %v307 = vld [vmem:[%s299 + $0x1c] sm:$0xf]
        %v308 = vld [vmem:[%s299 + $0x20] sm:$0x1]
        %v309 = vld [vmem:[%s299 + $0x24] sm:$0xf]
        %v310 = vld [vmem:[%s299 + $0x28] sm:$0xf]
        %v311 = vld [vmem:[%s299 + $0x2c] sm:$0x1]
        %v312 = vld [vmem:[%s299 + $0x30] sm:$0xf]
        %v313 = vld [vmem:[%s299 + $0x34] sm:$0xf]
        %v314 = vld [vmem:[%s299 + $0x38] sm:$0x1]
        %v315 = vld [vmem:[%s299 + $0x3c] sm:$0xf]
        %v316 = vld [vmem:[%s299 + $0x40] sm:$0xf]
        %v317 = vld [vmem:[%s299 + $0x44] sm:$0x1]
        %v318 = vld [vmem:[%s299 + $0x48] sm:$0xf]
        %v319 = vld [vmem:[%s299 + $0x4c] sm:$0xf]
        %v320 = vld [vmem:[%s299 + $0x50] sm:$0x1]
        %v321 = vld [vmem:[%s299 + $0x54] sm:$0xf]
        %v322 = vld [vmem:[%s299 + $0x58] sm:$0xf]
        %v323 = vld [vmem:[%s299 + $0x5c] sm:$0x1]
        %v324 = vld [vmem:[%s299 + $0x60] sm:$0xf]
        %v325 = vld [vmem:[%s299 + $0x64] sm:$0xf]
        %v326 = vld [vmem:[%s299 + $0x68] sm:$0x1]
        %v327 = vld [vmem:[%s299 + $0x6c] sm:$0xf]
        %v328 = vld [vmem:[%s299 + $0x70] sm:$0xf]
        %v329 = vld [vmem:[%s299 + $0x74] sm:$0x1]
        %v330 = vld [vmem:[%s299 + $0x78] sm:$0xf]
        %v331 = vld [vmem:[%s299 + $0x7c] sm:$0xf]
        %v332 = vld [vmem:[%s299 + $0x80] sm:$0x1]
        %v333 = vld [vmem:[%s299 + $0x84] sm:$0xf]
        %v334 = vld [vmem:[%s299 + $0x88] sm:$0xf]
        %v335 = vld [vmem:[%s299 + $0x8c] sm:$0x1]
        %v336 = vld [vmem:[%s1] sm:$0xf]
        %v337 = vld [vmem:[%s1 + $0x4] sm:$0xf]
        %v338 = vld [vmem:[%s1 + $0x8] sm:$0xf]
        %v339 = vld [vmem:[%s1 + $0xc] sm:$0xf]
        %v340 = vld [vmem:[%s1 + $0x10] sm:$0xf]
        %v341 = vld [vmem:[%s1 + $0x14] sm:$0xf]
        %v342 = vld [vmem:[%s1 + $0x18] sm:$0xf]
        %v343 = vld [vmem:[%s1 + $0x1c] sm:$0xf]
        %v344 = vld [vmem:[%s1 + $0x20] sm:$0xf]
        %v345 = vld [vmem:[%s1 + $0x24] sm:$0xf]
        %v346 = vld [vmem:[%s1 + $0x28] sm:$0xf]
        %v347 = vld [vmem:[%s1 + $0x2c] sm:$0xf]
        %v348 = vld [vmem:[%s1 + $0x30] sm:$0xf]
        %v349 = vld [vmem:[%s1 + $0x34] sm:$0xf]
        %v350 = vld [vmem:[%s1 + $0x38] sm:$0xf]
        %v351 = vld [vmem:[%s1 + $0x3c] sm:$0xf]
        %vm352 = vsmask.f32 3328
        %vm353 = vsmask.f32 7440
        %vm354 = vmor %vm352, %vm353
        %v356 = vshrl.u32 %v300, 16
        %v358 = vrot.slane %v356, 4
        %v359 = vshll.u32 %v300, 16
        %v361 = vrot.slane %v359, 5
        %v362 = vor.u32 %v358, %v361
        %v363 = vrot.slane %v362, 4
        %v365 = vshll.u32 %v301, 16
        %v367 = vrot.slane %v365, 5
        %v368 = vsel %vm354, %v363, %v367
        %v369 = vshrl.u32 %v301, 16
        %v371 = vrot.slane %v369, 4
        %v372 = vor.u32 %v371, %v367
        %v373 = vrot.slane %v372, 4
        %v375 = vshll.u32 %v302, 16
        %v377 = vrot.slane %v375, 5
        %v378 = vsel %vm354, %v373, %v377
        %v380 = vshrl.u32 %v303, 16
        %v382 = vrot.slane %v380, 4
        %v383 = vshll.u32 %v303, 16
        %v385 = vrot.slane %v383, 5
        %v386 = vor.u32 %v382, %v385
        %v387 = vrot.slane %v386, 4
        %v389 = vshll.u32 %v304, 16
        %v391 = vrot.slane %v389, 5
        %v392 = vsel %vm354, %v387, %v391
        %v393 = vshrl.u32 %v304, 16
        %v395 = vrot.slane %v393, 4
        %v396 = vor.u32 %v395, %v391
        %v397 = vrot.slane %v396, 4
        %v399 = vshll.u32 %v305, 16
        %v401 = vrot.slane %v399, 5
        %v402 = vsel %vm354, %v397, %v401
        %v404 = vshrl.u32 %v306, 16
        %v406 = vrot.slane %v404, 4
        %v407 = vshll.u32 %v306, 16
        %v409 = vrot.slane %v407, 5
        %v410 = vor.u32 %v406, %v409
        %v411 = vrot.slane %v410, 4
        %v413 = vshll.u32 %v307, 16
        %v415 = vrot.slane %v413, 5
        %v416 = vsel %vm354, %v411, %v415
        %v417 = vshrl.u32 %v307, 16
        %v419 = vrot.slane %v417, 4
        %v420 = vor.u32 %v419, %v415
        %v421 = vrot.slane %v420, 4
        %v423 = vshll.u32 %v308, 16
        %v425 = vrot.slane %v423, 5
        %v426 = vsel %vm354, %v421, %v425
        %v428 = vshrl.u32 %v309, 16
        %v430 = vrot.slane %v428, 4
        %v431 = vshll.u32 %v309, 16
        %v433 = vrot.slane %v431, 5
        %v434 = vor.u32 %v430, %v433
        %v435 = vrot.slane %v434, 4
        %v437 = vshll.u32 %v310, 16
        %v439 = vrot.slane %v437, 5
        %v440 = vsel %vm354, %v435, %v439
        %v441 = vshrl.u32 %v310, 16
        %v443 = vrot.slane %v441, 4
        %v444 = vor.u32 %v443, %v439
        %v445 = vrot.slane %v444, 4
        %v447 = vshll.u32 %v311, 16
        %v449 = vrot.slane %v447, 5
        %v450 = vsel %vm354, %v445, %v449
        %v452 = vshrl.u32 %v312, 16
        %v454 = vrot.slane %v452, 4
        %v455 = vshll.u32 %v312, 16
        %v457 = vrot.slane %v455, 5
        %v458 = vor.u32 %v454, %v457
        %v459 = vrot.slane %v458, 4
        %v461 = vshll.u32 %v313, 16
        %v463 = vrot.slane %v461, 5
        %v464 = vsel %vm354, %v459, %v463
        %v465 = vshrl.u32 %v313, 16
        %v467 = vrot.slane %v465, 4
        %v468 = vor.u32 %v467, %v463
        %v469 = vrot.slane %v468, 4
        %v471 = vshll.u32 %v314, 16
        %v473 = vrot.slane %v471, 5
        %v474 = vsel %vm354, %v469, %v473
        %v476 = vshrl.u32 %v315, 16
        %v478 = vrot.slane %v476, 4
        %v479 = vshll.u32 %v315, 16
        %v481 = vrot.slane %v479, 5
        %v482 = vor.u32 %v478, %v481
        %v483 = vrot.slane %v482, 4
        %v485 = vshll.u32 %v316, 16
        %v487 = vrot.slane %v485, 5
        %v488 = vsel %vm354, %v483, %v487
        %v489 = vshrl.u32 %v316, 16
        %v491 = vrot.slane %v489, 4
        %v492 = vor.u32 %v491, %v487
        %v493 = vrot.slane %v492, 4
        %v495 = vshll.u32 %v317, 16
        %v497 = vrot.slane %v495, 5
        %v498 = vsel %vm354, %v493, %v497
        %v500 = vshrl.u32 %v318, 16
        %v502 = vrot.slane %v500, 4
        %v503 = vshll.u32 %v318, 16
        %v505 = vrot.slane %v503, 5
        %v506 = vor.u32 %v502, %v505
        %v507 = vrot.slane %v506, 4
        %v509 = vshll.u32 %v319, 16
        %v511 = vrot.slane %v509, 5
        %v512 = vsel %vm354, %v507, %v511
        %v513 = vshrl.u32 %v319, 16
        %v515 = vrot.slane %v513, 4
        %v516 = vor.u32 %v515, %v511
        %v517 = vrot.slane %v516, 4
        %v519 = vshll.u32 %v320, 16
        %v521 = vrot.slane %v519, 5
        %v522 = vsel %vm354, %v517, %v521
        %v524 = vshrl.u32 %v321, 16
        %v526 = vrot.slane %v524, 4
        %v527 = vshll.u32 %v321, 16
        %v529 = vrot.slane %v527, 5
        %v530 = vor.u32 %v526, %v529
        %v531 = vrot.slane %v530, 4
        %v533 = vshll.u32 %v322, 16
        %v535 = vrot.slane %v533, 5
        %v536 = vsel %vm354, %v531, %v535
        %v537 = vshrl.u32 %v322, 16
        %v539 = vrot.slane %v537, 4
        %v540 = vor.u32 %v539, %v535
        %v541 = vrot.slane %v540, 4
        %v543 = vshll.u32 %v323, 16
        %v545 = vrot.slane %v543, 5
        %v546 = vsel %vm354, %v541, %v545
        %v548 = vshrl.u32 %v324, 16
        %v550 = vrot.slane %v548, 4
        %v551 = vshll.u32 %v324, 16
        %v553 = vrot.slane %v551, 5
        %v554 = vor.u32 %v550, %v553
        %v555 = vrot.slane %v554, 4
        %v557 = vshll.u32 %v325, 16
        %v559 = vrot.slane %v557, 5
        %v560 = vsel %vm354, %v555, %v559
        %v561 = vshrl.u32 %v325, 16
        %v563 = vrot.slane %v561, 4
        %v564 = vor.u32 %v563, %v559
        %v565 = vrot.slane %v564, 4
        %v567 = vshll.u32 %v326, 16
        %v569 = vrot.slane %v567, 5
        %v570 = vsel %vm354, %v565, %v569
        %v572 = vshrl.u32 %v327, 16
        %v574 = vrot.slane %v572, 4
        %v575 = vshll.u32 %v327, 16
        %v577 = vrot.slane %v575, 5
        %v578 = vor.u32 %v574, %v577
        %v579 = vrot.slane %v578, 4
        %v581 = vshll.u32 %v328, 16
        %v583 = vrot.slane %v581, 5
        %v584 = vsel %vm354, %v579, %v583
        %v585 = vshrl.u32 %v328, 16
        %v587 = vrot.slane %v585, 4
        %v588 = vor.u32 %v587, %v583
        %v589 = vrot.slane %v588, 4
        %v591 = vshll.u32 %v329, 16
        %v593 = vrot.slane %v591, 5
        %v594 = vsel %vm354, %v589, %v593
        %s595 = scalar_lea.vmem %s1, 64
        %v596 = vld [vmem:[%s595] sm:$0xf]
        %v597 = vld [vmem:[%s595 + $0x4] sm:$0xf]
        %v598 = vld [vmem:[%s595 + $0x8] sm:$0xf]
        %v599 = vld [vmem:[%s595 + $0xc] sm:$0xf]
        %v600 = vld [vmem:[%s595 + $0x10] sm:$0xf]
        %v601 = vld [vmem:[%s595 + $0x14] sm:$0xf]
        %v602 = vld [vmem:[%s595 + $0x18] sm:$0xf]
        %v603 = vld [vmem:[%s595 + $0x1c] sm:$0xf]
        %v604 = vld [vmem:[%s595 + $0x20] sm:$0xf]
        %v605 = vld [vmem:[%s595 + $0x24] sm:$0xf]
        %v606 = vld [vmem:[%s595 + $0x28] sm:$0xf]
        %v607 = vld [vmem:[%s595 + $0x2c] sm:$0xf]
        %v608 = vld [vmem:[%s595 + $0x30] sm:$0xf]
        %v609 = vld [vmem:[%s595 + $0x34] sm:$0xf]
        %v610 = vld [vmem:[%s595 + $0x38] sm:$0xf]
        %v611 = vld [vmem:[%s595 + $0x3c] sm:$0xf]
        %v612 = vunpack.c.l.b16 %v368
        %v613 = vunpack.c.l.b16 %v378
        %v614 = vunpack.c.l.b16 %v392
        %v615 = vunpack.c.l.b16 %v402
        %v616 = vunpack.c.l.b16 %v416
        %v617 = vunpack.c.l.b16 %v426
        %v618 = vunpack.c.l.b16 %v440
        %v619 = vunpack.c.l.b16 %v450
        %v620 = vunpack.c.l.b16 %v464
        %v621 = vunpack.c.l.b16 %v474
        %v622 = vunpack.c.l.b16 %v488
        %v623 = vunpack.c.l.b16 %v498
        %v624 = vunpack.c.l.b16 %v512
        %v625 = vunpack.c.l.b16 %v522
        %v626 = vunpack.c.l.b16 %v536
        %v627 = vunpack.c.l.b16 %v546
        %v628 = vunpack.c.l.b16 %v560
        %v629 = vunpack.c.l.b16 %v570
        %v630 = vunpack.c.l.b16 %v584
        %v631 = vunpack.c.l.b16 %v594
        %v632 = vpack.c.b16 %v613, %v612
        %v633 = vpack.c.b16 %v615, %v614
        %v634 = vpack.c.b16 %v617, %v616
        %v635 = vpack.c.b16 %v619, %v618
        %v636 = vpack.c.b16 %v621, %v620
        %v637 = vpack.c.b16 %v623, %v622
        %v638 = vpack.c.b16 %v625, %v624
        %v639 = vpack.c.b16 %v627, %v626
        %v640 = vpack.c.b16 %v629, %v628
        %v641 = vpack.c.b16 %v631, %v630
        %v668 = vunpack.c.l.b16 %v596
        %v669 = vunpack.c.l.b16 %v597
        %v670 = vunpack.c.l.b16 %v598
        %v671 = vunpack.c.l.b16 %v599
        %v672 = vunpack.c.l.b16 %v600
        %v673 = vunpack.c.l.b16 %v601
        %v674 = vunpack.c.l.b16 %v602
        %v675 = vunpack.c.l.b16 %v603
        %v676 = vunpack.c.l.b16 %v604
        %v677 = vunpack.c.l.b16 %v605
        %v678 = vunpack.c.l.b16 %v606
        %v679 = vunpack.c.l.b16 %v607
        %v680 = vunpack.c.l.b16 %v608
        %v681 = vunpack.c.l.b16 %v609
        %v682 = vunpack.c.l.b16 %v610
        %v683 = vunpack.c.l.b16 %v611
        %v684 = vpack.c.b16 %v669, %v668
        %v685 = vpack.c.b16 %v671, %v670
        %v686 = vpack.c.b16 %v673, %v672
        %v687 = vpack.c.b16 %v675, %v674
        %v688 = vpack.c.b16 %v677, %v676
        %v689 = vpack.c.b16 %v679, %v678
        %v690 = vpack.c.b16 %v681, %v680
        %v691 = vpack.c.b16 %v683, %v682
        %700 = vmatpush.bf16.msra.mxu0 %v691
        %701 = vmatpush.bf16.msra.mxu0 %v690
        %702 = vmatpush.bf16.msra.mxu0 %v689
        %703 = vmatpush.bf16.msra.mxu0 %v688
        %704 = vmatpush.bf16.msra.mxu0 %v687
        %705 = vmatpush.bf16.msra.mxu0 %v686
        %706 = vmatpush.bf16.msra.mxu0 %v685
        %707 = vmatpush.bf16.msra.mxu0 %v684
        %708 = vmatmul.bf16.gmra.mxu0 %v632
        %v709 = vpop.f32.mrf.mxu0
        %v710 = vadd.f32 0.0, %v709
        %v711 = vpop.f32.mrf.mxu0
        %v712 = vadd.f32 0.0, %v711
        %713 = vmatmul.bf16.gmra.mxu0 %v633
        %v714 = vpop.f32.mrf.mxu0
        %v715 = vadd.f32 0.0, %v714
        %v716 = vpop.f32.mrf.mxu0
        %v717 = vadd.f32 0.0, %v716
        %718 = vmatmul.bf16.gmra.mxu0 %v634
        %v719 = vpop.f32.mrf.mxu0
        %v720 = vadd.f32 0.0, %v719
        %v721 = vpop.f32.mrf.mxu0
        %v722 = vadd.f32 0.0, %v721
        %723 = vmatmul.bf16.gmra.mxu0 %v635
        %v724 = vpop.f32.mrf.mxu0
        %v725 = vadd.f32 0.0, %v724
        %v726 = vpop.f32.mrf.mxu0
        %v727 = vadd.f32 0.0, %v726
        %728 = vmatmul.bf16.gmra.mxu0 %v636
        %v729 = vpop.f32.mrf.mxu0
        %v730 = vadd.f32 0.0, %v729
        %v731 = vpop.f32.mrf.mxu0
        %v732 = vadd.f32 0.0, %v731
        %733 = vmatmul.bf16.gmra.mxu0 %v637
        %v734 = vpop.f32.mrf.mxu0
        %v735 = vadd.f32 0.0, %v734
        %v736 = vpop.f32.mrf.mxu0
        %v737 = vadd.f32 0.0, %v736
        %738 = vmatmul.bf16.gmra.mxu0 %v638
        %v739 = vpop.f32.mrf.mxu0
        %v740 = vadd.f32 0.0, %v739
        %v741 = vpop.f32.mrf.mxu0
        %v742 = vadd.f32 0.0, %v741
        %743 = vmatmul.bf16.gmra.mxu0 %v639
        %v744 = vpop.f32.mrf.mxu0
        %v745 = vadd.f32 0.0, %v744
        %v746 = vpop.f32.mrf.mxu0
        %v747 = vadd.f32 0.0, %v746
        %748 = vmatmul.bf16.gmra.mxu0 %v640
        %v749 = vpop.f32.mrf.mxu0
        %v750 = vadd.f32 0.0, %v749
        %v751 = vpop.f32.mrf.mxu0
        %v752 = vadd.f32 0.0, %v751
        %753 = vmatmul.bf16.gmra.mxu0 %v641
        %v754 = vpop.f32.mrf.mxu0
        %v755 = vadd.f32 0.0, %v754
        %v756 = vpop.f32.mrf.mxu0
        %v757 = vadd.f32 0.0, %v756
        %758 = vdwg.mxu0
        %v779 = vunpack.c.l.b16 %v300
        %v780 = vunpack.c.l.b16 %v301
        %v781 = vunpack.c.l.b16 %v303
        %v782 = vunpack.c.l.b16 %v304
        %v783 = vunpack.c.l.b16 %v306
        %v784 = vunpack.c.l.b16 %v307
        %v785 = vunpack.c.l.b16 %v309
        %v786 = vunpack.c.l.b16 %v310
        %v787 = vunpack.c.l.b16 %v312
        %v788 = vunpack.c.l.b16 %v313
        %v789 = vunpack.c.l.b16 %v315
        %v790 = vunpack.c.l.b16 %v316
        %v791 = vunpack.c.l.b16 %v318
        %v792 = vunpack.c.l.b16 %v319
        %v793 = vunpack.c.l.b16 %v321
        %v794 = vunpack.c.l.b16 %v322
        %v795 = vunpack.c.l.b16 %v324
        %v796 = vunpack.c.l.b16 %v325
        %v797 = vunpack.c.l.b16 %v327
        %v798 = vunpack.c.l.b16 %v328
        %v799 = vpack.c.b16 %v780, %v779
        %v800 = vpack.c.b16 %v782, %v781
        %v801 = vpack.c.b16 %v784, %v783
        %v802 = vpack.c.b16 %v786, %v785
        %v803 = vpack.c.b16 %v788, %v787
        %v804 = vpack.c.b16 %v790, %v789
        %v805 = vpack.c.b16 %v792, %v791
        %v806 = vpack.c.b16 %v794, %v793
        %v807 = vpack.c.b16 %v796, %v795
        %v808 = vpack.c.b16 %v798, %v797
        %v835 = vunpack.c.l.b16 %v336
        %v836 = vunpack.c.l.b16 %v337
        %v837 = vunpack.c.l.b16 %v338
        %v838 = vunpack.c.l.b16 %v339
        %v839 = vunpack.c.l.b16 %v340
        %v840 = vunpack.c.l.b16 %v341
        %v841 = vunpack.c.l.b16 %v342
        %v842 = vunpack.c.l.b16 %v343
        %v843 = vunpack.c.l.b16 %v344
        %v844 = vunpack.c.l.b16 %v345
        %v845 = vunpack.c.l.b16 %v346
        %v846 = vunpack.c.l.b16 %v347
        %v847 = vunpack.c.l.b16 %v348
        %v848 = vunpack.c.l.b16 %v349
        %v849 = vunpack.c.l.b16 %v350
        %v850 = vunpack.c.l.b16 %v351
        %v851 = vpack.c.b16 %v836, %v835
        %v852 = vpack.c.b16 %v838, %v837
        %v853 = vpack.c.b16 %v840, %v839
        %v854 = vpack.c.b16 %v842, %v841
        %v855 = vpack.c.b16 %v844, %v843
        %v856 = vpack.c.b16 %v846, %v845
        %v857 = vpack.c.b16 %v848, %v847
        %v858 = vpack.c.b16 %v850, %v849
        %867 = vmatpush.bf16.msra.mxu0 %v858
        %868 = vmatpush.bf16.msra.mxu0 %v857
        %869 = vmatpush.bf16.msra.mxu0 %v856
        %870 = vmatpush.bf16.msra.mxu0 %v855
        %871 = vmatpush.bf16.msra.mxu0 %v854
        %872 = vmatpush.bf16.msra.mxu0 %v853
        %873 = vmatpush.bf16.msra.mxu0 %v852
        %874 = vmatpush.bf16.msra.mxu0 %v851
        %875 = vmatmul.bf16.gmra.mxu0 %v799
        %v876 = vpop.f32.mrf.mxu0
        %v877 = vadd.f32 %v710, %v876
        %v878 = vpop.f32.mrf.mxu0
        %v879 = vadd.f32 %v712, %v878
        %880 = vmatmul.bf16.gmra.mxu0 %v800
        %v881 = vpop.f32.mrf.mxu0
        %v882 = vadd.f32 %v715, %v881
        %v883 = vpop.f32.mrf.mxu0
        %v884 = vadd.f32 %v717, %v883
        %885 = vmatmul.bf16.gmra.mxu0 %v801
        %v886 = vpop.f32.mrf.mxu0
        %v887 = vadd.f32 %v720, %v886
        %v888 = vpop.f32.mrf.mxu0
        %v889 = vadd.f32 %v722, %v888
        %890 = vmatmul.bf16.gmra.mxu0 %v802
        %v891 = vpop.f32.mrf.mxu0
        %v892 = vadd.f32 %v725, %v891
        %v893 = vpop.f32.mrf.mxu0
        %v894 = vadd.f32 %v727, %v893
        %895 = vmatmul.bf16.gmra.mxu0 %v803
        %v896 = vpop.f32.mrf.mxu0
        %v897 = vadd.f32 %v730, %v896
        %v898 = vpop.f32.mrf.mxu0
        %v899 = vadd.f32 %v732, %v898
        %900 = vmatmul.bf16.gmra.mxu0 %v804
        %v901 = vpop.f32.mrf.mxu0
        %v902 = vadd.f32 %v735, %v901
        %v903 = vpop.f32.mrf.mxu0
        %v904 = vadd.f32 %v737, %v903
        %905 = vmatmul.bf16.gmra.mxu0 %v805
        %v906 = vpop.f32.mrf.mxu0
        %v907 = vadd.f32 %v740, %v906
        %v908 = vpop.f32.mrf.mxu0
        %v909 = vadd.f32 %v742, %v908
        %910 = vmatmul.bf16.gmra.mxu0 %v806
        %v911 = vpop.f32.mrf.mxu0
        %v912 = vadd.f32 %v745, %v911
        %v913 = vpop.f32.mrf.mxu0
        %v914 = vadd.f32 %v747, %v913
        %915 = vmatmul.bf16.gmra.mxu0 %v807
        %v916 = vpop.f32.mrf.mxu0
        %v917 = vadd.f32 %v750, %v916
        %v918 = vpop.f32.mrf.mxu0
        %v919 = vadd.f32 %v752, %v918
        %920 = vmatmul.bf16.gmra.mxu0 %v808
        %v921 = vpop.f32.mrf.mxu0
        %v922 = vadd.f32 %v755, %v921
        %v923 = vpop.f32.mrf.mxu0
        %v924 = vadd.f32 %v757, %v923
        %925 = vdwg.mxu0
        %vm936 = vcmask 1042432
        %vm937 = vcmask 1046532
        %vm938 = vmor %vm936, %vm937
        %v939 = vrot.slane %v300, 5
        %v940 = vrot.slane %v939, 4
        %v941 = vrot.slane %v301, 5
        %v942 = vsel %vm938, %v940, %v941
        %v943 = vrot.slane %v941, 4
        %v944 = vrot.slane %v302, 5
        %v945 = vsel %vm938, %v943, %v944
        %v946 = vrot.slane %v303, 5
        %v947 = vrot.slane %v946, 4
        %v948 = vrot.slane %v304, 5
        %v949 = vsel %vm938, %v947, %v948
        %v950 = vrot.slane %v948, 4
        %v951 = vrot.slane %v305, 5
        %v952 = vsel %vm938, %v950, %v951
        %v953 = vrot.slane %v306, 5
        %v954 = vrot.slane %v953, 4
        %v955 = vrot.slane %v307, 5
        %v956 = vsel %vm938, %v954, %v955
        %v957 = vrot.slane %v955, 4
        %v958 = vrot.slane %v308, 5
        %v959 = vsel %vm938, %v957, %v958
        %v960 = vrot.slane %v309, 5
        %v961 = vrot.slane %v960, 4
        %v962 = vrot.slane %v310, 5
        %v963 = vsel %vm938, %v961, %v962
        %v964 = vrot.slane %v962, 4
        %v965 = vrot.slane %v311, 5
        %v966 = vsel %vm938, %v964, %v965
        %v967 = vrot.slane %v312, 5
        %v968 = vrot.slane %v967, 4
        %v969 = vrot.slane %v313, 5
        %v970 = vsel %vm938, %v968, %v969
        %v971 = vrot.slane %v969, 4
        %v972 = vrot.slane %v314, 5
        %v973 = vsel %vm938, %v971, %v972
        %v974 = vrot.slane %v315, 5
        %v975 = vrot.slane %v974, 4
        %v976 = vrot.slane %v316, 5
        %v977 = vsel %vm938, %v975, %v976
        %v978 = vrot.slane %v976, 4
        %v979 = vrot.slane %v317, 5
        %v980 = vsel %vm938, %v978, %v979
        %v981 = vrot.slane %v318, 5
        %v982 = vrot.slane %v981, 4
        %v983 = vrot.slane %v319, 5
        %v984 = vsel %vm938, %v982, %v983
        %v985 = vrot.slane %v983, 4
        %v986 = vrot.slane %v320, 5
        %v987 = vsel %vm938, %v985, %v986
        %v988 = vrot.slane %v321, 5
        %v989 = vrot.slane %v988, 4
        %v990 = vrot.slane %v322, 5
        %v991 = vsel %vm938, %v989, %v990
        %v992 = vrot.slane %v990, 4
        %v993 = vrot.slane %v323, 5
        %v994 = vsel %vm938, %v992, %v993
        %v995 = vrot.slane %v324, 5
        %v996 = vrot.slane %v995, 4
        %v997 = vrot.slane %v325, 5
        %v998 = vsel %vm938, %v996, %v997
        %v999 = vrot.slane %v997, 4
        %v1000 = vrot.slane %v326, 5
        %v1001 = vsel %vm938, %v999, %v1000
        %v1002 = vrot.slane %v327, 5
        %v1003 = vrot.slane %v1002, 4
        %v1004 = vrot.slane %v328, 5
        %v1005 = vsel %vm938, %v1003, %v1004
        %v1006 = vrot.slane %v1004, 4
        %v1007 = vrot.slane %v329, 5
        %v1008 = vsel %vm938, %v1006, %v1007
        %s1009 = scalar_lea.vmem %s1, 128
        %v1010 = vld [vmem:[%s1009] sm:$0xf]
        %v1011 = vld [vmem:[%s1009 + $0x4] sm:$0xf]
        %v1012 = vld [vmem:[%s1009 + $0x8] sm:$0xf]
        %v1013 = vld [vmem:[%s1009 + $0xc] sm:$0xf]
        %v1014 = vld [vmem:[%s1009 + $0x10] sm:$0xf]
        %v1015 = vld [vmem:[%s1009 + $0x14] sm:$0xf]
        %v1016 = vld [vmem:[%s1009 + $0x18] sm:$0xf]
        %v1017 = vld [vmem:[%s1009 + $0x1c] sm:$0xf]
        %v1018 = vld [vmem:[%s1009 + $0x20] sm:$0xf]
        %v1019 = vld [vmem:[%s1009 + $0x24] sm:$0xf]
        %v1020 = vld [vmem:[%s1009 + $0x28] sm:$0xf]
        %v1021 = vld [vmem:[%s1009 + $0x2c] sm:$0xf]
        %v1022 = vld [vmem:[%s1009 + $0x30] sm:$0xf]
        %v1023 = vld [vmem:[%s1009 + $0x34] sm:$0xf]
        %v1024 = vld [vmem:[%s1009 + $0x38] sm:$0xf]
        %v1025 = vld [vmem:[%s1009 + $0x3c] sm:$0xf]
        %v1026 = vunpack.c.l.b16 %v942
        %v1027 = vunpack.c.l.b16 %v945
        %v1028 = vunpack.c.l.b16 %v949
        %v1029 = vunpack.c.l.b16 %v952
        %v1030 = vunpack.c.l.b16 %v956
        %v1031 = vunpack.c.l.b16 %v959
        %v1032 = vunpack.c.l.b16 %v963
        %v1033 = vunpack.c.l.b16 %v966
        %v1034 = vunpack.c.l.b16 %v970
        %v1035 = vunpack.c.l.b16 %v973
        %v1036 = vunpack.c.l.b16 %v977
        %v1037 = vunpack.c.l.b16 %v980
        %v1038 = vunpack.c.l.b16 %v984
        %v1039 = vunpack.c.l.b16 %v987
        %v1040 = vunpack.c.l.b16 %v991
        %v1041 = vunpack.c.l.b16 %v994
        %v1042 = vunpack.c.l.b16 %v998
        %v1043 = vunpack.c.l.b16 %v1001
        %v1044 = vunpack.c.l.b16 %v1005
        %v1045 = vunpack.c.l.b16 %v1008
        %v1046 = vpack.c.b16 %v1027, %v1026
        %v1047 = vpack.c.b16 %v1029, %v1028
        %v1048 = vpack.c.b16 %v1031, %v1030
        %v1049 = vpack.c.b16 %v1033, %v1032
        %v1050 = vpack.c.b16 %v1035, %v1034
        %v1051 = vpack.c.b16 %v1037, %v1036
        %v1052 = vpack.c.b16 %v1039, %v1038
        %v1053 = vpack.c.b16 %v1041, %v1040
        %v1054 = vpack.c.b16 %v1043, %v1042
        %v1055 = vpack.c.b16 %v1045, %v1044
        %v1082 = vunpack.c.l.b16 %v1010
        %v1083 = vunpack.c.l.b16 %v1011
        %v1084 = vunpack.c.l.b16 %v1012
        %v1085 = vunpack.c.l.b16 %v1013
        %v1086 = vunpack.c.l.b16 %v1014
        %v1087 = vunpack.c.l.b16 %v1015
        %v1088 = vunpack.c.l.b16 %v1016
        %v1089 = vunpack.c.l.b16 %v1017
        %v1090 = vunpack.c.l.b16 %v1018
        %v1091 = vunpack.c.l.b16 %v1019
        %v1092 = vunpack.c.l.b16 %v1020
        %v1093 = vunpack.c.l.b16 %v1021
        %v1094 = vunpack.c.l.b16 %v1022
        %v1095 = vunpack.c.l.b16 %v1023
        %v1096 = vunpack.c.l.b16 %v1024
        %v1097 = vunpack.c.l.b16 %v1025
        %v1098 = vpack.c.b16 %v1083, %v1082
        %v1099 = vpack.c.b16 %v1085, %v1084
        %v1100 = vpack.c.b16 %v1087, %v1086
        %v1101 = vpack.c.b16 %v1089, %v1088
        %v1102 = vpack.c.b16 %v1091, %v1090
        %v1103 = vpack.c.b16 %v1093, %v1092
        %v1104 = vpack.c.b16 %v1095, %v1094
        %v1105 = vpack.c.b16 %v1097, %v1096
        %1114 = vmatpush.bf16.msra.mxu0 %v1105
        %1115 = vmatpush.bf16.msra.mxu0 %v1104
        %1116 = vmatpush.bf16.msra.mxu0 %v1103
        %1117 = vmatpush.bf16.msra.mxu0 %v1102
        %1118 = vmatpush.bf16.msra.mxu0 %v1101
        %1119 = vmatpush.bf16.msra.mxu0 %v1100
        %1120 = vmatpush.bf16.msra.mxu0 %v1099
        %1121 = vmatpush.bf16.msra.mxu0 %v1098
        %1122 = vmatmul.bf16.gmra.mxu0 %v1046
        %v1123 = vpop.f32.mrf.mxu0
        %v1124 = vadd.f32 0.0, %v1123
        %v1125 = vpop.f32.mrf.mxu0
        %v1126 = vadd.f32 0.0, %v1125
        %1127 = vmatmul.bf16.gmra.mxu0 %v1047
        %v1128 = vpop.f32.mrf.mxu0
        %v1129 = vadd.f32 0.0, %v1128
        %v1130 = vpop.f32.mrf.mxu0
        %v1131 = vadd.f32 0.0, %v1130
        %1132 = vmatmul.bf16.gmra.mxu0 %v1048
        %v1133 = vpop.f32.mrf.mxu0
        %v1134 = vadd.f32 0.0, %v1133
        %v1135 = vpop.f32.mrf.mxu0
        %v1136 = vadd.f32 0.0, %v1135
        %1137 = vmatmul.bf16.gmra.mxu0 %v1049
        %v1138 = vpop.f32.mrf.mxu0
        %v1139 = vadd.f32 0.0, %v1138
        %v1140 = vpop.f32.mrf.mxu0
        %v1141 = vadd.f32 0.0, %v1140
        %1142 = vmatmul.bf16.gmra.mxu0 %v1050
        %v1143 = vpop.f32.mrf.mxu0
        %v1144 = vadd.f32 0.0, %v1143
        %v1145 = vpop.f32.mrf.mxu0
        %v1146 = vadd.f32 0.0, %v1145
        %1147 = vmatmul.bf16.gmra.mxu0 %v1051
        %v1148 = vpop.f32.mrf.mxu0
        %v1149 = vadd.f32 0.0, %v1148
        %v1150 = vpop.f32.mrf.mxu0
        %v1151 = vadd.f32 0.0, %v1150
        %1152 = vmatmul.bf16.gmra.mxu0 %v1052
        %v1153 = vpop.f32.mrf.mxu0
        %v1154 = vadd.f32 0.0, %v1153
        %v1155 = vpop.f32.mrf.mxu0
        %v1156 = vadd.f32 0.0, %v1155
        %1157 = vmatmul.bf16.gmra.mxu0 %v1053
        %v1158 = vpop.f32.mrf.mxu0
        %v1159 = vadd.f32 0.0, %v1158
        %v1160 = vpop.f32.mrf.mxu0
        %v1161 = vadd.f32 0.0, %v1160
        %1162 = vmatmul.bf16.gmra.mxu0 %v1054
        %v1163 = vpop.f32.mrf.mxu0
        %v1164 = vadd.f32 0.0, %v1163
        %v1165 = vpop.f32.mrf.mxu0
        %v1166 = vadd.f32 0.0, %v1165
        %1167 = vmatmul.bf16.gmra.mxu0 %v1055
        %v1168 = vpop.f32.mrf.mxu0
        %v1169 = vadd.f32 0.0, %v1168
        %v1170 = vpop.f32.mrf.mxu0
        %v1171 = vadd.f32 0.0, %v1170
        %1172 = vdwg.mxu0
        %v1173 = vadd.f32 %v877, %v1124
        %v1174 = vadd.f32 %v879, %v1126
        %v1175 = vadd.f32 %v882, %v1129
        %v1176 = vadd.f32 %v884, %v1131
        %v1177 = vadd.f32 %v887, %v1134
        %v1178 = vadd.f32 %v889, %v1136
        %v1179 = vadd.f32 %v892, %v1139
        %v1180 = vadd.f32 %v894, %v1141
        %v1181 = vadd.f32 %v897, %v1144
        %v1182 = vadd.f32 %v899, %v1146
        %v1183 = vadd.f32 %v902, %v1149
        %v1184 = vadd.f32 %v904, %v1151
        %v1185 = vadd.f32 %v907, %v1154
        %v1186 = vadd.f32 %v909, %v1156
        %v1187 = vadd.f32 %v912, %v1159
        %v1188 = vadd.f32 %v914, %v1161
        %v1189 = vadd.f32 %v917, %v1164
        %v1190 = vadd.f32 %v919, %v1166
        %v1191 = vadd.f32 %v922, %v1169
        %v1192 = vadd.f32 %v924, %v1171
        %s1193 = scalar_lea.vmem %s1, 192
        %v1194 = vld [vmem:[%s1193] sm:$0xf]
        %v1195 = vld [vmem:[%s1193 + $0x4] sm:$0xf]
        %v1196 = vld [vmem:[%s1193 + $0x8] sm:$0xf]
        %v1197 = vld [vmem:[%s1193 + $0xc] sm:$0xf]
        %v1198 = vld [vmem:[%s1193 + $0x10] sm:$0xf]
        %v1199 = vld [vmem:[%s1193 + $0x14] sm:$0xf]
        %v1200 = vld [vmem:[%s1193 + $0x18] sm:$0xf]
        %v1201 = vld [vmem:[%s1193 + $0x1c] sm:$0xf]
        %v1202 = vld [vmem:[%s1193 + $0x20] sm:$0xf]
        %v1203 = vld [vmem:[%s1193 + $0x24] sm:$0xf]
        %v1204 = vld [vmem:[%s1193 + $0x28] sm:$0xf]
        %v1205 = vld [vmem:[%s1193 + $0x2c] sm:$0xf]
        %v1206 = vld [vmem:[%s1193 + $0x30] sm:$0xf]
        %v1207 = vld [vmem:[%s1193 + $0x34] sm:$0xf]
        %v1208 = vld [vmem:[%s1193 + $0x38] sm:$0xf]
        %v1209 = vld [vmem:[%s1193 + $0x3c] sm:$0xf]
        %v1212 = vunpack.c.l.b16 %v330
        %v1213 = vunpack.c.l.b16 %v331
        %v1214 = vpack.c.b16 %v1213, %v1212
        %v1232 = vunpack.c.l.b16 %v1194
        %v1233 = vunpack.c.l.b16 %v1195
        %v1234 = vunpack.c.l.b16 %v1196
        %v1235 = vunpack.c.l.b16 %v1197
        %v1236 = vunpack.c.l.b16 %v1198
        %v1237 = vunpack.c.l.b16 %v1199
        %v1238 = vunpack.c.l.b16 %v1200
        %v1239 = vunpack.c.l.b16 %v1201
        %v1240 = vunpack.c.l.b16 %v1202
        %v1241 = vunpack.c.l.b16 %v1203
        %v1242 = vunpack.c.l.b16 %v1204
        %v1243 = vunpack.c.l.b16 %v1205
        %v1244 = vunpack.c.l.b16 %v1206
        %v1245 = vunpack.c.l.b16 %v1207
        %v1246 = vunpack.c.l.b16 %v1208
        %v1247 = vunpack.c.l.b16 %v1209
        %v1248 = vpack.c.b16 %v1233, %v1232
        %v1249 = vpack.c.b16 %v1235, %v1234
        %v1250 = vpack.c.b16 %v1237, %v1236
        %v1251 = vpack.c.b16 %v1239, %v1238
        %v1252 = vpack.c.b16 %v1241, %v1240
        %v1253 = vpack.c.b16 %v1243, %v1242
        %v1254 = vpack.c.b16 %v1245, %v1244
        %v1255 = vpack.c.b16 %v1247, %v1246
        %1264 = vmatpush.bf16.msra.mxu0 %v1255
        %1265 = vmatpush.bf16.msra.mxu0 %v1254
        %1266 = vmatpush.bf16.msra.mxu0 %v1253
        %1267 = vmatpush.bf16.msra.mxu0 %v1252
        %1268 = vmatpush.bf16.msra.mxu0 %v1251
        %1269 = vmatpush.bf16.msra.mxu0 %v1250
        %1270 = vmatpush.bf16.msra.mxu0 %v1249
        %1271 = vmatpush.bf16.msra.mxu0 %v1248
        %1272 = vmatmul.bf16.gmra.mxu0 %v800
        %v1273 = vpop.f32.mrf.mxu0
        %v1274 = vadd.f32 0.0, %v1273
        %v1275 = vpop.f32.mrf.mxu0
        %v1276 = vadd.f32 0.0, %v1275
        %1277 = vmatmul.bf16.gmra.mxu0 %v801
        %v1278 = vpop.f32.mrf.mxu0
        %v1279 = vadd.f32 0.0, %v1278
        %v1280 = vpop.f32.mrf.mxu0
        %v1281 = vadd.f32 0.0, %v1280
        %1282 = vmatmul.bf16.gmra.mxu0 %v802
        %v1283 = vpop.f32.mrf.mxu0
        %v1284 = vadd.f32 0.0, %v1283
        %v1285 = vpop.f32.mrf.mxu0
        %v1286 = vadd.f32 0.0, %v1285
        %1287 = vmatmul.bf16.gmra.mxu0 %v803
        %v1288 = vpop.f32.mrf.mxu0
        %v1289 = vadd.f32 0.0, %v1288
        %v1290 = vpop.f32.mrf.mxu0
        %v1291 = vadd.f32 0.0, %v1290
        %1292 = vmatmul.bf16.gmra.mxu0 %v804
        %v1293 = vpop.f32.mrf.mxu0
        %v1294 = vadd.f32 0.0, %v1293
        %v1295 = vpop.f32.mrf.mxu0
        %v1296 = vadd.f32 0.0, %v1295
        %1297 = vmatmul.bf16.gmra.mxu0 %v805
        %v1298 = vpop.f32.mrf.mxu0
        %v1299 = vadd.f32 0.0, %v1298
        %v1300 = vpop.f32.mrf.mxu0
        %v1301 = vadd.f32 0.0, %v1300
        %1302 = vmatmul.bf16.gmra.mxu0 %v806
        %v1303 = vpop.f32.mrf.mxu0
        %v1304 = vadd.f32 0.0, %v1303
        %v1305 = vpop.f32.mrf.mxu0
        %v1306 = vadd.f32 0.0, %v1305
        %1307 = vmatmul.bf16.gmra.mxu0 %v807
        %v1308 = vpop.f32.mrf.mxu0
        %v1309 = vadd.f32 0.0, %v1308
        %v1310 = vpop.f32.mrf.mxu0
        %v1311 = vadd.f32 0.0, %v1310
        %1312 = vmatmul.bf16.gmra.mxu0 %v808
        %v1313 = vpop.f32.mrf.mxu0
        %v1314 = vadd.f32 0.0, %v1313
        %v1315 = vpop.f32.mrf.mxu0
        %v1316 = vadd.f32 0.0, %v1315
        %1317 = vmatmul.bf16.gmra.mxu0 %v1214
        %v1318 = vpop.f32.mrf.mxu0
        %v1319 = vadd.f32 0.0, %v1318
        %v1320 = vpop.f32.mrf.mxu0
        %v1321 = vadd.f32 0.0, %v1320
        %1322 = vdwg.mxu0
        %v1323 = vadd.f32 %v1173, %v1274
        %v1324 = vadd.f32 %v1174, %v1276
        %v1325 = vadd.f32 %v1175, %v1279
        %v1326 = vadd.f32 %v1176, %v1281
        %v1327 = vadd.f32 %v1177, %v1284
        %v1328 = vadd.f32 %v1178, %v1286
        %v1329 = vadd.f32 %v1179, %v1289
        %v1330 = vadd.f32 %v1180, %v1291
        %v1331 = vadd.f32 %v1181, %v1294
        %v1332 = vadd.f32 %v1182, %v1296
        %v1333 = vadd.f32 %v1183, %v1299
        %v1334 = vadd.f32 %v1184, %v1301
        %v1335 = vadd.f32 %v1185, %v1304
        %v1336 = vadd.f32 %v1186, %v1306
        %v1337 = vadd.f32 %v1187, %v1309
        %v1338 = vadd.f32 %v1188, %v1311
        %v1339 = vadd.f32 %v1189, %v1314
        %v1340 = vadd.f32 %v1190, %v1316
        %v1341 = vadd.f32 %v1191, %v1319
        %v1342 = vadd.f32 %v1192, %v1321
        %v1344 = vshrl.u32 %v330, 16
        %v1346 = vrot.slane %v1344, 4
        %v1347 = vshll.u32 %v330, 16
        %v1349 = vrot.slane %v1347, 5
        %v1350 = vor.u32 %v1346, %v1349
        %v1351 = vrot.slane %v1350, 4
        %v1353 = vshll.u32 %v331, 16
        %v1355 = vrot.slane %v1353, 5
        %v1356 = vsel %vm354, %v1351, %v1355
        %v1357 = vshrl.u32 %v331, 16
        %v1359 = vrot.slane %v1357, 4
        %v1360 = vor.u32 %v1359, %v1355
        %v1361 = vrot.slane %v1360, 4
        %v1363 = vshll.u32 %v332, 16
        %v1365 = vrot.slane %v1363, 5
        %v1366 = vsel %vm354, %v1361, %v1365
        %s1367 = scalar_lea.vmem %s1, 256
        %v1368 = vld [vmem:[%s1367] sm:$0xf]
        %v1369 = vld [vmem:[%s1367 + $0x4] sm:$0xf]
        %v1370 = vld [vmem:[%s1367 + $0x8] sm:$0xf]
        %v1371 = vld [vmem:[%s1367 + $0xc] sm:$0xf]
        %v1372 = vld [vmem:[%s1367 + $0x10] sm:$0xf]
        %v1373 = vld [vmem:[%s1367 + $0x14] sm:$0xf]
        %v1374 = vld [vmem:[%s1367 + $0x18] sm:$0xf]
        %v1375 = vld [vmem:[%s1367 + $0x1c] sm:$0xf]
        %v1376 = vld [vmem:[%s1367 + $0x20] sm:$0xf]
        %v1377 = vld [vmem:[%s1367 + $0x24] sm:$0xf]
        %v1378 = vld [vmem:[%s1367 + $0x28] sm:$0xf]
        %v1379 = vld [vmem:[%s1367 + $0x2c] sm:$0xf]
        %v1380 = vld [vmem:[%s1367 + $0x30] sm:$0xf]
        %v1381 = vld [vmem:[%s1367 + $0x34] sm:$0xf]
        %v1382 = vld [vmem:[%s1367 + $0x38] sm:$0xf]
        %v1383 = vld [vmem:[%s1367 + $0x3c] sm:$0xf]
        %v1384 = vunpack.c.l.b16 %v1356
        %v1385 = vunpack.c.l.b16 %v1366
        %v1386 = vpack.c.b16 %v1385, %v1384
        %v1404 = vunpack.c.l.b16 %v1368
        %v1405 = vunpack.c.l.b16 %v1369
        %v1406 = vunpack.c.l.b16 %v1370
        %v1407 = vunpack.c.l.b16 %v1371
        %v1408 = vunpack.c.l.b16 %v1372
        %v1409 = vunpack.c.l.b16 %v1373
        %v1410 = vunpack.c.l.b16 %v1374
        %v1411 = vunpack.c.l.b16 %v1375
        %v1412 = vunpack.c.l.b16 %v1376
        %v1413 = vunpack.c.l.b16 %v1377
        %v1414 = vunpack.c.l.b16 %v1378
        %v1415 = vunpack.c.l.b16 %v1379
        %v1416 = vunpack.c.l.b16 %v1380
        %v1417 = vunpack.c.l.b16 %v1381
        %v1418 = vunpack.c.l.b16 %v1382
        %v1419 = vunpack.c.l.b16 %v1383
        %v1420 = vpack.c.b16 %v1405, %v1404
        %v1421 = vpack.c.b16 %v1407, %v1406
        %v1422 = vpack.c.b16 %v1409, %v1408
        %v1423 = vpack.c.b16 %v1411, %v1410
        %v1424 = vpack.c.b16 %v1413, %v1412
        %v1425 = vpack.c.b16 %v1415, %v1414
        %v1426 = vpack.c.b16 %v1417, %v1416
        %v1427 = vpack.c.b16 %v1419, %v1418
        %1436 = vmatpush.bf16.msra.mxu0 %v1427
        %1437 = vmatpush.bf16.msra.mxu0 %v1426
        %1438 = vmatpush.bf16.msra.mxu0 %v1425
        %1439 = vmatpush.bf16.msra.mxu0 %v1424
        %1440 = vmatpush.bf16.msra.mxu0 %v1423
        %1441 = vmatpush.bf16.msra.mxu0 %v1422
        %1442 = vmatpush.bf16.msra.mxu0 %v1421
        %1443 = vmatpush.bf16.msra.mxu0 %v1420
        %1444 = vmatmul.bf16.gmra.mxu0 %v633
        %v1445 = vpop.f32.mrf.mxu0
        %v1446 = vadd.f32 0.0, %v1445
        %v1447 = vpop.f32.mrf.mxu0
        %v1448 = vadd.f32 0.0, %v1447
        %1449 = vmatmul.bf16.gmra.mxu0 %v634
        %v1450 = vpop.f32.mrf.mxu0
        %v1451 = vadd.f32 0.0, %v1450
        %v1452 = vpop.f32.mrf.mxu0
        %v1453 = vadd.f32 0.0, %v1452
        %1454 = vmatmul.bf16.gmra.mxu0 %v635
        %v1455 = vpop.f32.mrf.mxu0
        %v1456 = vadd.f32 0.0, %v1455
        %v1457 = vpop.f32.mrf.mxu0
        %v1458 = vadd.f32 0.0, %v1457
        %1459 = vmatmul.bf16.gmra.mxu0 %v636
        %v1460 = vpop.f32.mrf.mxu0
        %v1461 = vadd.f32 0.0, %v1460
        %v1462 = vpop.f32.mrf.mxu0
        %v1463 = vadd.f32 0.0, %v1462
        %1464 = vmatmul.bf16.gmra.mxu0 %v637
        %v1465 = vpop.f32.mrf.mxu0
        %v1466 = vadd.f32 0.0, %v1465
        %v1467 = vpop.f32.mrf.mxu0
        %v1468 = vadd.f32 0.0, %v1467
        %1469 = vmatmul.bf16.gmra.mxu0 %v638
        %v1470 = vpop.f32.mrf.mxu0
        %v1471 = vadd.f32 0.0, %v1470
        %v1472 = vpop.f32.mrf.mxu0
        %v1473 = vadd.f32 0.0, %v1472
        %1474 = vmatmul.bf16.gmra.mxu0 %v639
        %v1475 = vpop.f32.mrf.mxu0
        %v1476 = vadd.f32 0.0, %v1475
        %v1477 = vpop.f32.mrf.mxu0
        %v1478 = vadd.f32 0.0, %v1477
        %1479 = vmatmul.bf16.gmra.mxu0 %v640
        %v1480 = vpop.f32.mrf.mxu0
        %v1481 = vadd.f32 0.0, %v1480
        %v1482 = vpop.f32.mrf.mxu0
        %v1483 = vadd.f32 0.0, %v1482
        %1484 = vmatmul.bf16.gmra.mxu0 %v641
        %v1485 = vpop.f32.mrf.mxu0
        %v1486 = vadd.f32 0.0, %v1485
        %v1487 = vpop.f32.mrf.mxu0
        %v1488 = vadd.f32 0.0, %v1487
        %1489 = vmatmul.bf16.gmra.mxu0 %v1386
        %v1490 = vpop.f32.mrf.mxu0
        %v1491 = vadd.f32 0.0, %v1490
        %v1492 = vpop.f32.mrf.mxu0
        %v1493 = vadd.f32 0.0, %v1492
        %1494 = vdwg.mxu0
        %v1495 = vadd.f32 %v1323, %v1446
        %v1496 = vadd.f32 %v1324, %v1448
        %v1497 = vadd.f32 %v1325, %v1451
        %v1498 = vadd.f32 %v1326, %v1453
        %v1499 = vadd.f32 %v1327, %v1456
        %v1500 = vadd.f32 %v1328, %v1458
        %v1501 = vadd.f32 %v1329, %v1461
        %v1502 = vadd.f32 %v1330, %v1463
        %v1503 = vadd.f32 %v1331, %v1466
        %v1504 = vadd.f32 %v1332, %v1468
        %v1505 = vadd.f32 %v1333, %v1471
        %v1506 = vadd.f32 %v1334, %v1473
        %v1507 = vadd.f32 %v1335, %v1476
        %v1508 = vadd.f32 %v1336, %v1478
        %v1509 = vadd.f32 %v1337, %v1481
        %v1510 = vadd.f32 %v1338, %v1483
        %v1511 = vadd.f32 %v1339, %v1486
        %v1512 = vadd.f32 %v1340, %v1488
        %v1513 = vadd.f32 %v1341, %v1491
        %v1514 = vadd.f32 %v1342, %v1493
        %v1516 = vrot.slane %v330, 5
        %v1517 = vrot.slane %v1516, 4
        %v1518 = vrot.slane %v331, 5
        %v1519 = vsel %vm938, %v1517, %v1518
        %v1520 = vrot.slane %v1518, 4
        %v1521 = vrot.slane %v332, 5
        %v1522 = vsel %vm938, %v1520, %v1521
        %s1523 = scalar_lea.vmem %s1, 320
        %v1524 = vld [vmem:[%s1523] sm:$0xf]
        %v1525 = vld [vmem:[%s1523 + $0x4] sm:$0xf]
        %v1526 = vld [vmem:[%s1523 + $0x8] sm:$0xf]
        %v1527 = vld [vmem:[%s1523 + $0xc] sm:$0xf]
        %v1528 = vld [vmem:[%s1523 + $0x10] sm:$0xf]
        %v1529 = vld [vmem:[%s1523 + $0x14] sm:$0xf]
        %v1530 = vld [vmem:[%s1523 + $0x18] sm:$0xf]
        %v1531 = vld [vmem:[%s1523 + $0x1c] sm:$0xf]
        %v1532 = vld [vmem:[%s1523 + $0x20] sm:$0xf]
        %v1533 = vld [vmem:[%s1523 + $0x24] sm:$0xf]
        %v1534 = vld [vmem:[%s1523 + $0x28] sm:$0xf]
        %v1535 = vld [vmem:[%s1523 + $0x2c] sm:$0xf]
        %v1536 = vld [vmem:[%s1523 + $0x30] sm:$0xf]
        %v1537 = vld [vmem:[%s1523 + $0x34] sm:$0xf]
        %v1538 = vld [vmem:[%s1523 + $0x38] sm:$0xf]
        %v1539 = vld [vmem:[%s1523 + $0x3c] sm:$0xf]
        %v1540 = vunpack.c.l.b16 %v1519
        %v1541 = vunpack.c.l.b16 %v1522
        %v1542 = vpack.c.b16 %v1541, %v1540
        %v1560 = vunpack.c.l.b16 %v1524
        %v1561 = vunpack.c.l.b16 %v1525
        %v1562 = vunpack.c.l.b16 %v1526
        %v1563 = vunpack.c.l.b16 %v1527
        %v1564 = vunpack.c.l.b16 %v1528
        %v1565 = vunpack.c.l.b16 %v1529
        %v1566 = vunpack.c.l.b16 %v1530
        %v1567 = vunpack.c.l.b16 %v1531
        %v1568 = vunpack.c.l.b16 %v1532
        %v1569 = vunpack.c.l.b16 %v1533
        %v1570 = vunpack.c.l.b16 %v1534
        %v1571 = vunpack.c.l.b16 %v1535
        %v1572 = vunpack.c.l.b16 %v1536
        %v1573 = vunpack.c.l.b16 %v1537
        %v1574 = vunpack.c.l.b16 %v1538
        %v1575 = vunpack.c.l.b16 %v1539
        %v1576 = vpack.c.b16 %v1561, %v1560
        %v1577 = vpack.c.b16 %v1563, %v1562
        %v1578 = vpack.c.b16 %v1565, %v1564
        %v1579 = vpack.c.b16 %v1567, %v1566
        %v1580 = vpack.c.b16 %v1569, %v1568
        %v1581 = vpack.c.b16 %v1571, %v1570
        %v1582 = vpack.c.b16 %v1573, %v1572
        %v1583 = vpack.c.b16 %v1575, %v1574
        %1592 = vmatpush.bf16.msra.mxu0 %v1583
        %1593 = vmatpush.bf16.msra.mxu0 %v1582
        %1594 = vmatpush.bf16.msra.mxu0 %v1581
        %1595 = vmatpush.bf16.msra.mxu0 %v1580
        %1596 = vmatpush.bf16.msra.mxu0 %v1579
        %1597 = vmatpush.bf16.msra.mxu0 %v1578
        %1598 = vmatpush.bf16.msra.mxu0 %v1577
        %1599 = vmatpush.bf16.msra.mxu0 %v1576
        %1600 = vmatmul.bf16.gmra.mxu0 %v1047
        %v1601 = vpop.f32.mrf.mxu0
        %v1602 = vadd.f32 0.0, %v1601
        %v1603 = vpop.f32.mrf.mxu0
        %v1604 = vadd.f32 0.0, %v1603
        %1605 = vmatmul.bf16.gmra.mxu0 %v1048
        %v1606 = vpop.f32.mrf.mxu0
        %v1607 = vadd.f32 0.0, %v1606
        %v1608 = vpop.f32.mrf.mxu0
        %v1609 = vadd.f32 0.0, %v1608
        %1610 = vmatmul.bf16.gmra.mxu0 %v1049
        %v1611 = vpop.f32.mrf.mxu0
        %v1612 = vadd.f32 0.0, %v1611
        %v1613 = vpop.f32.mrf.mxu0
        %v1614 = vadd.f32 0.0, %v1613
        %1615 = vmatmul.bf16.gmra.mxu0 %v1050
        %v1616 = vpop.f32.mrf.mxu0
        %v1617 = vadd.f32 0.0, %v1616
        %v1618 = vpop.f32.mrf.mxu0
        %v1619 = vadd.f32 0.0, %v1618
        %1620 = vmatmul.bf16.gmra.mxu0 %v1051
        %v1621 = vpop.f32.mrf.mxu0
        %v1622 = vadd.f32 0.0, %v1621
        %v1623 = vpop.f32.mrf.mxu0
        %v1624 = vadd.f32 0.0, %v1623
        %1625 = vmatmul.bf16.gmra.mxu0 %v1052
        %v1626 = vpop.f32.mrf.mxu0
        %v1627 = vadd.f32 0.0, %v1626
        %v1628 = vpop.f32.mrf.mxu0
        %v1629 = vadd.f32 0.0, %v1628
        %1630 = vmatmul.bf16.gmra.mxu0 %v1053
        %v1631 = vpop.f32.mrf.mxu0
        %v1632 = vadd.f32 0.0, %v1631
        %v1633 = vpop.f32.mrf.mxu0
        %v1634 = vadd.f32 0.0, %v1633
        %1635 = vmatmul.bf16.gmra.mxu0 %v1054
        %v1636 = vpop.f32.mrf.mxu0
        %v1637 = vadd.f32 0.0, %v1636
        %v1638 = vpop.f32.mrf.mxu0
        %v1639 = vadd.f32 0.0, %v1638
        %1640 = vmatmul.bf16.gmra.mxu0 %v1055
        %v1641 = vpop.f32.mrf.mxu0
        %v1642 = vadd.f32 0.0, %v1641
        %v1643 = vpop.f32.mrf.mxu0
        %v1644 = vadd.f32 0.0, %v1643
        %1645 = vmatmul.bf16.gmra.mxu0 %v1542
        %v1646 = vpop.f32.mrf.mxu0
        %v1647 = vadd.f32 0.0, %v1646
        %v1648 = vpop.f32.mrf.mxu0
        %v1649 = vadd.f32 0.0, %v1648
        %1650 = vdwg.mxu0
        %v1651 = vadd.f32 %v1495, %v1602
        %v1652 = vadd.f32 %v1496, %v1604
        %v1653 = vadd.f32 %v1497, %v1607
        %v1654 = vadd.f32 %v1498, %v1609
        %v1655 = vadd.f32 %v1499, %v1612
        %v1656 = vadd.f32 %v1500, %v1614
        %v1657 = vadd.f32 %v1501, %v1617
        %v1658 = vadd.f32 %v1502, %v1619
        %v1659 = vadd.f32 %v1503, %v1622
        %v1660 = vadd.f32 %v1504, %v1624
        %v1661 = vadd.f32 %v1505, %v1627
        %v1662 = vadd.f32 %v1506, %v1629
        %v1663 = vadd.f32 %v1507, %v1632
        %v1664 = vadd.f32 %v1508, %v1634
        %v1665 = vadd.f32 %v1509, %v1637
        %v1666 = vadd.f32 %v1510, %v1639
        %v1667 = vadd.f32 %v1511, %v1642
        %v1668 = vadd.f32 %v1512, %v1644
        %v1669 = vadd.f32 %v1513, %v1647
        %v1670 = vadd.f32 %v1514, %v1649
        %s1671 = scalar_lea.vmem %s1, 384
        %v1672 = vld [vmem:[%s1671] sm:$0xf]
        %v1673 = vld [vmem:[%s1671 + $0x4] sm:$0xf]
        %v1674 = vld [vmem:[%s1671 + $0x8] sm:$0xf]
        %v1675 = vld [vmem:[%s1671 + $0xc] sm:$0xf]
        %v1676 = vld [vmem:[%s1671 + $0x10] sm:$0xf]
        %v1677 = vld [vmem:[%s1671 + $0x14] sm:$0xf]
        %v1678 = vld [vmem:[%s1671 + $0x18] sm:$0xf]
        %v1679 = vld [vmem:[%s1671 + $0x1c] sm:$0xf]
        %v1680 = vld [vmem:[%s1671 + $0x20] sm:$0xf]
        %v1681 = vld [vmem:[%s1671 + $0x24] sm:$0xf]
        %v1682 = vld [vmem:[%s1671 + $0x28] sm:$0xf]
        %v1683 = vld [vmem:[%s1671 + $0x2c] sm:$0xf]
        %v1684 = vld [vmem:[%s1671 + $0x30] sm:$0xf]
        %v1685 = vld [vmem:[%s1671 + $0x34] sm:$0xf]
        %v1686 = vld [vmem:[%s1671 + $0x38] sm:$0xf]
        %v1687 = vld [vmem:[%s1671 + $0x3c] sm:$0xf]
        %v1690 = vunpack.c.l.b16 %v333
        %v1691 = vunpack.c.l.b16 %v334
        %v1692 = vpack.c.b16 %v1691, %v1690
        %v1710 = vunpack.c.l.b16 %v1672
        %v1711 = vunpack.c.l.b16 %v1673
        %v1712 = vunpack.c.l.b16 %v1674
        %v1713 = vunpack.c.l.b16 %v1675
        %v1714 = vunpack.c.l.b16 %v1676
        %v1715 = vunpack.c.l.b16 %v1677
        %v1716 = vunpack.c.l.b16 %v1678
        %v1717 = vunpack.c.l.b16 %v1679
        %v1718 = vunpack.c.l.b16 %v1680
        %v1719 = vunpack.c.l.b16 %v1681
        %v1720 = vunpack.c.l.b16 %v1682
        %v1721 = vunpack.c.l.b16 %v1683
        %v1722 = vunpack.c.l.b16 %v1684
        %v1723 = vunpack.c.l.b16 %v1685
        %v1724 = vunpack.c.l.b16 %v1686
        %v1725 = vunpack.c.l.b16 %v1687
        %v1726 = vpack.c.b16 %v1711, %v1710
        %v1727 = vpack.c.b16 %v1713, %v1712
        %v1728 = vpack.c.b16 %v1715, %v1714
        %v1729 = vpack.c.b16 %v1717, %v1716
        %v1730 = vpack.c.b16 %v1719, %v1718
        %v1731 = vpack.c.b16 %v1721, %v1720
        %v1732 = vpack.c.b16 %v1723, %v1722
        %v1733 = vpack.c.b16 %v1725, %v1724
        %1742 = vmatpush.bf16.msra.mxu0 %v1733
        %1743 = vmatpush.bf16.msra.mxu0 %v1732
        %1744 = vmatpush.bf16.msra.mxu0 %v1731
        %1745 = vmatpush.bf16.msra.mxu0 %v1730
        %1746 = vmatpush.bf16.msra.mxu0 %v1729
        %1747 = vmatpush.bf16.msra.mxu0 %v1728
        %1748 = vmatpush.bf16.msra.mxu0 %v1727
        %1749 = vmatpush.bf16.msra.mxu0 %v1726
        %1750 = vmatmul.bf16.gmra.mxu0 %v801
        %v1751 = vpop.f32.mrf.mxu0
        %v1752 = vadd.f32 0.0, %v1751
        %v1753 = vpop.f32.mrf.mxu0
        %v1754 = vadd.f32 0.0, %v1753
        %1755 = vmatmul.bf16.gmra.mxu0 %v802
        %v1756 = vpop.f32.mrf.mxu0
        %v1757 = vadd.f32 0.0, %v1756
        %v1758 = vpop.f32.mrf.mxu0
        %v1759 = vadd.f32 0.0, %v1758
        %1760 = vmatmul.bf16.gmra.mxu0 %v803
        %v1761 = vpop.f32.mrf.mxu0
        %v1762 = vadd.f32 0.0, %v1761
        %v1763 = vpop.f32.mrf.mxu0
        %v1764 = vadd.f32 0.0, %v1763
        %1765 = vmatmul.bf16.gmra.mxu0 %v804
        %v1766 = vpop.f32.mrf.mxu0
        %v1767 = vadd.f32 0.0, %v1766
        %v1768 = vpop.f32.mrf.mxu0
        %v1769 = vadd.f32 0.0, %v1768
        %1770 = vmatmul.bf16.gmra.mxu0 %v805
        %v1771 = vpop.f32.mrf.mxu0
        %v1772 = vadd.f32 0.0, %v1771
        %v1773 = vpop.f32.mrf.mxu0
        %v1774 = vadd.f32 0.0, %v1773
        %1775 = vmatmul.bf16.gmra.mxu0 %v806
        %v1776 = vpop.f32.mrf.mxu0
        %v1777 = vadd.f32 0.0, %v1776
        %v1778 = vpop.f32.mrf.mxu0
        %v1779 = vadd.f32 0.0, %v1778
        %1780 = vmatmul.bf16.gmra.mxu0 %v807
        %v1781 = vpop.f32.mrf.mxu0
        %v1782 = vadd.f32 0.0, %v1781
        %v1783 = vpop.f32.mrf.mxu0
        %v1784 = vadd.f32 0.0, %v1783
        %1785 = vmatmul.bf16.gmra.mxu0 %v808
        %v1786 = vpop.f32.mrf.mxu0
        %v1787 = vadd.f32 0.0, %v1786
        %v1788 = vpop.f32.mrf.mxu0
        %v1789 = vadd.f32 0.0, %v1788
        %1790 = vmatmul.bf16.gmra.mxu0 %v1214
        %v1791 = vpop.f32.mrf.mxu0
        %v1792 = vadd.f32 0.0, %v1791
        %v1793 = vpop.f32.mrf.mxu0
        %v1794 = vadd.f32 0.0, %v1793
        %1795 = vmatmul.bf16.gmra.mxu0 %v1692
        %v1796 = vpop.f32.mrf.mxu0
        %v1797 = vadd.f32 0.0, %v1796
        %v1798 = vpop.f32.mrf.mxu0
        %v1799 = vadd.f32 0.0, %v1798
        %1800 = vdwg.mxu0
        %v1801 = vadd.f32 %v1651, %v1752
        %v1802 = vadd.f32 %v1652, %v1754
        %v1803 = vadd.f32 %v1653, %v1757
        %v1804 = vadd.f32 %v1654, %v1759
        %v1805 = vadd.f32 %v1655, %v1762
        %v1806 = vadd.f32 %v1656, %v1764
        %v1807 = vadd.f32 %v1657, %v1767
        %v1808 = vadd.f32 %v1658, %v1769
        %v1809 = vadd.f32 %v1659, %v1772
        %v1810 = vadd.f32 %v1660, %v1774
        %v1811 = vadd.f32 %v1661, %v1777
        %v1812 = vadd.f32 %v1662, %v1779
        %v1813 = vadd.f32 %v1663, %v1782
        %v1814 = vadd.f32 %v1664, %v1784
        %v1815 = vadd.f32 %v1665, %v1787
        %v1816 = vadd.f32 %v1666, %v1789
        %v1817 = vadd.f32 %v1667, %v1792
        %v1818 = vadd.f32 %v1668, %v1794
        %v1819 = vadd.f32 %v1669, %v1797
        %v1820 = vadd.f32 %v1670, %v1799
        %v1822 = vshrl.u32 %v333, 16
        %v1824 = vrot.slane %v1822, 4
        %v1825 = vshll.u32 %v333, 16
        %v1827 = vrot.slane %v1825, 5
        %v1828 = vor.u32 %v1824, %v1827
        %v1829 = vrot.slane %v1828, 4
        %v1831 = vshll.u32 %v334, 16
        %v1833 = vrot.slane %v1831, 5
        %v1834 = vsel %vm354, %v1829, %v1833
        %v1835 = vshrl.u32 %v334, 16
        %v1837 = vrot.slane %v1835, 4
        %v1838 = vor.u32 %v1837, %v1833
        %v1839 = vrot.slane %v1838, 4
        %v1841 = vshll.u32 %v335, 16
        %v1843 = vrot.slane %v1841, 5
        %v1844 = vsel %vm354, %v1839, %v1843
        %s1845 = scalar_lea.vmem %s1, 448
        %v1846 = vld [vmem:[%s1845] sm:$0xf]
        %v1847 = vld [vmem:[%s1845 + $0x4] sm:$0xf]
        %v1848 = vld [vmem:[%s1845 + $0x8] sm:$0xf]
        %v1849 = vld [vmem:[%s1845 + $0xc] sm:$0xf]
        %v1850 = vld [vmem:[%s1845 + $0x10] sm:$0xf]
        %v1851 = vld [vmem:[%s1845 + $0x14] sm:$0xf]
        %v1852 = vld [vmem:[%s1845 + $0x18] sm:$0xf]
        %v1853 = vld [vmem:[%s1845 + $0x1c] sm:$0xf]
        %v1854 = vld [vmem:[%s1845 + $0x20] sm:$0xf]
        %v1855 = vld [vmem:[%s1845 + $0x24] sm:$0xf]
        %v1856 = vld [vmem:[%s1845 + $0x28] sm:$0xf]
        %v1857 = vld [vmem:[%s1845 + $0x2c] sm:$0xf]
        %v1858 = vld [vmem:[%s1845 + $0x30] sm:$0xf]
        %v1859 = vld [vmem:[%s1845 + $0x34] sm:$0xf]
        %v1860 = vld [vmem:[%s1845 + $0x38] sm:$0xf]
        %v1861 = vld [vmem:[%s1845 + $0x3c] sm:$0xf]
        %v1862 = vunpack.c.l.b16 %v1834
        %v1863 = vunpack.c.l.b16 %v1844
        %v1864 = vpack.c.b16 %v1863, %v1862
        %v1882 = vunpack.c.l.b16 %v1846
        %v1883 = vunpack.c.l.b16 %v1847
        %v1884 = vunpack.c.l.b16 %v1848
        %v1885 = vunpack.c.l.b16 %v1849
        %v1886 = vunpack.c.l.b16 %v1850
        %v1887 = vunpack.c.l.b16 %v1851
        %v1888 = vunpack.c.l.b16 %v1852
        %v1889 = vunpack.c.l.b16 %v1853
        %v1890 = vunpack.c.l.b16 %v1854
        %v1891 = vunpack.c.l.b16 %v1855
        %v1892 = vunpack.c.l.b16 %v1856
        %v1893 = vunpack.c.l.b16 %v1857
        %v1894 = vunpack.c.l.b16 %v1858
        %v1895 = vunpack.c.l.b16 %v1859
        %v1896 = vunpack.c.l.b16 %v1860
        %v1897 = vunpack.c.l.b16 %v1861
        %v1898 = vpack.c.b16 %v1883, %v1882
        %v1899 = vpack.c.b16 %v1885, %v1884
        %v1900 = vpack.c.b16 %v1887, %v1886
        %v1901 = vpack.c.b16 %v1889, %v1888
        %v1902 = vpack.c.b16 %v1891, %v1890
        %v1903 = vpack.c.b16 %v1893, %v1892
        %v1904 = vpack.c.b16 %v1895, %v1894
        %v1905 = vpack.c.b16 %v1897, %v1896
        %1914 = vmatpush.bf16.msra.mxu0 %v1905
        %1915 = vmatpush.bf16.msra.mxu0 %v1904
        %1916 = vmatpush.bf16.msra.mxu0 %v1903
        %1917 = vmatpush.bf16.msra.mxu0 %v1902
        %1918 = vmatpush.bf16.msra.mxu0 %v1901
        %1919 = vmatpush.bf16.msra.mxu0 %v1900
        %1920 = vmatpush.bf16.msra.mxu0 %v1899
        %1921 = vmatpush.bf16.msra.mxu0 %v1898
        %1922 = vmatmul.bf16.gmra.mxu0 %v634
        %v1923 = vpop.f32.mrf.mxu0
        %v1924 = vadd.f32 0.0, %v1923
        %v1925 = vpop.f32.mrf.mxu0
        %v1926 = vadd.f32 0.0, %v1925
        %1927 = vmatmul.bf16.gmra.mxu0 %v635
        %v1928 = vpop.f32.mrf.mxu0
        %v1929 = vadd.f32 0.0, %v1928
        %v1930 = vpop.f32.mrf.mxu0
        %v1931 = vadd.f32 0.0, %v1930
        %1932 = vmatmul.bf16.gmra.mxu0 %v636
        %v1933 = vpop.f32.mrf.mxu0
        %v1934 = vadd.f32 0.0, %v1933
        %v1935 = vpop.f32.mrf.mxu0
        %v1936 = vadd.f32 0.0, %v1935
        %1937 = vmatmul.bf16.gmra.mxu0 %v637
        %v1938 = vpop.f32.mrf.mxu0
        %v1939 = vadd.f32 0.0, %v1938
        %v1940 = vpop.f32.mrf.mxu0
        %v1941 = vadd.f32 0.0, %v1940
        %1942 = vmatmul.bf16.gmra.mxu0 %v638
        %v1943 = vpop.f32.mrf.mxu0
        %v1944 = vadd.f32 0.0, %v1943
        %v1945 = vpop.f32.mrf.mxu0
        %v1946 = vadd.f32 0.0, %v1945
        %1947 = vmatmul.bf16.gmra.mxu0 %v639
        %v1948 = vpop.f32.mrf.mxu0
        %v1949 = vadd.f32 0.0, %v1948
        %v1950 = vpop.f32.mrf.mxu0
        %v1951 = vadd.f32 0.0, %v1950
        %1952 = vmatmul.bf16.gmra.mxu0 %v640
        %v1953 = vpop.f32.mrf.mxu0
        %v1954 = vadd.f32 0.0, %v1953
        %v1955 = vpop.f32.mrf.mxu0
        %v1956 = vadd.f32 0.0, %v1955
        %1957 = vmatmul.bf16.gmra.mxu0 %v641
        %v1958 = vpop.f32.mrf.mxu0
        %v1959 = vadd.f32 0.0, %v1958
        %v1960 = vpop.f32.mrf.mxu0
        %v1961 = vadd.f32 0.0, %v1960
        %1962 = vmatmul.bf16.gmra.mxu0 %v1386
        %v1963 = vpop.f32.mrf.mxu0
        %v1964 = vadd.f32 0.0, %v1963
        %v1965 = vpop.f32.mrf.mxu0
        %v1966 = vadd.f32 0.0, %v1965
        %1967 = vmatmul.bf16.gmra.mxu0 %v1864
        %v1968 = vpop.f32.mrf.mxu0
        %v1969 = vadd.f32 0.0, %v1968
        %v1970 = vpop.f32.mrf.mxu0
        %v1971 = vadd.f32 0.0, %v1970
        %1972 = vdwg.mxu0
        %v1973 = vadd.f32 %v1801, %v1924
        %v1974 = vadd.f32 %v1802, %v1926
        %v1975 = vadd.f32 %v1803, %v1929
        %v1976 = vadd.f32 %v1804, %v1931
        %v1977 = vadd.f32 %v1805, %v1934
        %v1978 = vadd.f32 %v1806, %v1936
        %v1979 = vadd.f32 %v1807, %v1939
        %v1980 = vadd.f32 %v1808, %v1941
        %v1981 = vadd.f32 %v1809, %v1944
        %v1982 = vadd.f32 %v1810, %v1946
        %v1983 = vadd.f32 %v1811, %v1949
        %v1984 = vadd.f32 %v1812, %v1951
        %v1985 = vadd.f32 %v1813, %v1954
        %v1986 = vadd.f32 %v1814, %v1956
        %v1987 = vadd.f32 %v1815, %v1959
        %v1988 = vadd.f32 %v1816, %v1961
        %v1989 = vadd.f32 %v1817, %v1964
        %v1990 = vadd.f32 %v1818, %v1966
        %v1991 = vadd.f32 %v1819, %v1969
        %v1992 = vadd.f32 %v1820, %v1971
        %v1994 = vrot.slane %v333, 5
        %v1995 = vrot.slane %v1994, 4
        %v1996 = vrot.slane %v334, 5
        %v1997 = vsel %vm938, %v1995, %v1996
        %v1998 = vrot.slane %v1996, 4
        %v1999 = vrot.slane %v335, 5
        %v2000 = vsel %vm938, %v1998, %v1999
        %s2001 = scalar_lea.vmem %s1, 512
        %v2002 = vld [vmem:[%s2001] sm:$0xf]
        %v2003 = vld [vmem:[%s2001 + $0x4] sm:$0xf]
        %v2004 = vld [vmem:[%s2001 + $0x8] sm:$0xf]
        %v2005 = vld [vmem:[%s2001 + $0xc] sm:$0xf]
        %v2006 = vld [vmem:[%s2001 + $0x10] sm:$0xf]
        %v2007 = vld [vmem:[%s2001 + $0x14] sm:$0xf]
        %v2008 = vld [vmem:[%s2001 + $0x18] sm:$0xf]
        %v2009 = vld [vmem:[%s2001 + $0x1c] sm:$0xf]
        %v2010 = vld [vmem:[%s2001 + $0x20] sm:$0xf]
        %v2011 = vld [vmem:[%s2001 + $0x24] sm:$0xf]
        %v2012 = vld [vmem:[%s2001 + $0x28] sm:$0xf]
        %v2013 = vld [vmem:[%s2001 + $0x2c] sm:$0xf]
        %v2014 = vld [vmem:[%s2001 + $0x30] sm:$0xf]
        %v2015 = vld [vmem:[%s2001 + $0x34] sm:$0xf]
        %v2016 = vld [vmem:[%s2001 + $0x38] sm:$0xf]
        %v2017 = vld [vmem:[%s2001 + $0x3c] sm:$0xf]
        %v2018 = vunpack.c.l.b16 %v1997
        %v2019 = vunpack.c.l.b16 %v2000
        %v2020 = vpack.c.b16 %v2019, %v2018
        %v2038 = vunpack.c.l.b16 %v2002
        %v2039 = vunpack.c.l.b16 %v2003
        %v2040 = vunpack.c.l.b16 %v2004
        %v2041 = vunpack.c.l.b16 %v2005
        %v2042 = vunpack.c.l.b16 %v2006
        %v2043 = vunpack.c.l.b16 %v2007
        %v2044 = vunpack.c.l.b16 %v2008
        %v2045 = vunpack.c.l.b16 %v2009
        %v2046 = vunpack.c.l.b16 %v2010
        %v2047 = vunpack.c.l.b16 %v2011
        %v2048 = vunpack.c.l.b16 %v2012
        %v2049 = vunpack.c.l.b16 %v2013
        %v2050 = vunpack.c.l.b16 %v2014
        %v2051 = vunpack.c.l.b16 %v2015
        %v2052 = vunpack.c.l.b16 %v2016
        %v2053 = vunpack.c.l.b16 %v2017
        %v2054 = vpack.c.b16 %v2039, %v2038
        %v2055 = vpack.c.b16 %v2041, %v2040
        %v2056 = vpack.c.b16 %v2043, %v2042
        %v2057 = vpack.c.b16 %v2045, %v2044
        %v2058 = vpack.c.b16 %v2047, %v2046
        %v2059 = vpack.c.b16 %v2049, %v2048
        %v2060 = vpack.c.b16 %v2051, %v2050
        %v2061 = vpack.c.b16 %v2053, %v2052
        %2070 = vmatpush.bf16.msra.mxu0 %v2061
        %2071 = vmatpush.bf16.msra.mxu0 %v2060
        %2072 = vmatpush.bf16.msra.mxu0 %v2059
        %2073 = vmatpush.bf16.msra.mxu0 %v2058
        %2074 = vmatpush.bf16.msra.mxu0 %v2057
        %2075 = vmatpush.bf16.msra.mxu0 %v2056
        %2076 = vmatpush.bf16.msra.mxu0 %v2055
        %2077 = vmatpush.bf16.msra.mxu0 %v2054
        %2078 = vmatmul.bf16.gmra.mxu0 %v1048
        %v2079 = vpop.f32.mrf.mxu0
        %v2080 = vadd.f32 0.0, %v2079
        %v2081 = vpop.f32.mrf.mxu0
        %v2082 = vadd.f32 0.0, %v2081
        %2083 = vmatmul.bf16.gmra.mxu0 %v1049
        %v2084 = vpop.f32.mrf.mxu0
        %v2085 = vadd.f32 0.0, %v2084
        %v2086 = vpop.f32.mrf.mxu0
        %v2087 = vadd.f32 0.0, %v2086
        %2088 = vmatmul.bf16.gmra.mxu0 %v1050
        %v2089 = vpop.f32.mrf.mxu0
        %v2090 = vadd.f32 0.0, %v2089
        %v2091 = vpop.f32.mrf.mxu0
        %v2092 = vadd.f32 0.0, %v2091
        %2093 = vmatmul.bf16.gmra.mxu0 %v1051
        %v2094 = vpop.f32.mrf.mxu0
        %v2095 = vadd.f32 0.0, %v2094
        %v2096 = vpop.f32.mrf.mxu0
        %v2097 = vadd.f32 0.0, %v2096
        %2098 = vmatmul.bf16.gmra.mxu0 %v1052
        %v2099 = vpop.f32.mrf.mxu0
        %v2100 = vadd.f32 0.0, %v2099
        %v2101 = vpop.f32.mrf.mxu0
        %v2102 = vadd.f32 0.0, %v2101
        %2103 = vmatmul.bf16.gmra.mxu0 %v1053
        %v2104 = vpop.f32.mrf.mxu0
        %v2105 = vadd.f32 0.0, %v2104
        %v2106 = vpop.f32.mrf.mxu0
        %v2107 = vadd.f32 0.0, %v2106
        %2108 = vmatmul.bf16.gmra.mxu0 %v1054
        %v2109 = vpop.f32.mrf.mxu0
        %v2110 = vadd.f32 0.0, %v2109
        %v2111 = vpop.f32.mrf.mxu0
        %v2112 = vadd.f32 0.0, %v2111
        %2113 = vmatmul.bf16.gmra.mxu0 %v1055
        %v2114 = vpop.f32.mrf.mxu0
        %v2115 = vadd.f32 0.0, %v2114
        %v2116 = vpop.f32.mrf.mxu0
        %v2117 = vadd.f32 0.0, %v2116
        %2118 = vmatmul.bf16.gmra.mxu0 %v1542
        %v2119 = vpop.f32.mrf.mxu0
        %v2120 = vadd.f32 0.0, %v2119
        %v2121 = vpop.f32.mrf.mxu0
        %v2122 = vadd.f32 0.0, %v2121
        %2123 = vmatmul.bf16.gmra.mxu0 %v2020
        %v2124 = vpop.f32.mrf.mxu0
        %v2125 = vadd.f32 0.0, %v2124
        %v2126 = vpop.f32.mrf.mxu0
        %v2127 = vadd.f32 0.0, %v2126
        %2128 = vdwg.mxu0
        %v2129 = vadd.f32 %v1973, %v2080
        %v2130 = vadd.f32 %v1974, %v2082
        %v2131 = vadd.f32 %v1975, %v2085
        %v2132 = vadd.f32 %v1976, %v2087
        %v2133 = vadd.f32 %v1977, %v2090
        %v2134 = vadd.f32 %v1978, %v2092
        %v2135 = vadd.f32 %v1979, %v2095
        %v2136 = vadd.f32 %v1980, %v2097
        %v2137 = vadd.f32 %v1981, %v2100
        %v2138 = vadd.f32 %v1982, %v2102
        %v2139 = vadd.f32 %v1983, %v2105
        %v2140 = vadd.f32 %v1984, %v2107
        %v2141 = vadd.f32 %v1985, %v2110
        %v2142 = vadd.f32 %v1986, %v2112
        %v2143 = vadd.f32 %v1987, %v2115
        %v2144 = vadd.f32 %v1988, %v2117
        %v2145 = vadd.f32 %v1989, %v2120
        %v2146 = vadd.f32 %v1990, %v2122
        %v2147 = vadd.f32 %v1991, %v2125
        %v2148 = vadd.f32 %v1992, %v2127
        %v2149 = vld [vmem:[%s2] sm:$0x1]
        %v2151 = vperm.slane %v2149, 0
        %v2153 = vadd.f32 %v2129, %v2151
        %v2154 = vadd.f32 %v2130, %v2151
        %v2155 = vadd.f32 %v2131, %v2151
        %v2156 = vadd.f32 %v2132, %v2151
        %v2157 = vadd.f32 %v2133, %v2151
        %v2158 = vadd.f32 %v2134, %v2151
        %v2159 = vadd.f32 %v2135, %v2151
        %v2160 = vadd.f32 %v2136, %v2151
        %v2161 = vadd.f32 %v2137, %v2151
        %v2162 = vadd.f32 %v2138, %v2151
        %v2163 = vadd.f32 %v2139, %v2151
        %v2164 = vadd.f32 %v2140, %v2151
        %v2165 = vadd.f32 %v2141, %v2151
        %v2166 = vadd.f32 %v2142, %v2151
        %v2167 = vadd.f32 %v2143, %v2151
        %v2168 = vadd.f32 %v2144, %v2151
        %v2169 = vadd.f32 %v2145, %v2151
        %v2170 = vadd.f32 %v2146, %v2151
        %v2171 = vadd.f32 %v2147, %v2151
        %v2172 = vadd.f32 %v2148, %v2151
        %s2173 = ssub.s32 %s296, 1
        %v2174 = vstv %s2173
        %v2175 = vadd.s32 %v2174, 1
        %v2176 = vadd.s32 %v2174, 2
        %v2177 = vadd.s32 %v2174, 3
        %v2178 = vadd.s32 %v2174, 4
        %v2179 = vadd.s32 %v2174, 5
        %v2180 = vadd.s32 %v2174, 6
        %v2181 = vadd.s32 %v2174, 7
        %v2182 = vadd.s32 %v2174, 8
        %v2183 = vadd.s32 %v2174, 9
        %vm2184 = vcmp.ge.s32.totalorder %v2174, 0
        %vm2185 = vcmp.ge.s32.totalorder %v2175, 0
        %vm2186 = vcmp.ge.s32.totalorder %v2176, 0
        %vm2187 = vcmp.ge.s32.totalorder %v2177, 0
        %vm2188 = vcmp.ge.s32.totalorder %v2178, 0
        %vm2189 = vcmp.ge.s32.totalorder %v2179, 0
        %vm2190 = vcmp.ge.s32.totalorder %v2180, 0
        %vm2191 = vcmp.ge.s32.totalorder %v2181, 0
        %vm2192 = vcmp.ge.s32.totalorder %v2182, 0
        %vm2193 = vcmp.ge.s32.totalorder %v2183, 0
        %vm2194 = vcmp.lt.s32.totalorder %v2174, 16
        %vm2195 = vcmp.lt.s32.totalorder %v2175, 16
        %vm2196 = vcmp.lt.s32.totalorder %v2176, 16
        %vm2197 = vcmp.lt.s32.totalorder %v2177, 16
        %vm2198 = vcmp.lt.s32.totalorder %v2178, 16
        %vm2199 = vcmp.lt.s32.totalorder %v2179, 16
        %vm2200 = vcmp.lt.s32.totalorder %v2180, 16
        %vm2201 = vcmp.lt.s32.totalorder %v2181, 16
        %vm2202 = vcmp.lt.s32.totalorder %v2182, 16
        %vm2203 = vcmp.lt.s32.totalorder %v2183, 16
        %vm2204 = vmand %vm2184, %vm2194
        %vm2205 = vmand %vm2185, %vm2195
        %vm2206 = vmand %vm2186, %vm2196
        %vm2207 = vmand %vm2187, %vm2197
        %vm2208 = vmand %vm2188, %vm2198
        %vm2209 = vmand %vm2189, %vm2199
        %vm2210 = vmand %vm2190, %vm2200
        %vm2211 = vmand %vm2191, %vm2201
        %vm2212 = vmand %vm2192, %vm2202
        %vm2213 = vmand %vm2193, %vm2203
        %v2214 = vsel %vm2204, 1, 0
        %v2215 = vsel %vm2205, 1, 0
        %v2216 = vsel %vm2206, 1, 0
        %v2217 = vsel %vm2207, 1, 0
        %v2218 = vsel %vm2208, 1, 0
        %v2219 = vsel %vm2209, 1, 0
        %v2220 = vsel %vm2210, 1, 0
        %v2221 = vsel %vm2211, 1, 0
        %v2222 = vsel %vm2212, 1, 0
        %v2223 = vsel %vm2213, 1, 0
        %vm2224 = vcmp.eq.s32.totalorder %v2214, 1
        %vm2225 = vcmp.eq.s32.totalorder %v2215, 1
        %vm2226 = vcmp.eq.s32.totalorder %v2216, 1
        %vm2227 = vcmp.eq.s32.totalorder %v2217, 1
        %vm2228 = vcmp.eq.s32.totalorder %v2218, 1
        %vm2229 = vcmp.eq.s32.totalorder %v2219, 1
        %vm2230 = vcmp.eq.s32.totalorder %v2220, 1
        %vm2231 = vcmp.eq.s32.totalorder %v2221, 1
        %vm2232 = vcmp.eq.s32.totalorder %v2222, 1
        %vm2233 = vcmp.eq.s32.totalorder %v2223, 1
        %v2234 = vsel %vm2224, %v2153, 0.0
        %v2235 = vsel %vm2224, %v2154, 0.0
        %v2236 = vsel %vm2225, %v2155, 0.0
        %v2237 = vsel %vm2225, %v2156, 0.0
        %v2238 = vsel %vm2226, %v2157, 0.0
        %v2239 = vsel %vm2226, %v2158, 0.0
        %v2240 = vsel %vm2227, %v2159, 0.0
        %v2241 = vsel %vm2227, %v2160, 0.0
        %v2242 = vsel %vm2228, %v2161, 0.0
        %v2243 = vsel %vm2228, %v2162, 0.0
        %v2244 = vsel %vm2229, %v2163, 0.0
        %v2245 = vsel %vm2229, %v2164, 0.0
        %v2246 = vsel %vm2230, %v2165, 0.0
        %v2247 = vsel %vm2230, %v2166, 0.0
        %v2248 = vsel %vm2231, %v2167, 0.0
        %v2249 = vsel %vm2231, %v2168, 0.0
        %v2250 = vsel %vm2232, %v2169, 0.0
        %v2251 = vsel %vm2232, %v2170, 0.0
        %v2252 = vsel %vm2233, %v2171, 0.0
        %v2253 = vsel %vm2233, %v2172, 0.0
        %v2254 = vpack.c.bf16 %v2234, %v2234
        %v2255 = vpack.c.bf16 %v2235, %v2235
        %v2256 = vpack.c.bf16 %v2236, %v2236
        %v2257 = vpack.c.bf16 %v2237, %v2237
        %v2258 = vpack.c.bf16 %v2238, %v2238
        %v2259 = vpack.c.bf16 %v2239, %v2239
        %v2260 = vpack.c.bf16 %v2240, %v2240
        %v2261 = vpack.c.bf16 %v2241, %v2241
        %v2262 = vpack.c.bf16 %v2242, %v2242
        %v2263 = vpack.c.bf16 %v2243, %v2243
        %v2264 = vpack.c.bf16 %v2244, %v2244
        %v2265 = vpack.c.bf16 %v2245, %v2245
        %v2266 = vpack.c.bf16 %v2246, %v2246
        %v2267 = vpack.c.bf16 %v2247, %v2247
        %v2268 = vpack.c.bf16 %v2248, %v2248
        %v2269 = vpack.c.bf16 %v2249, %v2249
        %v2270 = vpack.c.bf16 %v2250, %v2250
        %v2271 = vpack.c.bf16 %v2251, %v2251
        %v2272 = vpack.c.bf16 %v2252, %v2252
        %v2273 = vpack.c.bf16 %v2253, %v2253
        %vm2274 = vsmask.f32 256
        %vm2275 = vsmask.f32 4368
        %vm2276 = vmor %vm2274, %vm2275
        %v2278 = vshrl.u32 %v2254, 16
        %v2280 = vrot.slane %v2278, 7
        %v2281 = vshll.u32 %v2254, 16
        %v2283 = vor.u32 %v2280, %v2281
        %v2284 = vrot.slane %v2280, 4
        %v2286 = vshrl.u32 %v2255, 16
        %v2288 = vrot.slane %v2286, 7
        %v2289 = vshll.u32 %v2255, 16
        %v2291 = vor.u32 %v2288, %v2289
        %v2292 = vsel %vm2276, %v2284, %v2291
        %v2293 = vrot.slane %v2288, 4
        %v2295 = vshrl.u32 %v2256, 16
        %v2297 = vrot.slane %v2295, 7
        %v2298 = vshll.u32 %v2256, 16
        %v2300 = vor.u32 %v2297, %v2298
        %v2301 = vrot.slane %v2297, 4
        %v2303 = vshrl.u32 %v2257, 16
        %v2305 = vrot.slane %v2303, 7
        %v2306 = vshll.u32 %v2257, 16
        %v2308 = vor.u32 %v2305, %v2306
        %v2309 = vsel %vm2276, %v2301, %v2308
        %v2310 = vrot.slane %v2305, 4
        %v2312 = vshrl.u32 %v2258, 16
        %v2314 = vrot.slane %v2312, 7
        %v2315 = vshll.u32 %v2258, 16
        %v2317 = vor.u32 %v2314, %v2315
        %v2318 = vrot.slane %v2314, 4
        %v2320 = vshrl.u32 %v2259, 16
        %v2322 = vrot.slane %v2320, 7
        %v2323 = vshll.u32 %v2259, 16
        %v2325 = vor.u32 %v2322, %v2323
        %v2326 = vsel %vm2276, %v2318, %v2325
        %v2327 = vrot.slane %v2322, 4
        %v2329 = vshrl.u32 %v2260, 16
        %v2331 = vrot.slane %v2329, 7
        %v2332 = vshll.u32 %v2260, 16
        %v2334 = vor.u32 %v2331, %v2332
        %v2335 = vrot.slane %v2331, 4
        %v2337 = vshrl.u32 %v2261, 16
        %v2339 = vrot.slane %v2337, 7
        %v2340 = vshll.u32 %v2261, 16
        %v2342 = vor.u32 %v2339, %v2340
        %v2343 = vsel %vm2276, %v2335, %v2342
        %v2344 = vrot.slane %v2339, 4
        %v2346 = vshrl.u32 %v2262, 16
        %v2348 = vrot.slane %v2346, 7
        %v2349 = vshll.u32 %v2262, 16
        %v2351 = vor.u32 %v2348, %v2349
        %v2352 = vrot.slane %v2348, 4
        %v2354 = vshrl.u32 %v2263, 16
        %v2356 = vrot.slane %v2354, 7
        %v2357 = vshll.u32 %v2263, 16
        %v2359 = vor.u32 %v2356, %v2357
        %v2360 = vsel %vm2276, %v2352, %v2359
        %v2361 = vrot.slane %v2356, 4
        %v2363 = vshrl.u32 %v2264, 16
        %v2365 = vrot.slane %v2363, 7
        %v2366 = vshll.u32 %v2264, 16
        %v2368 = vor.u32 %v2365, %v2366
        %v2369 = vrot.slane %v2365, 4
        %v2371 = vshrl.u32 %v2265, 16
        %v2373 = vrot.slane %v2371, 7
        %v2374 = vshll.u32 %v2265, 16
        %v2376 = vor.u32 %v2373, %v2374
        %v2377 = vsel %vm2276, %v2369, %v2376
        %v2378 = vrot.slane %v2373, 4
        %v2380 = vshrl.u32 %v2266, 16
        %v2382 = vrot.slane %v2380, 7
        %v2383 = vshll.u32 %v2266, 16
        %v2385 = vor.u32 %v2382, %v2383
        %v2386 = vrot.slane %v2382, 4
        %v2388 = vshrl.u32 %v2267, 16
        %v2390 = vrot.slane %v2388, 7
        %v2391 = vshll.u32 %v2267, 16
        %v2393 = vor.u32 %v2390, %v2391
        %v2394 = vsel %vm2276, %v2386, %v2393
        %v2395 = vrot.slane %v2390, 4
        %v2397 = vshrl.u32 %v2268, 16
        %v2399 = vrot.slane %v2397, 7
        %v2400 = vshll.u32 %v2268, 16
        %v2402 = vor.u32 %v2399, %v2400
        %v2403 = vrot.slane %v2399, 4
        %v2405 = vshrl.u32 %v2269, 16
        %v2407 = vrot.slane %v2405, 7
        %v2408 = vshll.u32 %v2269, 16
        %v2410 = vor.u32 %v2407, %v2408
        %v2411 = vsel %vm2276, %v2403, %v2410
        %v2412 = vrot.slane %v2407, 4
        %v2414 = vshrl.u32 %v2270, 16
        %v2416 = vrot.slane %v2414, 7
        %v2417 = vshll.u32 %v2270, 16
        %v2419 = vor.u32 %v2416, %v2417
        %v2420 = vrot.slane %v2416, 4
        %v2422 = vshrl.u32 %v2271, 16
        %v2424 = vrot.slane %v2422, 7
        %v2425 = vshll.u32 %v2271, 16
        %v2427 = vor.u32 %v2424, %v2425
        %v2428 = vsel %vm2276, %v2420, %v2427
        %v2429 = vrot.slane %v2424, 4
        %v2431 = vshrl.u32 %v2272, 16
        %v2433 = vrot.slane %v2431, 7
        %v2434 = vshll.u32 %v2272, 16
        %v2436 = vor.u32 %v2433, %v2434
        %v2437 = vrot.slane %v2433, 4
        %v2439 = vshrl.u32 %v2273, 16
        %v2441 = vrot.slane %v2439, 7
        %v2442 = vshll.u32 %v2273, 16
        %v2444 = vor.u32 %v2441, %v2442
        %v2445 = vsel %vm2276, %v2437, %v2444
        %v2446 = vrot.slane %v2441, 4
        %vm2477 = vcmask 1043456
        %vm2478 = vsmask.f32 7938
        %vm2479 = vmand %vm2477, %vm2478
        %v2480 = vld [vmem:[#allocation2] sm:$0xf]
        %v2481 = vsel %vm2479, %v2283, %v2480
        %2482 = vst [vmem:[#allocation2] sm:$0xf] %v2481
        %2483 = vst [vmem:[#allocation2 + $0x4] sm:$0xf] %v2292
        %vm2484 = vcmask 1040384
        %vm2485 = vmand %vm2484, %vm2274
        %v2486 = vld [vmem:[#allocation2 + $0x8] sm:$0x1]
        %v2487 = vsel %vm2485, %v2293, %v2486
        %2488 = vst [vmem:[#allocation2 + $0x8] sm:$0x1] %v2487
        %v2489 = vld [vmem:[#allocation2 + $0xc] sm:$0xf]
        %v2490 = vsel %vm2479, %v2300, %v2489
        %2491 = vst [vmem:[#allocation2 + $0xc] sm:$0xf] %v2490
        %2492 = vst [vmem:[#allocation2 + $0x10] sm:$0xf] %v2309
        %v2493 = vld [vmem:[#allocation2 + $0x14] sm:$0x1]
        %v2494 = vsel %vm2485, %v2310, %v2493
        %2495 = vst [vmem:[#allocation2 + $0x14] sm:$0x1] %v2494
        %v2496 = vld [vmem:[#allocation2 + $0x18] sm:$0xf]
        %v2497 = vsel %vm2479, %v2317, %v2496
        %2498 = vst [vmem:[#allocation2 + $0x18] sm:$0xf] %v2497
        %2499 = vst [vmem:[#allocation2 + $0x1c] sm:$0xf] %v2326
        %v2500 = vld [vmem:[#allocation2 + $0x20] sm:$0x1]
        %v2501 = vsel %vm2485, %v2327, %v2500
        %2502 = vst [vmem:[#allocation2 + $0x20] sm:$0x1] %v2501
        %v2503 = vld [vmem:[#allocation2 + $0x24] sm:$0xf]
        %v2504 = vsel %vm2479, %v2334, %v2503
        %2505 = vst [vmem:[#allocation2 + $0x24] sm:$0xf] %v2504
        %2506 = vst [vmem:[#allocation2 + $0x28] sm:$0xf] %v2343
        %v2507 = vld [vmem:[#allocation2 + $0x2c] sm:$0x1]
        %v2508 = vsel %vm2485, %v2344, %v2507
        %2509 = vst [vmem:[#allocation2 + $0x2c] sm:$0x1] %v2508
        %v2510 = vld [vmem:[#allocation2 + $0x30] sm:$0xf]
        %v2511 = vsel %vm2479, %v2351, %v2510
        %2512 = vst [vmem:[#allocation2 + $0x30] sm:$0xf] %v2511
        %2513 = vst [vmem:[#allocation2 + $0x34] sm:$0xf] %v2360
        %v2514 = vld [vmem:[#allocation2 + $0x38] sm:$0x1]
        %v2515 = vsel %vm2485, %v2361, %v2514
        %2516 = vst [vmem:[#allocation2 + $0x38] sm:$0x1] %v2515
        %v2517 = vld [vmem:[#allocation2 + $0x3c] sm:$0xf]
        %v2518 = vsel %vm2479, %v2368, %v2517
        %2519 = vst [vmem:[#allocation2 + $0x3c] sm:$0xf] %v2518
        %2520 = vst [vmem:[#allocation2 + $0x40] sm:$0xf] %v2377
        %v2521 = vld [vmem:[#allocation2 + $0x44] sm:$0x1]
        %v2522 = vsel %vm2485, %v2378, %v2521
        %2523 = vst [vmem:[#allocation2 + $0x44] sm:$0x1] %v2522
        %v2524 = vld [vmem:[#allocation2 + $0x48] sm:$0xf]
        %v2525 = vsel %vm2479, %v2385, %v2524
        %2526 = vst [vmem:[#allocation2 + $0x48] sm:$0xf] %v2525
        %2527 = vst [vmem:[#allocation2 + $0x4c] sm:$0xf] %v2394
        %v2528 = vld [vmem:[#allocation2 + $0x50] sm:$0x1]
        %v2529 = vsel %vm2485, %v2395, %v2528
        %2530 = vst [vmem:[#allocation2 + $0x50] sm:$0x1] %v2529
        %v2531 = vld [vmem:[#allocation2 + $0x54] sm:$0xf]
        %v2532 = vsel %vm2479, %v2402, %v2531
        %2533 = vst [vmem:[#allocation2 + $0x54] sm:$0xf] %v2532
        %2534 = vst [vmem:[#allocation2 + $0x58] sm:$0xf] %v2411
        %v2535 = vld [vmem:[#allocation2 + $0x5c] sm:$0x1]
        %v2536 = vsel %vm2485, %v2412, %v2535
        %2537 = vst [vmem:[#allocation2 + $0x5c] sm:$0x1] %v2536
        %v2538 = vld [vmem:[#allocation2 + $0x60] sm:$0xf]
        %v2539 = vsel %vm2479, %v2419, %v2538
        %2540 = vst [vmem:[#allocation2 + $0x60] sm:$0xf] %v2539
        %2541 = vst [vmem:[#allocation2 + $0x64] sm:$0xf] %v2428
        %v2542 = vld [vmem:[#allocation2 + $0x68] sm:$0x1]
        %v2543 = vsel %vm2485, %v2429, %v2542
        %2544 = vst [vmem:[#allocation2 + $0x68] sm:$0x1] %v2543
        %v2545 = vld [vmem:[#allocation2 + $0x6c] sm:$0xf]
        %v2546 = vsel %vm2479, %v2436, %v2545
        %2547 = vst [vmem:[#allocation2 + $0x6c] sm:$0xf] %v2546
        %2548 = vst [vmem:[#allocation2 + $0x70] sm:$0xf] %v2445
        %v2549 = vld [vmem:[#allocation2 + $0x74] sm:$0x1]
        %v2550 = vsel %vm2485, %v2446, %v2549
        %2551 = vst [vmem:[#allocation2 + $0x74] sm:$0x1] %v2550
        %v2552 = vld [vmem:[#allocation2] sm:$0x1]
        %v2553 = vsel %vm2485, 0, %v2552
        %2554 = vst [vmem:[#allocation2] sm:$0x1] %v2553
        %v2555 = vld [vmem:[#allocation2 + $0xc] sm:$0x1]
        %v2556 = vsel %vm2485, 0, %v2555
        %2557 = vst [vmem:[#allocation2 + $0xc] sm:$0x1] %v2556
        %v2558 = vld [vmem:[#allocation2 + $0x18] sm:$0x1]
        %v2559 = vsel %vm2485, 0, %v2558
        %2560 = vst [vmem:[#allocation2 + $0x18] sm:$0x1] %v2559
        %v2561 = vld [vmem:[#allocation2 + $0x24] sm:$0x1]
        %v2562 = vsel %vm2485, 0, %v2561
        %2563 = vst [vmem:[#allocation2 + $0x24] sm:$0x1] %v2562
        %v2564 = vld [vmem:[#allocation2 + $0x30] sm:$0x1]
        %v2565 = vsel %vm2485, 0, %v2564
        %2566 = vst [vmem:[#allocation2 + $0x30] sm:$0x1] %v2565
        %v2567 = vld [vmem:[#allocation2 + $0x3c] sm:$0x1]
        %v2568 = vsel %vm2485, 0, %v2567
        %2569 = vst [vmem:[#allocation2 + $0x3c] sm:$0x1] %v2568
        %v2570 = vld [vmem:[#allocation2 + $0x48] sm:$0x1]
        %v2571 = vsel %vm2485, 0, %v2570
        %2572 = vst [vmem:[#allocation2 + $0x48] sm:$0x1] %v2571
        %v2573 = vld [vmem:[#allocation2 + $0x54] sm:$0x1]
        %v2574 = vsel %vm2485, 0, %v2573
        %2575 = vst [vmem:[#allocation2 + $0x54] sm:$0x1] %v2574
        %v2576 = vld [vmem:[#allocation2 + $0x60] sm:$0x1]
        %v2577 = vsel %vm2485, 0, %v2576
        %2578 = vst [vmem:[#allocation2 + $0x60] sm:$0x1] %v2577
        %v2579 = vld [vmem:[#allocation2 + $0x6c] sm:$0x1]
        %v2580 = vsel %vm2485, 0, %v2579
        %2581 = vst [vmem:[#allocation2 + $0x6c] sm:$0x1] %v2580
        %vm2582 = vmand %vm2484, %vm2478
        %v2583 = vld [vmem:[#allocation2 + $0x8] sm:$0x1]
        %v2584 = vsel %vm2582, 0, %v2583
        %2585 = vst [vmem:[#allocation2 + $0x8] sm:$0x1] %v2584
        %v2586 = vld [vmem:[#allocation2 + $0x14] sm:$0x1]
        %v2587 = vsel %vm2582, 0, %v2586
        %2588 = vst [vmem:[#allocation2 + $0x14] sm:$0x1] %v2587
        %v2589 = vld [vmem:[#allocation2 + $0x20] sm:$0x1]
        %v2590 = vsel %vm2582, 0, %v2589
        %2591 = vst [vmem:[#allocation2 + $0x20] sm:$0x1] %v2590
        %v2592 = vld [vmem:[#allocation2 + $0x2c] sm:$0x1]
        %v2593 = vsel %vm2582, 0, %v2592
        %2594 = vst [vmem:[#allocation2 + $0x2c] sm:$0x1] %v2593
        %v2595 = vld [vmem:[#allocation2 + $0x38] sm:$0x1]
        %v2596 = vsel %vm2582, 0, %v2595
        %2597 = vst [vmem:[#allocation2 + $0x38] sm:$0x1] %v2596
        %v2598 = vld [vmem:[#allocation2 + $0x44] sm:$0x1]
        %v2599 = vsel %vm2582, 0, %v2598
        %2600 = vst [vmem:[#allocation2 + $0x44] sm:$0x1] %v2599
        %v2601 = vld [vmem:[#allocation2 + $0x50] sm:$0x1]
        %v2602 = vsel %vm2582, 0, %v2601
        %2603 = vst [vmem:[#allocation2 + $0x50] sm:$0x1] %v2602
        %v2604 = vld [vmem:[#allocation2 + $0x5c] sm:$0x1]
        %v2605 = vsel %vm2582, 0, %v2604
        %2606 = vst [vmem:[#allocation2 + $0x5c] sm:$0x1] %v2605
        %v2607 = vld [vmem:[#allocation2 + $0x68] sm:$0x1]
        %v2608 = vsel %vm2582, 0, %v2607
        %2609 = vst [vmem:[#allocation2 + $0x68] sm:$0x1] %v2608
        %v2610 = vld [vmem:[#allocation2 + $0x74] sm:$0x1]
        %v2611 = vsel %vm2582, 0, %v2610
        %2612 = vst [vmem:[#allocation2 + $0x74] sm:$0x1] %v2611
        %v2613 = vld [vmem:[#allocation2] sm:$0xf]
        %v2614 = vld [vmem:[#allocation2 + $0x4] sm:$0xf]
        %v2615 = vld [vmem:[#allocation2 + $0xc] sm:$0xf]
        %v2616 = vld [vmem:[#allocation2 + $0x10] sm:$0xf]
        %v2617 = vld [vmem:[#allocation2 + $0x18] sm:$0xf]
        %v2618 = vld [vmem:[#allocation2 + $0x1c] sm:$0xf]
        %v2619 = vld [vmem:[#allocation2 + $0x24] sm:$0xf]
        %v2620 = vld [vmem:[#allocation2 + $0x28] sm:$0xf]
        %v2621 = vld [vmem:[#allocation2 + $0x30] sm:$0xf]
        %v2622 = vld [vmem:[#allocation2 + $0x34] sm:$0xf]
        %v2623 = vld [vmem:[#allocation2 + $0x3c] sm:$0xf]
        %v2624 = vld [vmem:[#allocation2 + $0x40] sm:$0xf]
        %v2625 = vld [vmem:[#allocation2 + $0x48] sm:$0xf]
        %v2626 = vld [vmem:[#allocation2 + $0x4c] sm:$0xf]
        %v2627 = vld [vmem:[#allocation2 + $0x54] sm:$0xf]
        %v2628 = vld [vmem:[#allocation2 + $0x58] sm:$0xf]
        %v2629 = vld [vmem:[#allocation3] sm:$0xf]
        %v2630 = vld [vmem:[#allocation3 + $0x4] sm:$0xf]
        %v2631 = vld [vmem:[#allocation3 + $0x8] sm:$0xf]
        %v2632 = vld [vmem:[#allocation3 + $0xc] sm:$0xf]
        %v2633 = vld [vmem:[#allocation3 + $0x10] sm:$0xf]
        %v2634 = vld [vmem:[#allocation3 + $0x14] sm:$0xf]
        %v2635 = vld [vmem:[#allocation3 + $0x18] sm:$0xf]
        %v2636 = vld [vmem:[#allocation3 + $0x1c] sm:$0xf]
        %v2637 = vld [vmem:[#allocation3 + $0x20] sm:$0xf]
        %v2638 = vld [vmem:[#allocation3 + $0x24] sm:$0xf]
        %v2639 = vld [vmem:[#allocation3 + $0x28] sm:$0xf]
        %v2640 = vld [vmem:[#allocation3 + $0x2c] sm:$0xf]
        %v2641 = vld [vmem:[#allocation3 + $0x30] sm:$0xf]
        %v2642 = vld [vmem:[#allocation3 + $0x34] sm:$0xf]
        %v2643 = vld [vmem:[#allocation3 + $0x38] sm:$0xf]
        %v2644 = vld [vmem:[#allocation3 + $0x3c] sm:$0xf]
        %v2645 = vld [vmem:[#allocation2 + $0x8] sm:$0x1]
        %v2646 = vld [vmem:[#allocation2 + $0x14] sm:$0x1]
        %v2647 = vld [vmem:[#allocation2 + $0x20] sm:$0x1]
        %v2648 = vld [vmem:[#allocation2 + $0x2c] sm:$0x1]
        %v2649 = vld [vmem:[#allocation2 + $0x38] sm:$0x1]
        %v2650 = vld [vmem:[#allocation2 + $0x44] sm:$0x1]
        %v2651 = vld [vmem:[#allocation2 + $0x50] sm:$0x1]
        %v2652 = vld [vmem:[#allocation2 + $0x5c] sm:$0x1]
        %v2654 = vshrl.u32 %v2613, 16
        %v2656 = vrot.slane %v2654, 4
        %v2657 = vshll.u32 %v2613, 16
        %v2659 = vrot.slane %v2657, 5
        %v2660 = vor.u32 %v2656, %v2659
        %v2661 = vrot.slane %v2660, 4
        %v2663 = vshll.u32 %v2614, 16
        %v2665 = vrot.slane %v2663, 5
        %v2666 = vsel %vm354, %v2661, %v2665
        %v2667 = vshrl.u32 %v2614, 16
        %v2669 = vrot.slane %v2667, 4
        %v2670 = vor.u32 %v2669, %v2665
        %v2671 = vrot.slane %v2670, 4
        %v2673 = vshll.u32 %v2645, 16
        %v2675 = vrot.slane %v2673, 5
        %v2676 = vsel %vm354, %v2671, %v2675
        %v2678 = vshrl.u32 %v2615, 16
        %v2680 = vrot.slane %v2678, 4
        %v2681 = vshll.u32 %v2615, 16
        %v2683 = vrot.slane %v2681, 5
        %v2684 = vor.u32 %v2680, %v2683
        %v2685 = vrot.slane %v2684, 4
        %v2687 = vshll.u32 %v2616, 16
        %v2689 = vrot.slane %v2687, 5
        %v2690 = vsel %vm354, %v2685, %v2689
        %v2691 = vshrl.u32 %v2616, 16
        %v2693 = vrot.slane %v2691, 4
        %v2694 = vor.u32 %v2693, %v2689
        %v2695 = vrot.slane %v2694, 4
        %v2697 = vshll.u32 %v2646, 16
        %v2699 = vrot.slane %v2697, 5
        %v2700 = vsel %vm354, %v2695, %v2699
        %v2702 = vshrl.u32 %v2617, 16
        %v2704 = vrot.slane %v2702, 4
        %v2705 = vshll.u32 %v2617, 16
        %v2707 = vrot.slane %v2705, 5
        %v2708 = vor.u32 %v2704, %v2707
        %v2709 = vrot.slane %v2708, 4
        %v2711 = vshll.u32 %v2618, 16
        %v2713 = vrot.slane %v2711, 5
        %v2714 = vsel %vm354, %v2709, %v2713
        %v2715 = vshrl.u32 %v2618, 16
        %v2717 = vrot.slane %v2715, 4
        %v2718 = vor.u32 %v2717, %v2713
        %v2719 = vrot.slane %v2718, 4
        %v2721 = vshll.u32 %v2647, 16
        %v2723 = vrot.slane %v2721, 5
        %v2724 = vsel %vm354, %v2719, %v2723
        %v2726 = vshrl.u32 %v2619, 16
        %v2728 = vrot.slane %v2726, 4
        %v2729 = vshll.u32 %v2619, 16
        %v2731 = vrot.slane %v2729, 5
        %v2732 = vor.u32 %v2728, %v2731
        %v2733 = vrot.slane %v2732, 4
        %v2735 = vshll.u32 %v2620, 16
        %v2737 = vrot.slane %v2735, 5
        %v2738 = vsel %vm354, %v2733, %v2737
        %v2739 = vshrl.u32 %v2620, 16
        %v2741 = vrot.slane %v2739, 4
        %v2742 = vor.u32 %v2741, %v2737
        %v2743 = vrot.slane %v2742, 4
        %v2745 = vshll.u32 %v2648, 16
        %v2747 = vrot.slane %v2745, 5
        %v2748 = vsel %vm354, %v2743, %v2747
        %v2750 = vshrl.u32 %v2621, 16
        %v2752 = vrot.slane %v2750, 4
        %v2753 = vshll.u32 %v2621, 16
        %v2755 = vrot.slane %v2753, 5
        %v2756 = vor.u32 %v2752, %v2755
        %v2757 = vrot.slane %v2756, 4
        %v2759 = vshll.u32 %v2622, 16
        %v2761 = vrot.slane %v2759, 5
        %v2762 = vsel %vm354, %v2757, %v2761
        %v2763 = vshrl.u32 %v2622, 16
        %v2765 = vrot.slane %v2763, 4
        %v2766 = vor.u32 %v2765, %v2761
        %v2767 = vrot.slane %v2766, 4
        %v2769 = vshll.u32 %v2649, 16
        %v2771 = vrot.slane %v2769, 5
        %v2772 = vsel %vm354, %v2767, %v2771
        %v2774 = vshrl.u32 %v2623, 16
        %v2776 = vrot.slane %v2774, 4
        %v2777 = vshll.u32 %v2623, 16
        %v2779 = vrot.slane %v2777, 5
        %v2780 = vor.u32 %v2776, %v2779
        %v2781 = vrot.slane %v2780, 4
        %v2783 = vshll.u32 %v2624, 16
        %v2785 = vrot.slane %v2783, 5
        %v2786 = vsel %vm354, %v2781, %v2785
        %v2787 = vshrl.u32 %v2624, 16
        %v2789 = vrot.slane %v2787, 4
        %v2790 = vor.u32 %v2789, %v2785
        %v2791 = vrot.slane %v2790, 4
        %v2793 = vshll.u32 %v2650, 16
        %v2795 = vrot.slane %v2793, 5
        %v2796 = vsel %vm354, %v2791, %v2795
        %v2798 = vshrl.u32 %v2625, 16
        %v2800 = vrot.slane %v2798, 4
        %v2801 = vshll.u32 %v2625, 16
        %v2803 = vrot.slane %v2801, 5
        %v2804 = vor.u32 %v2800, %v2803
        %v2805 = vrot.slane %v2804, 4
        %v2807 = vshll.u32 %v2626, 16
        %v2809 = vrot.slane %v2807, 5
        %v2810 = vsel %vm354, %v2805, %v2809
        %v2811 = vshrl.u32 %v2626, 16
        %v2813 = vrot.slane %v2811, 4
        %v2814 = vor.u32 %v2813, %v2809
        %v2815 = vrot.slane %v2814, 4
        %v2817 = vshll.u32 %v2651, 16
        %v2819 = vrot.slane %v2817, 5
        %v2820 = vsel %vm354, %v2815, %v2819
        %v2822 = vshrl.u32 %v2627, 16
        %v2824 = vrot.slane %v2822, 4
        %v2825 = vshll.u32 %v2627, 16
        %v2827 = vrot.slane %v2825, 5
        %v2828 = vor.u32 %v2824, %v2827
        %v2829 = vrot.slane %v2828, 4
        %v2831 = vshll.u32 %v2628, 16
        %v2833 = vrot.slane %v2831, 5
        %v2834 = vsel %vm354, %v2829, %v2833
        %v2835 = vshrl.u32 %v2628, 16
        %v2837 = vrot.slane %v2835, 4
        %v2838 = vor.u32 %v2837, %v2833
        %v2839 = vrot.slane %v2838, 4
        %v2841 = vshll.u32 %v2652, 16
        %v2843 = vrot.slane %v2841, 5
        %v2844 = vsel %vm354, %v2839, %v2843
        %s2845 = scalar_lea.vmem [#allocation3], 64
        %v2846 = vld [vmem:[%s2845] sm:$0xf]
        %v2847 = vld [vmem:[%s2845 + $0x4] sm:$0xf]
        %v2848 = vld [vmem:[%s2845 + $0x8] sm:$0xf]
        %v2849 = vld [vmem:[%s2845 + $0xc] sm:$0xf]
        %v2850 = vld [vmem:[%s2845 + $0x10] sm:$0xf]
        %v2851 = vld [vmem:[%s2845 + $0x14] sm:$0xf]
        %v2852 = vld [vmem:[%s2845 + $0x18] sm:$0xf]
        %v2853 = vld [vmem:[%s2845 + $0x1c] sm:$0xf]
        %v2854 = vld [vmem:[%s2845 + $0x20] sm:$0xf]
        %v2855 = vld [vmem:[%s2845 + $0x24] sm:$0xf]
        %v2856 = vld [vmem:[%s2845 + $0x28] sm:$0xf]
        %v2857 = vld [vmem:[%s2845 + $0x2c] sm:$0xf]
        %v2858 = vld [vmem:[%s2845 + $0x30] sm:$0xf]
        %v2859 = vld [vmem:[%s2845 + $0x34] sm:$0xf]
        %v2860 = vld [vmem:[%s2845 + $0x38] sm:$0xf]
        %v2861 = vld [vmem:[%s2845 + $0x3c] sm:$0xf]
        %v2862 = vunpack.c.l.b16 %v2666
        %v2863 = vunpack.c.l.b16 %v2676
        %v2864 = vunpack.c.l.b16 %v2690
        %v2865 = vunpack.c.l.b16 %v2700
        %v2866 = vunpack.c.l.b16 %v2714
        %v2867 = vunpack.c.l.b16 %v2724
        %v2868 = vunpack.c.l.b16 %v2738
        %v2869 = vunpack.c.l.b16 %v2748
        %v2870 = vunpack.c.l.b16 %v2762
        %v2871 = vunpack.c.l.b16 %v2772
        %v2872 = vunpack.c.l.b16 %v2786
        %v2873 = vunpack.c.l.b16 %v2796
        %v2874 = vunpack.c.l.b16 %v2810
        %v2875 = vunpack.c.l.b16 %v2820
        %v2876 = vunpack.c.l.b16 %v2834
        %v2877 = vunpack.c.l.b16 %v2844
        %v2878 = vpack.c.b16 %v2863, %v2862
        %v2879 = vpack.c.b16 %v2865, %v2864
        %v2880 = vpack.c.b16 %v2867, %v2866
        %v2881 = vpack.c.b16 %v2869, %v2868
        %v2882 = vpack.c.b16 %v2871, %v2870
        %v2883 = vpack.c.b16 %v2873, %v2872
        %v2884 = vpack.c.b16 %v2875, %v2874
        %v2885 = vpack.c.b16 %v2877, %v2876
        %v2910 = vunpack.c.l.b16 %v2846
        %v2911 = vunpack.c.l.b16 %v2847
        %v2912 = vunpack.c.l.b16 %v2848
        %v2913 = vunpack.c.l.b16 %v2849
        %v2914 = vunpack.c.l.b16 %v2850
        %v2915 = vunpack.c.l.b16 %v2851
        %v2916 = vunpack.c.l.b16 %v2852
        %v2917 = vunpack.c.l.b16 %v2853
        %v2918 = vunpack.c.l.b16 %v2854
        %v2919 = vunpack.c.l.b16 %v2855
        %v2920 = vunpack.c.l.b16 %v2856
        %v2921 = vunpack.c.l.b16 %v2857
        %v2922 = vunpack.c.l.b16 %v2858
        %v2923 = vunpack.c.l.b16 %v2859
        %v2924 = vunpack.c.l.b16 %v2860
        %v2925 = vunpack.c.l.b16 %v2861
        %v2926 = vpack.c.b16 %v2911, %v2910
        %v2927 = vpack.c.b16 %v2913, %v2912
        %v2928 = vpack.c.b16 %v2915, %v2914
        %v2929 = vpack.c.b16 %v2917, %v2916
        %v2930 = vpack.c.b16 %v2919, %v2918
        %v2931 = vpack.c.b16 %v2921, %v2920
        %v2932 = vpack.c.b16 %v2923, %v2922
        %v2933 = vpack.c.b16 %v2925, %v2924
        %2942 = vmatpush.bf16.msra.mxu0 %v2933
        %2943 = vmatpush.bf16.msra.mxu0 %v2932
        %2944 = vmatpush.bf16.msra.mxu0 %v2931
        %2945 = vmatpush.bf16.msra.mxu0 %v2930
        %2946 = vmatpush.bf16.msra.mxu0 %v2929
        %2947 = vmatpush.bf16.msra.mxu0 %v2928
        %2948 = vmatpush.bf16.msra.mxu0 %v2927
        %2949 = vmatpush.bf16.msra.mxu0 %v2926
        %2950 = vmatmul.bf16.gmra.mxu0 %v2878
        %v2951 = vpop.f32.mrf.mxu0
        %v2952 = vadd.f32 0.0, %v2951
        %v2953 = vpop.f32.mrf.mxu0
        %v2954 = vadd.f32 0.0, %v2953
        %2955 = vmatmul.bf16.gmra.mxu0 %v2879
        %v2956 = vpop.f32.mrf.mxu0
        %v2957 = vadd.f32 0.0, %v2956
        %v2958 = vpop.f32.mrf.mxu0
        %v2959 = vadd.f32 0.0, %v2958
        %2960 = vmatmul.bf16.gmra.mxu0 %v2880
        %v2961 = vpop.f32.mrf.mxu0
        %v2962 = vadd.f32 0.0, %v2961
        %v2963 = vpop.f32.mrf.mxu0
        %v2964 = vadd.f32 0.0, %v2963
        %2965 = vmatmul.bf16.gmra.mxu0 %v2881
        %v2966 = vpop.f32.mrf.mxu0
        %v2967 = vadd.f32 0.0, %v2966
        %v2968 = vpop.f32.mrf.mxu0
        %v2969 = vadd.f32 0.0, %v2968
        %2970 = vmatmul.bf16.gmra.mxu0 %v2882
        %v2971 = vpop.f32.mrf.mxu0
        %v2972 = vadd.f32 0.0, %v2971
        %v2973 = vpop.f32.mrf.mxu0
        %v2974 = vadd.f32 0.0, %v2973
        %2975 = vmatmul.bf16.gmra.mxu0 %v2883
        %v2976 = vpop.f32.mrf.mxu0
        %v2977 = vadd.f32 0.0, %v2976
        %v2978 = vpop.f32.mrf.mxu0
        %v2979 = vadd.f32 0.0, %v2978
        %2980 = vmatmul.bf16.gmra.mxu0 %v2884
        %v2981 = vpop.f32.mrf.mxu0
        %v2982 = vadd.f32 0.0, %v2981
        %v2983 = vpop.f32.mrf.mxu0
        %v2984 = vadd.f32 0.0, %v2983
        %2985 = vmatmul.bf16.gmra.mxu0 %v2885
        %v2986 = vpop.f32.mrf.mxu0
        %v2987 = vadd.f32 0.0, %v2986
        %v2988 = vpop.f32.mrf.mxu0
        %v2989 = vadd.f32 0.0, %v2988
        %2990 = vdwg.mxu0
        %v3007 = vunpack.c.l.b16 %v2613
        %v3008 = vunpack.c.l.b16 %v2614
        %v3009 = vunpack.c.l.b16 %v2615
        %v3010 = vunpack.c.l.b16 %v2616
        %v3011 = vunpack.c.l.b16 %v2617
        %v3012 = vunpack.c.l.b16 %v2618
        %v3013 = vunpack.c.l.b16 %v2619
        %v3014 = vunpack.c.l.b16 %v2620
        %v3015 = vunpack.c.l.b16 %v2621
        %v3016 = vunpack.c.l.b16 %v2622
        %v3017 = vunpack.c.l.b16 %v2623
        %v3018 = vunpack.c.l.b16 %v2624
        %v3019 = vunpack.c.l.b16 %v2625
        %v3020 = vunpack.c.l.b16 %v2626
        %v3021 = vunpack.c.l.b16 %v2627
        %v3022 = vunpack.c.l.b16 %v2628
        %v3023 = vpack.c.b16 %v3008, %v3007
        %v3024 = vpack.c.b16 %v3010, %v3009
        %v3025 = vpack.c.b16 %v3012, %v3011
        %v3026 = vpack.c.b16 %v3014, %v3013
        %v3027 = vpack.c.b16 %v3016, %v3015
        %v3028 = vpack.c.b16 %v3018, %v3017
        %v3029 = vpack.c.b16 %v3020, %v3019
        %v3030 = vpack.c.b16 %v3022, %v3021
        %v3055 = vunpack.c.l.b16 %v2629
        %v3056 = vunpack.c.l.b16 %v2630
        %v3057 = vunpack.c.l.b16 %v2631
        %v3058 = vunpack.c.l.b16 %v2632
        %v3059 = vunpack.c.l.b16 %v2633
        %v3060 = vunpack.c.l.b16 %v2634
        %v3061 = vunpack.c.l.b16 %v2635
        %v3062 = vunpack.c.l.b16 %v2636
        %v3063 = vunpack.c.l.b16 %v2637
        %v3064 = vunpack.c.l.b16 %v2638
        %v3065 = vunpack.c.l.b16 %v2639
        %v3066 = vunpack.c.l.b16 %v2640
        %v3067 = vunpack.c.l.b16 %v2641
        %v3068 = vunpack.c.l.b16 %v2642
        %v3069 = vunpack.c.l.b16 %v2643
        %v3070 = vunpack.c.l.b16 %v2644
        %v3071 = vpack.c.b16 %v3056, %v3055
        %v3072 = vpack.c.b16 %v3058, %v3057
        %v3073 = vpack.c.b16 %v3060, %v3059
        %v3074 = vpack.c.b16 %v3062, %v3061
        %v3075 = vpack.c.b16 %v3064, %v3063
        %v3076 = vpack.c.b16 %v3066, %v3065
        %v3077 = vpack.c.b16 %v3068, %v3067
        %v3078 = vpack.c.b16 %v3070, %v3069
        %3087 = vmatpush.bf16.msra.mxu0 %v3078
        %3088 = vmatpush.bf16.msra.mxu0 %v3077
        %3089 = vmatpush.bf16.msra.mxu0 %v3076
        %3090 = vmatpush.bf16.msra.mxu0 %v3075
        %3091 = vmatpush.bf16.msra.mxu0 %v3074
        %3092 = vmatpush.bf16.msra.mxu0 %v3073
        %3093 = vmatpush.bf16.msra.mxu0 %v3072
        %3094 = vmatpush.bf16.msra.mxu0 %v3071
        %3095 = vmatmul.bf16.gmra.mxu0 %v3023
        %v3096 = vpop.f32.mrf.mxu0
        %v3097 = vadd.f32 %v2952, %v3096
        %v3098 = vpop.f32.mrf.mxu0
        %v3099 = vadd.f32 %v2954, %v3098
        %3100 = vmatmul.bf16.gmra.mxu0 %v3024
        %v3101 = vpop.f32.mrf.mxu0
        %v3102 = vadd.f32 %v2957, %v3101
        %v3103 = vpop.f32.mrf.mxu0
        %v3104 = vadd.f32 %v2959, %v3103
        %3105 = vmatmul.bf16.gmra.mxu0 %v3025
        %v3106 = vpop.f32.mrf.mxu0
        %v3107 = vadd.f32 %v2962, %v3106
        %v3108 = vpop.f32.mrf.mxu0
        %v3109 = vadd.f32 %v2964, %v3108
        %3110 = vmatmul.bf16.gmra.mxu0 %v3026
        %v3111 = vpop.f32.mrf.mxu0
        %v3112 = vadd.f32 %v2967, %v3111
        %v3113 = vpop.f32.mrf.mxu0
        %v3114 = vadd.f32 %v2969, %v3113
        %3115 = vmatmul.bf16.gmra.mxu0 %v3027
        %v3116 = vpop.f32.mrf.mxu0
        %v3117 = vadd.f32 %v2972, %v3116
        %v3118 = vpop.f32.mrf.mxu0
        %v3119 = vadd.f32 %v2974, %v3118
        %3120 = vmatmul.bf16.gmra.mxu0 %v3028
        %v3121 = vpop.f32.mrf.mxu0
        %v3122 = vadd.f32 %v2977, %v3121
        %v3123 = vpop.f32.mrf.mxu0
        %v3124 = vadd.f32 %v2979, %v3123
        %3125 = vmatmul.bf16.gmra.mxu0 %v3029
        %v3126 = vpop.f32.mrf.mxu0
        %v3127 = vadd.f32 %v2982, %v3126
        %v3128 = vpop.f32.mrf.mxu0
        %v3129 = vadd.f32 %v2984, %v3128
        %3130 = vmatmul.bf16.gmra.mxu0 %v3030
        %v3131 = vpop.f32.mrf.mxu0
        %v3132 = vadd.f32 %v2987, %v3131
        %v3133 = vpop.f32.mrf.mxu0
        %v3134 = vadd.f32 %v2989, %v3133
        %3135 = vdwg.mxu0
        %v3136 = vld [vmem:[#allocation2] sm:$0xe]
        %v3137 = vld [vmem:[#allocation2 + $0xc] sm:$0xe]
        %v3138 = vld [vmem:[#allocation2 + $0x18] sm:$0xe]
        %v3139 = vld [vmem:[#allocation2 + $0x24] sm:$0xe]
        %v3140 = vld [vmem:[#allocation2 + $0x30] sm:$0xe]
        %v3141 = vld [vmem:[#allocation2 + $0x3c] sm:$0xe]
        %v3142 = vld [vmem:[#allocation2 + $0x48] sm:$0xe]
        %v3143 = vld [vmem:[#allocation2 + $0x54] sm:$0xe]
        %v3160 = vrot.slane %v3136, 5
        %v3161 = vrot.slane %v3160, 4
        %v3162 = vrot.slane %v2614, 5
        %v3163 = vsel %vm938, %v3161, %v3162
        %v3164 = vrot.slane %v3162, 4
        %v3165 = vrot.slane %v2645, 5
        %v3166 = vsel %vm938, %v3164, %v3165
        %v3167 = vrot.slane %v3137, 5
        %v3168 = vrot.slane %v3167, 4
        %v3169 = vrot.slane %v2616, 5
        %v3170 = vsel %vm938, %v3168, %v3169
        %v3171 = vrot.slane %v3169, 4
        %v3172 = vrot.slane %v2646, 5
        %v3173 = vsel %vm938, %v3171, %v3172
        %v3174 = vrot.slane %v3138, 5
        %v3175 = vrot.slane %v3174, 4
        %v3176 = vrot.slane %v2618, 5
        %v3177 = vsel %vm938, %v3175, %v3176
        %v3178 = vrot.slane %v3176, 4
        %v3179 = vrot.slane %v2647, 5
        %v3180 = vsel %vm938, %v3178, %v3179
        %v3181 = vrot.slane %v3139, 5
        %v3182 = vrot.slane %v3181, 4
        %v3183 = vrot.slane %v2620, 5
        %v3184 = vsel %vm938, %v3182, %v3183
        %v3185 = vrot.slane %v3183, 4
        %v3186 = vrot.slane %v2648, 5
        %v3187 = vsel %vm938, %v3185, %v3186
        %v3188 = vrot.slane %v3140, 5
        %v3189 = vrot.slane %v3188, 4
        %v3190 = vrot.slane %v2622, 5
        %v3191 = vsel %vm938, %v3189, %v3190
        %v3192 = vrot.slane %v3190, 4
        %v3193 = vrot.slane %v2649, 5
        %v3194 = vsel %vm938, %v3192, %v3193
        %v3195 = vrot.slane %v3141, 5
        %v3196 = vrot.slane %v3195, 4
        %v3197 = vrot.slane %v2624, 5
        %v3198 = vsel %vm938, %v3196, %v3197
        %v3199 = vrot.slane %v3197, 4
        %v3200 = vrot.slane %v2650, 5
        %v3201 = vsel %vm938, %v3199, %v3200
        %v3202 = vrot.slane %v3142, 5
        %v3203 = vrot.slane %v3202, 4
        %v3204 = vrot.slane %v2626, 5
        %v3205 = vsel %vm938, %v3203, %v3204
        %v3206 = vrot.slane %v3204, 4
        %v3207 = vrot.slane %v2651, 5
        %v3208 = vsel %vm938, %v3206, %v3207
        %v3209 = vrot.slane %v3143, 5
        %v3210 = vrot.slane %v3209, 4
        %v3211 = vrot.slane %v2628, 5
        %v3212 = vsel %vm938, %v3210, %v3211
        %v3213 = vrot.slane %v3211, 4
        %v3214 = vrot.slane %v2652, 5
        %v3215 = vsel %vm938, %v3213, %v3214
        %s3216 = scalar_lea.vmem [#allocation3], 128
        %v3217 = vld [vmem:[%s3216] sm:$0xf]
        %v3218 = vld [vmem:[%s3216 + $0x4] sm:$0xf]
        %v3219 = vld [vmem:[%s3216 + $0x8] sm:$0xf]
        %v3220 = vld [vmem:[%s3216 + $0xc] sm:$0xf]
        %v3221 = vld [vmem:[%s3216 + $0x10] sm:$0xf]
        %v3222 = vld [vmem:[%s3216 + $0x14] sm:$0xf]
        %v3223 = vld [vmem:[%s3216 + $0x18] sm:$0xf]
        %v3224 = vld [vmem:[%s3216 + $0x1c] sm:$0xf]
        %v3225 = vld [vmem:[%s3216 + $0x20] sm:$0xf]
        %v3226 = vld [vmem:[%s3216 + $0x24] sm:$0xf]
        %v3227 = vld [vmem:[%s3216 + $0x28] sm:$0xf]
        %v3228 = vld [vmem:[%s3216 + $0x2c] sm:$0xf]
        %v3229 = vld [vmem:[%s3216 + $0x30] sm:$0xf]
        %v3230 = vld [vmem:[%s3216 + $0x34] sm:$0xf]
        %v3231 = vld [vmem:[%s3216 + $0x38] sm:$0xf]
        %v3232 = vld [vmem:[%s3216 + $0x3c] sm:$0xf]
        %v3233 = vunpack.c.l.b16 %v3163
        %v3234 = vunpack.c.l.b16 %v3166
        %v3235 = vunpack.c.l.b16 %v3170
        %v3236 = vunpack.c.l.b16 %v3173
        %v3237 = vunpack.c.l.b16 %v3177
        %v3238 = vunpack.c.l.b16 %v3180
        %v3239 = vunpack.c.l.b16 %v3184
        %v3240 = vunpack.c.l.b16 %v3187
        %v3241 = vunpack.c.l.b16 %v3191
        %v3242 = vunpack.c.l.b16 %v3194
        %v3243 = vunpack.c.l.b16 %v3198
        %v3244 = vunpack.c.l.b16 %v3201
        %v3245 = vunpack.c.l.b16 %v3205
        %v3246 = vunpack.c.l.b16 %v3208
        %v3247 = vunpack.c.l.b16 %v3212
        %v3248 = vunpack.c.l.b16 %v3215
        %v3249 = vpack.c.b16 %v3234, %v3233
        %v3250 = vpack.c.b16 %v3236, %v3235
        %v3251 = vpack.c.b16 %v3238, %v3237
        %v3252 = vpack.c.b16 %v3240, %v3239
        %v3253 = vpack.c.b16 %v3242, %v3241
        %v3254 = vpack.c.b16 %v3244, %v3243
        %v3255 = vpack.c.b16 %v3246, %v3245
        %v3256 = vpack.c.b16 %v3248, %v3247
        %v3281 = vunpack.c.l.b16 %v3217
        %v3282 = vunpack.c.l.b16 %v3218
        %v3283 = vunpack.c.l.b16 %v3219
        %v3284 = vunpack.c.l.b16 %v3220
        %v3285 = vunpack.c.l.b16 %v3221
        %v3286 = vunpack.c.l.b16 %v3222
        %v3287 = vunpack.c.l.b16 %v3223
        %v3288 = vunpack.c.l.b16 %v3224
        %v3289 = vunpack.c.l.b16 %v3225
        %v3290 = vunpack.c.l.b16 %v3226
        %v3291 = vunpack.c.l.b16 %v3227
        %v3292 = vunpack.c.l.b16 %v3228
        %v3293 = vunpack.c.l.b16 %v3229
        %v3294 = vunpack.c.l.b16 %v3230
        %v3295 = vunpack.c.l.b16 %v3231
        %v3296 = vunpack.c.l.b16 %v3232
        %v3297 = vpack.c.b16 %v3282, %v3281
        %v3298 = vpack.c.b16 %v3284, %v3283
        %v3299 = vpack.c.b16 %v3286, %v3285
        %v3300 = vpack.c.b16 %v3288, %v3287
        %v3301 = vpack.c.b16 %v3290, %v3289
        %v3302 = vpack.c.b16 %v3292, %v3291
        %v3303 = vpack.c.b16 %v3294, %v3293
        %v3304 = vpack.c.b16 %v3296, %v3295
        %3313 = vmatpush.bf16.msra.mxu0 %v3304
        %3314 = vmatpush.bf16.msra.mxu0 %v3303
        %3315 = vmatpush.bf16.msra.mxu0 %v3302
        %3316 = vmatpush.bf16.msra.mxu0 %v3301
        %3317 = vmatpush.bf16.msra.mxu0 %v3300
        %3318 = vmatpush.bf16.msra.mxu0 %v3299
        %3319 = vmatpush.bf16.msra.mxu0 %v3298
        %3320 = vmatpush.bf16.msra.mxu0 %v3297
        %3321 = vmatmul.bf16.gmra.mxu0 %v3249
        %v3322 = vpop.f32.mrf.mxu0
        %v3323 = vadd.f32 0.0, %v3322
        %v3324 = vpop.f32.mrf.mxu0
        %v3325 = vadd.f32 0.0, %v3324
        %3326 = vmatmul.bf16.gmra.mxu0 %v3250
        %v3327 = vpop.f32.mrf.mxu0
        %v3328 = vadd.f32 0.0, %v3327
        %v3329 = vpop.f32.mrf.mxu0
        %v3330 = vadd.f32 0.0, %v3329
        %3331 = vmatmul.bf16.gmra.mxu0 %v3251
        %v3332 = vpop.f32.mrf.mxu0
        %v3333 = vadd.f32 0.0, %v3332
        %v3334 = vpop.f32.mrf.mxu0
        %v3335 = vadd.f32 0.0, %v3334
        %3336 = vmatmul.bf16.gmra.mxu0 %v3252
        %v3337 = vpop.f32.mrf.mxu0
        %v3338 = vadd.f32 0.0, %v3337
        %v3339 = vpop.f32.mrf.mxu0
        %v3340 = vadd.f32 0.0, %v3339
        %3341 = vmatmul.bf16.gmra.mxu0 %v3253
        %v3342 = vpop.f32.mrf.mxu0
        %v3343 = vadd.f32 0.0, %v3342
        %v3344 = vpop.f32.mrf.mxu0
        %v3345 = vadd.f32 0.0, %v3344
        %3346 = vmatmul.bf16.gmra.mxu0 %v3254
        %v3347 = vpop.f32.mrf.mxu0
        %v3348 = vadd.f32 0.0, %v3347
        %v3349 = vpop.f32.mrf.mxu0
        %v3350 = vadd.f32 0.0, %v3349
        %3351 = vmatmul.bf16.gmra.mxu0 %v3255
        %v3352 = vpop.f32.mrf.mxu0
        %v3353 = vadd.f32 0.0, %v3352
        %v3354 = vpop.f32.mrf.mxu0
        %v3355 = vadd.f32 0.0, %v3354
        %3356 = vmatmul.bf16.gmra.mxu0 %v3256
        %v3357 = vpop.f32.mrf.mxu0
        %v3358 = vadd.f32 0.0, %v3357
        %v3359 = vpop.f32.mrf.mxu0
        %v3360 = vadd.f32 0.0, %v3359
        %3361 = vdwg.mxu0
        %v3362 = vadd.f32 %v3097, %v3323
        %v3363 = vadd.f32 %v3099, %v3325
        %v3364 = vadd.f32 %v3102, %v3328
        %v3365 = vadd.f32 %v3104, %v3330
        %v3366 = vadd.f32 %v3107, %v3333
        %v3367 = vadd.f32 %v3109, %v3335
        %v3368 = vadd.f32 %v3112, %v3338
        %v3369 = vadd.f32 %v3114, %v3340
        %v3370 = vadd.f32 %v3117, %v3343
        %v3371 = vadd.f32 %v3119, %v3345
        %v3372 = vadd.f32 %v3122, %v3348
        %v3373 = vadd.f32 %v3124, %v3350
        %v3374 = vadd.f32 %v3127, %v3353
        %v3375 = vadd.f32 %v3129, %v3355
        %v3376 = vadd.f32 %v3132, %v3358
        %v3377 = vadd.f32 %v3134, %v3360
        %s3378 = scalar_lea.vmem [#allocation2], 12
        %v3379 = vld [vmem:[%s3378] sm:$0xf]
        %v3380 = vld [vmem:[%s3378 + $0x4] sm:$0xf]
        %v3381 = vld [vmem:[%s3378 + $0xc] sm:$0xf]
        %v3382 = vld [vmem:[%s3378 + $0x10] sm:$0xf]
        %v3383 = vld [vmem:[%s3378 + $0x18] sm:$0xf]
        %v3384 = vld [vmem:[%s3378 + $0x1c] sm:$0xf]
        %v3385 = vld [vmem:[%s3378 + $0x24] sm:$0xf]
        %v3386 = vld [vmem:[%s3378 + $0x28] sm:$0xf]
        %v3387 = vld [vmem:[%s3378 + $0x30] sm:$0xf]
        %v3388 = vld [vmem:[%s3378 + $0x34] sm:$0xf]
        %v3389 = vld [vmem:[%s3378 + $0x3c] sm:$0xf]
        %v3390 = vld [vmem:[%s3378 + $0x40] sm:$0xf]
        %v3391 = vld [vmem:[%s3378 + $0x48] sm:$0xf]
        %v3392 = vld [vmem:[%s3378 + $0x4c] sm:$0xf]
        %v3393 = vld [vmem:[%s3378 + $0x54] sm:$0xf]
        %v3394 = vld [vmem:[%s3378 + $0x58] sm:$0xf]
        %s3395 = scalar_lea.vmem [#allocation3], 192
        %v3396 = vld [vmem:[%s3395] sm:$0xf]
        %v3397 = vld [vmem:[%s3395 + $0x4] sm:$0xf]
        %v3398 = vld [vmem:[%s3395 + $0x8] sm:$0xf]
        %v3399 = vld [vmem:[%s3395 + $0xc] sm:$0xf]
        %v3400 = vld [vmem:[%s3395 + $0x10] sm:$0xf]
        %v3401 = vld [vmem:[%s3395 + $0x14] sm:$0xf]
        %v3402 = vld [vmem:[%s3395 + $0x18] sm:$0xf]
        %v3403 = vld [vmem:[%s3395 + $0x1c] sm:$0xf]
        %v3404 = vld [vmem:[%s3395 + $0x20] sm:$0xf]
        %v3405 = vld [vmem:[%s3395 + $0x24] sm:$0xf]
        %v3406 = vld [vmem:[%s3395 + $0x28] sm:$0xf]
        %v3407 = vld [vmem:[%s3395 + $0x2c] sm:$0xf]
        %v3408 = vld [vmem:[%s3395 + $0x30] sm:$0xf]
        %v3409 = vld [vmem:[%s3395 + $0x34] sm:$0xf]
        %v3410 = vld [vmem:[%s3395 + $0x38] sm:$0xf]
        %v3411 = vld [vmem:[%s3395 + $0x3c] sm:$0xf]
        %v3428 = vunpack.c.l.b16 %v3379
        %v3429 = vunpack.c.l.b16 %v3380
        %v3430 = vunpack.c.l.b16 %v3381
        %v3431 = vunpack.c.l.b16 %v3382
        %v3432 = vunpack.c.l.b16 %v3383
        %v3433 = vunpack.c.l.b16 %v3384
        %v3434 = vunpack.c.l.b16 %v3385
        %v3435 = vunpack.c.l.b16 %v3386
        %v3436 = vunpack.c.l.b16 %v3387
        %v3437 = vunpack.c.l.b16 %v3388
        %v3438 = vunpack.c.l.b16 %v3389
        %v3439 = vunpack.c.l.b16 %v3390
        %v3440 = vunpack.c.l.b16 %v3391
        %v3441 = vunpack.c.l.b16 %v3392
        %v3442 = vunpack.c.l.b16 %v3393
        %v3443 = vunpack.c.l.b16 %v3394
        %v3444 = vpack.c.b16 %v3429, %v3428
        %v3445 = vpack.c.b16 %v3431, %v3430
        %v3446 = vpack.c.b16 %v3433, %v3432
        %v3447 = vpack.c.b16 %v3435, %v3434
        %v3448 = vpack.c.b16 %v3437, %v3436
        %v3449 = vpack.c.b16 %v3439, %v3438
        %v3450 = vpack.c.b16 %v3441, %v3440
        %v3451 = vpack.c.b16 %v3443, %v3442
        %v3476 = vunpack.c.l.b16 %v3396
        %v3477 = vunpack.c.l.b16 %v3397
        %v3478 = vunpack.c.l.b16 %v3398
        %v3479 = vunpack.c.l.b16 %v3399
        %v3480 = vunpack.c.l.b16 %v3400
        %v3481 = vunpack.c.l.b16 %v3401
        %v3482 = vunpack.c.l.b16 %v3402
        %v3483 = vunpack.c.l.b16 %v3403
        %v3484 = vunpack.c.l.b16 %v3404
        %v3485 = vunpack.c.l.b16 %v3405
        %v3486 = vunpack.c.l.b16 %v3406
        %v3487 = vunpack.c.l.b16 %v3407
        %v3488 = vunpack.c.l.b16 %v3408
        %v3489 = vunpack.c.l.b16 %v3409
        %v3490 = vunpack.c.l.b16 %v3410
        %v3491 = vunpack.c.l.b16 %v3411
        %v3492 = vpack.c.b16 %v3477, %v3476
        %v3493 = vpack.c.b16 %v3479, %v3478
        %v3494 = vpack.c.b16 %v3481, %v3480
        %v3495 = vpack.c.b16 %v3483, %v3482
        %v3496 = vpack.c.b16 %v3485, %v3484
        %v3497 = vpack.c.b16 %v3487, %v3486
        %v3498 = vpack.c.b16 %v3489, %v3488
        %v3499 = vpack.c.b16 %v3491, %v3490
        %3508 = vmatpush.bf16.msra.mxu0 %v3499
        %3509 = vmatpush.bf16.msra.mxu0 %v3498
        %3510 = vmatpush.bf16.msra.mxu0 %v3497
        %3511 = vmatpush.bf16.msra.mxu0 %v3496
        %3512 = vmatpush.bf16.msra.mxu0 %v3495
        %3513 = vmatpush.bf16.msra.mxu0 %v3494
        %3514 = vmatpush.bf16.msra.mxu0 %v3493
        %3515 = vmatpush.bf16.msra.mxu0 %v3492
        %3516 = vmatmul.bf16.gmra.mxu0 %v3444
        %v3517 = vpop.f32.mrf.mxu0
        %v3518 = vadd.f32 0.0, %v3517
        %v3519 = vpop.f32.mrf.mxu0
        %v3520 = vadd.f32 0.0, %v3519
        %3521 = vmatmul.bf16.gmra.mxu0 %v3445
        %v3522 = vpop.f32.mrf.mxu0
        %v3523 = vadd.f32 0.0, %v3522
        %v3524 = vpop.f32.mrf.mxu0
        %v3525 = vadd.f32 0.0, %v3524
        %3526 = vmatmul.bf16.gmra.mxu0 %v3446
        %v3527 = vpop.f32.mrf.mxu0
        %v3528 = vadd.f32 0.0, %v3527
        %v3529 = vpop.f32.mrf.mxu0
        %v3530 = vadd.f32 0.0, %v3529
        %3531 = vmatmul.bf16.gmra.mxu0 %v3447
        %v3532 = vpop.f32.mrf.mxu0
        %v3533 = vadd.f32 0.0, %v3532
        %v3534 = vpop.f32.mrf.mxu0
        %v3535 = vadd.f32 0.0, %v3534
        %3536 = vmatmul.bf16.gmra.mxu0 %v3448
        %v3537 = vpop.f32.mrf.mxu0
        %v3538 = vadd.f32 0.0, %v3537
        %v3539 = vpop.f32.mrf.mxu0
        %v3540 = vadd.f32 0.0, %v3539
        %3541 = vmatmul.bf16.gmra.mxu0 %v3449
        %v3542 = vpop.f32.mrf.mxu0
        %v3543 = vadd.f32 0.0, %v3542
        %v3544 = vpop.f32.mrf.mxu0
        %v3545 = vadd.f32 0.0, %v3544
        %3546 = vmatmul.bf16.gmra.mxu0 %v3450
        %v3547 = vpop.f32.mrf.mxu0
        %v3548 = vadd.f32 0.0, %v3547
        %v3549 = vpop.f32.mrf.mxu0
        %v3550 = vadd.f32 0.0, %v3549
        %3551 = vmatmul.bf16.gmra.mxu0 %v3451
        %v3552 = vpop.f32.mrf.mxu0
        %v3553 = vadd.f32 0.0, %v3552
        %v3554 = vpop.f32.mrf.mxu0
        %v3555 = vadd.f32 0.0, %v3554
        %3556 = vdwg.mxu0
        %v3557 = vadd.f32 %v3362, %v3518
        %v3558 = vadd.f32 %v3363, %v3520
        %v3559 = vadd.f32 %v3364, %v3523
        %v3560 = vadd.f32 %v3365, %v3525
        %v3561 = vadd.f32 %v3366, %v3528
        %v3562 = vadd.f32 %v3367, %v3530
        %v3563 = vadd.f32 %v3368, %v3533
        %v3564 = vadd.f32 %v3369, %v3535
        %v3565 = vadd.f32 %v3370, %v3538
        %v3566 = vadd.f32 %v3371, %v3540
        %v3567 = vadd.f32 %v3372, %v3543
        %v3568 = vadd.f32 %v3373, %v3545
        %v3569 = vadd.f32 %v3374, %v3548
        %v3570 = vadd.f32 %v3375, %v3550
        %v3571 = vadd.f32 %v3376, %v3553
        %v3572 = vadd.f32 %v3377, %v3555
        %v3573 = vld [vmem:[%s3378] sm:$0xf]
        %v3574 = vld [vmem:[%s3378 + $0x4] sm:$0xf]
        %v3575 = vld [vmem:[%s3378 + $0x8] sm:$0x1]
        %v3576 = vld [vmem:[%s3378 + $0xc] sm:$0xf]
        %v3577 = vld [vmem:[%s3378 + $0x10] sm:$0xf]
        %v3578 = vld [vmem:[%s3378 + $0x14] sm:$0x1]
        %v3579 = vld [vmem:[%s3378 + $0x18] sm:$0xf]
        %v3580 = vld [vmem:[%s3378 + $0x1c] sm:$0xf]
        %v3581 = vld [vmem:[%s3378 + $0x20] sm:$0x1]
        %v3582 = vld [vmem:[%s3378 + $0x24] sm:$0xf]
        %v3583 = vld [vmem:[%s3378 + $0x28] sm:$0xf]
        %v3584 = vld [vmem:[%s3378 + $0x2c] sm:$0x1]
        %v3585 = vld [vmem:[%s3378 + $0x30] sm:$0xf]
        %v3586 = vld [vmem:[%s3378 + $0x34] sm:$0xf]
        %v3587 = vld [vmem:[%s3378 + $0x38] sm:$0x1]
        %v3588 = vld [vmem:[%s3378 + $0x3c] sm:$0xf]
        %v3589 = vld [vmem:[%s3378 + $0x40] sm:$0xf]
        %v3590 = vld [vmem:[%s3378 + $0x44] sm:$0x1]
        %v3591 = vld [vmem:[%s3378 + $0x48] sm:$0xf]
        %v3592 = vld [vmem:[%s3378 + $0x4c] sm:$0xf]
        %v3593 = vld [vmem:[%s3378 + $0x50] sm:$0x1]
        %v3594 = vld [vmem:[%s3378 + $0x54] sm:$0xf]
        %v3595 = vld [vmem:[%s3378 + $0x58] sm:$0xf]
        %v3596 = vld [vmem:[%s3378 + $0x5c] sm:$0x1]
        %v3598 = vshrl.u32 %v3573, 16
        %v3600 = vrot.slane %v3598, 4
        %v3601 = vshll.u32 %v3573, 16
        %v3603 = vrot.slane %v3601, 5
        %v3604 = vor.u32 %v3600, %v3603
        %v3605 = vrot.slane %v3604, 4
        %v3607 = vshll.u32 %v3574, 16
        %v3609 = vrot.slane %v3607, 5
        %v3610 = vsel %vm354, %v3605, %v3609
        %v3611 = vshrl.u32 %v3574, 16
        %v3613 = vrot.slane %v3611, 4
        %v3614 = vor.u32 %v3613, %v3609
        %v3615 = vrot.slane %v3614, 4
        %v3617 = vshll.u32 %v3575, 16
        %v3619 = vrot.slane %v3617, 5
        %v3620 = vsel %vm354, %v3615, %v3619
        %v3622 = vshrl.u32 %v3576, 16
        %v3624 = vrot.slane %v3622, 4
        %v3625 = vshll.u32 %v3576, 16
        %v3627 = vrot.slane %v3625, 5
        %v3628 = vor.u32 %v3624, %v3627
        %v3629 = vrot.slane %v3628, 4
        %v3631 = vshll.u32 %v3577, 16
        %v3633 = vrot.slane %v3631, 5
        %v3634 = vsel %vm354, %v3629, %v3633
        %v3635 = vshrl.u32 %v3577, 16
        %v3637 = vrot.slane %v3635, 4
        %v3638 = vor.u32 %v3637, %v3633
        %v3639 = vrot.slane %v3638, 4
        %v3641 = vshll.u32 %v3578, 16
        %v3643 = vrot.slane %v3641, 5
        %v3644 = vsel %vm354, %v3639, %v3643
        %v3646 = vshrl.u32 %v3579, 16
        %v3648 = vrot.slane %v3646, 4
        %v3649 = vshll.u32 %v3579, 16
        %v3651 = vrot.slane %v3649, 5
        %v3652 = vor.u32 %v3648, %v3651
        %v3653 = vrot.slane %v3652, 4
        %v3655 = vshll.u32 %v3580, 16
        %v3657 = vrot.slane %v3655, 5
        %v3658 = vsel %vm354, %v3653, %v3657
        %v3659 = vshrl.u32 %v3580, 16
        %v3661 = vrot.slane %v3659, 4
        %v3662 = vor.u32 %v3661, %v3657
        %v3663 = vrot.slane %v3662, 4
        %v3665 = vshll.u32 %v3581, 16
        %v3667 = vrot.slane %v3665, 5
        %v3668 = vsel %vm354, %v3663, %v3667
        %v3670 = vshrl.u32 %v3582, 16
        %v3672 = vrot.slane %v3670, 4
        %v3673 = vshll.u32 %v3582, 16
        %v3675 = vrot.slane %v3673, 5
        %v3676 = vor.u32 %v3672, %v3675
        %v3677 = vrot.slane %v3676, 4
        %v3679 = vshll.u32 %v3583, 16
        %v3681 = vrot.slane %v3679, 5
        %v3682 = vsel %vm354, %v3677, %v3681
        %v3683 = vshrl.u32 %v3583, 16
        %v3685 = vrot.slane %v3683, 4
        %v3686 = vor.u32 %v3685, %v3681
        %v3687 = vrot.slane %v3686, 4
        %v3689 = vshll.u32 %v3584, 16
        %v3691 = vrot.slane %v3689, 5
        %v3692 = vsel %vm354, %v3687, %v3691
        %v3694 = vshrl.u32 %v3585, 16
        %v3696 = vrot.slane %v3694, 4
        %v3697 = vshll.u32 %v3585, 16
        %v3699 = vrot.slane %v3697, 5
        %v3700 = vor.u32 %v3696, %v3699
        %v3701 = vrot.slane %v3700, 4
        %v3703 = vshll.u32 %v3586, 16
        %v3705 = vrot.slane %v3703, 5
        %v3706 = vsel %vm354, %v3701, %v3705
        %v3707 = vshrl.u32 %v3586, 16
        %v3709 = vrot.slane %v3707, 4
        %v3710 = vor.u32 %v3709, %v3705
        %v3711 = vrot.slane %v3710, 4
        %v3713 = vshll.u32 %v3587, 16
        %v3715 = vrot.slane %v3713, 5
        %v3716 = vsel %vm354, %v3711, %v3715
        %v3718 = vshrl.u32 %v3588, 16
        %v3720 = vrot.slane %v3718, 4
        %v3721 = vshll.u32 %v3588, 16
        %v3723 = vrot.slane %v3721, 5
        %v3724 = vor.u32 %v3720, %v3723
        %v3725 = vrot.slane %v3724, 4
        %v3727 = vshll.u32 %v3589, 16
        %v3729 = vrot.slane %v3727, 5
        %v3730 = vsel %vm354, %v3725, %v3729
        %v3731 = vshrl.u32 %v3589, 16
        %v3733 = vrot.slane %v3731, 4
        %v3734 = vor.u32 %v3733, %v3729
        %v3735 = vrot.slane %v3734, 4
        %v3737 = vshll.u32 %v3590, 16
        %v3739 = vrot.slane %v3737, 5
        %v3740 = vsel %vm354, %v3735, %v3739
        %v3742 = vshrl.u32 %v3591, 16
        %v3744 = vrot.slane %v3742, 4
        %v3745 = vshll.u32 %v3591, 16
        %v3747 = vrot.slane %v3745, 5
        %v3748 = vor.u32 %v3744, %v3747
        %v3749 = vrot.slane %v3748, 4
        %v3751 = vshll.u32 %v3592, 16
        %v3753 = vrot.slane %v3751, 5
        %v3754 = vsel %vm354, %v3749, %v3753
        %v3755 = vshrl.u32 %v3592, 16
        %v3757 = vrot.slane %v3755, 4
        %v3758 = vor.u32 %v3757, %v3753
        %v3759 = vrot.slane %v3758, 4
        %v3761 = vshll.u32 %v3593, 16
        %v3763 = vrot.slane %v3761, 5
        %v3764 = vsel %vm354, %v3759, %v3763
        %v3766 = vshrl.u32 %v3594, 16
        %v3768 = vrot.slane %v3766, 4
        %v3769 = vshll.u32 %v3594, 16
        %v3771 = vrot.slane %v3769, 5
        %v3772 = vor.u32 %v3768, %v3771
        %v3773 = vrot.slane %v3772, 4
        %v3775 = vshll.u32 %v3595, 16
        %v3777 = vrot.slane %v3775, 5
        %v3778 = vsel %vm354, %v3773, %v3777
        %v3779 = vshrl.u32 %v3595, 16
        %v3781 = vrot.slane %v3779, 4
        %v3782 = vor.u32 %v3781, %v3777
        %v3783 = vrot.slane %v3782, 4
        %v3785 = vshll.u32 %v3596, 16
        %v3787 = vrot.slane %v3785, 5
        %v3788 = vsel %vm354, %v3783, %v3787
        %s3789 = scalar_lea.vmem [#allocation3], 256
        %v3790 = vld [vmem:[%s3789] sm:$0xf]
        %v3791 = vld [vmem:[%s3789 + $0x4] sm:$0xf]
        %v3792 = vld [vmem:[%s3789 + $0x8] sm:$0xf]
        %v3793 = vld [vmem:[%s3789 + $0xc] sm:$0xf]
        %v3794 = vld [vmem:[%s3789 + $0x10] sm:$0xf]
        %v3795 = vld [vmem:[%s3789 + $0x14] sm:$0xf]
        %v3796 = vld [vmem:[%s3789 + $0x18] sm:$0xf]
        %v3797 = vld [vmem:[%s3789 + $0x1c] sm:$0xf]
        %v3798 = vld [vmem:[%s3789 + $0x20] sm:$0xf]
        %v3799 = vld [vmem:[%s3789 + $0x24] sm:$0xf]
        %v3800 = vld [vmem:[%s3789 + $0x28] sm:$0xf]
        %v3801 = vld [vmem:[%s3789 + $0x2c] sm:$0xf]
        %v3802 = vld [vmem:[%s3789 + $0x30] sm:$0xf]
        %v3803 = vld [vmem:[%s3789 + $0x34] sm:$0xf]
        %v3804 = vld [vmem:[%s3789 + $0x38] sm:$0xf]
        %v3805 = vld [vmem:[%s3789 + $0x3c] sm:$0xf]
        %v3806 = vunpack.c.l.b16 %v3610
        %v3807 = vunpack.c.l.b16 %v3620
        %v3808 = vunpack.c.l.b16 %v3634
        %v3809 = vunpack.c.l.b16 %v3644
        %v3810 = vunpack.c.l.b16 %v3658
        %v3811 = vunpack.c.l.b16 %v3668
        %v3812 = vunpack.c.l.b16 %v3682
        %v3813 = vunpack.c.l.b16 %v3692
        %v3814 = vunpack.c.l.b16 %v3706
        %v3815 = vunpack.c.l.b16 %v3716
        %v3816 = vunpack.c.l.b16 %v3730
        %v3817 = vunpack.c.l.b16 %v3740
        %v3818 = vunpack.c.l.b16 %v3754
        %v3819 = vunpack.c.l.b16 %v3764
        %v3820 = vunpack.c.l.b16 %v3778
        %v3821 = vunpack.c.l.b16 %v3788
        %v3822 = vpack.c.b16 %v3807, %v3806
        %v3823 = vpack.c.b16 %v3809, %v3808
        %v3824 = vpack.c.b16 %v3811, %v3810
        %v3825 = vpack.c.b16 %v3813, %v3812
        %v3826 = vpack.c.b16 %v3815, %v3814
        %v3827 = vpack.c.b16 %v3817, %v3816
        %v3828 = vpack.c.b16 %v3819, %v3818
        %v3829 = vpack.c.b16 %v3821, %v3820
        %v3854 = vunpack.c.l.b16 %v3790
        %v3855 = vunpack.c.l.b16 %v3791
        %v3856 = vunpack.c.l.b16 %v3792
        %v3857 = vunpack.c.l.b16 %v3793
        %v3858 = vunpack.c.l.b16 %v3794
        %v3859 = vunpack.c.l.b16 %v3795
        %v3860 = vunpack.c.l.b16 %v3796
        %v3861 = vunpack.c.l.b16 %v3797
        %v3862 = vunpack.c.l.b16 %v3798
        %v3863 = vunpack.c.l.b16 %v3799
        %v3864 = vunpack.c.l.b16 %v3800
        %v3865 = vunpack.c.l.b16 %v3801
        %v3866 = vunpack.c.l.b16 %v3802
        %v3867 = vunpack.c.l.b16 %v3803
        %v3868 = vunpack.c.l.b16 %v3804
        %v3869 = vunpack.c.l.b16 %v3805
        %v3870 = vpack.c.b16 %v3855, %v3854
        %v3871 = vpack.c.b16 %v3857, %v3856
        %v3872 = vpack.c.b16 %v3859, %v3858
        %v3873 = vpack.c.b16 %v3861, %v3860
        %v3874 = vpack.c.b16 %v3863, %v3862
        %v3875 = vpack.c.b16 %v3865, %v3864
        %v3876 = vpack.c.b16 %v3867, %v3866
        %v3877 = vpack.c.b16 %v3869, %v3868
        %3886 = vmatpush.bf16.msra.mxu0 %v3877
        %3887 = vmatpush.bf16.msra.mxu0 %v3876
        %3888 = vmatpush.bf16.msra.mxu0 %v3875
        %3889 = vmatpush.bf16.msra.mxu0 %v3874
        %3890 = vmatpush.bf16.msra.mxu0 %v3873
        %3891 = vmatpush.bf16.msra.mxu0 %v3872
        %3892 = vmatpush.bf16.msra.mxu0 %v3871
        %3893 = vmatpush.bf16.msra.mxu0 %v3870
        %3894 = vmatmul.bf16.gmra.mxu0 %v3822
        %v3895 = vpop.f32.mrf.mxu0
        %v3896 = vadd.f32 0.0, %v3895
        %v3897 = vpop.f32.mrf.mxu0
        %v3898 = vadd.f32 0.0, %v3897
        %3899 = vmatmul.bf16.gmra.mxu0 %v3823
        %v3900 = vpop.f32.mrf.mxu0
        %v3901 = vadd.f32 0.0, %v3900
        %v3902 = vpop.f32.mrf.mxu0
        %v3903 = vadd.f32 0.0, %v3902
        %3904 = vmatmul.bf16.gmra.mxu0 %v3824
        %v3905 = vpop.f32.mrf.mxu0
        %v3906 = vadd.f32 0.0, %v3905
        %v3907 = vpop.f32.mrf.mxu0
        %v3908 = vadd.f32 0.0, %v3907
        %3909 = vmatmul.bf16.gmra.mxu0 %v3825
        %v3910 = vpop.f32.mrf.mxu0
        %v3911 = vadd.f32 0.0, %v3910
        %v3912 = vpop.f32.mrf.mxu0
        %v3913 = vadd.f32 0.0, %v3912
        %3914 = vmatmul.bf16.gmra.mxu0 %v3826
        %v3915 = vpop.f32.mrf.mxu0
        %v3916 = vadd.f32 0.0, %v3915
        %v3917 = vpop.f32.mrf.mxu0
        %v3918 = vadd.f32 0.0, %v3917
        %3919 = vmatmul.bf16.gmra.mxu0 %v3827
        %v3920 = vpop.f32.mrf.mxu0
        %v3921 = vadd.f32 0.0, %v3920
        %v3922 = vpop.f32.mrf.mxu0
        %v3923 = vadd.f32 0.0, %v3922
        %3924 = vmatmul.bf16.gmra.mxu0 %v3828
        %v3925 = vpop.f32.mrf.mxu0
        %v3926 = vadd.f32 0.0, %v3925
        %v3927 = vpop.f32.mrf.mxu0
        %v3928 = vadd.f32 0.0, %v3927
        %3929 = vmatmul.bf16.gmra.mxu0 %v3829
        %v3930 = vpop.f32.mrf.mxu0
        %v3931 = vadd.f32 0.0, %v3930
        %v3932 = vpop.f32.mrf.mxu0
        %v3933 = vadd.f32 0.0, %v3932
        %3934 = vdwg.mxu0
        %v3935 = vadd.f32 %v3557, %v3896
        %v3936 = vadd.f32 %v3558, %v3898
        %v3937 = vadd.f32 %v3559, %v3901
        %v3938 = vadd.f32 %v3560, %v3903
        %v3939 = vadd.f32 %v3561, %v3906
        %v3940 = vadd.f32 %v3562, %v3908
        %v3941 = vadd.f32 %v3563, %v3911
        %v3942 = vadd.f32 %v3564, %v3913
        %v3943 = vadd.f32 %v3565, %v3916
        %v3944 = vadd.f32 %v3566, %v3918
        %v3945 = vadd.f32 %v3567, %v3921
        %v3946 = vadd.f32 %v3568, %v3923
        %v3947 = vadd.f32 %v3569, %v3926
        %v3948 = vadd.f32 %v3570, %v3928
        %v3949 = vadd.f32 %v3571, %v3931
        %v3950 = vadd.f32 %v3572, %v3933
        %v3951 = vld [vmem:[%s3378] sm:$0xe]
        %v3952 = vld [vmem:[%s3378 + $0xc] sm:$0xe]
        %v3953 = vld [vmem:[%s3378 + $0x18] sm:$0xe]
        %v3954 = vld [vmem:[%s3378 + $0x24] sm:$0xe]
        %v3955 = vld [vmem:[%s3378 + $0x30] sm:$0xe]
        %v3956 = vld [vmem:[%s3378 + $0x3c] sm:$0xe]
        %v3957 = vld [vmem:[%s3378 + $0x48] sm:$0xe]
        %v3958 = vld [vmem:[%s3378 + $0x54] sm:$0xe]
        %v3983 = vrot.slane %v3951, 5
        %v3984 = vrot.slane %v3983, 4
        %v3985 = vrot.slane %v3574, 5
        %v3986 = vsel %vm938, %v3984, %v3985
        %v3987 = vrot.slane %v3985, 4
        %v3988 = vrot.slane %v3575, 5
        %v3989 = vsel %vm938, %v3987, %v3988
        %v3990 = vrot.slane %v3952, 5
        %v3991 = vrot.slane %v3990, 4
        %v3992 = vrot.slane %v3577, 5
        %v3993 = vsel %vm938, %v3991, %v3992
        %v3994 = vrot.slane %v3992, 4
        %v3995 = vrot.slane %v3578, 5
        %v3996 = vsel %vm938, %v3994, %v3995
        %v3997 = vrot.slane %v3953, 5
        %v3998 = vrot.slane %v3997, 4
        %v3999 = vrot.slane %v3580, 5
        %v4000 = vsel %vm938, %v3998, %v3999
        %v4001 = vrot.slane %v3999, 4
        %v4002 = vrot.slane %v3581, 5
        %v4003 = vsel %vm938, %v4001, %v4002
        %v4004 = vrot.slane %v3954, 5
        %v4005 = vrot.slane %v4004, 4
        %v4006 = vrot.slane %v3583, 5
        %v4007 = vsel %vm938, %v4005, %v4006
        %v4008 = vrot.slane %v4006, 4
        %v4009 = vrot.slane %v3584, 5
        %v4010 = vsel %vm938, %v4008, %v4009
        %v4011 = vrot.slane %v3955, 5
        %v4012 = vrot.slane %v4011, 4
        %v4013 = vrot.slane %v3586, 5
        %v4014 = vsel %vm938, %v4012, %v4013
        %v4015 = vrot.slane %v4013, 4
        %v4016 = vrot.slane %v3587, 5
        %v4017 = vsel %vm938, %v4015, %v4016
        %v4018 = vrot.slane %v3956, 5
        %v4019 = vrot.slane %v4018, 4
        %v4020 = vrot.slane %v3589, 5
        %v4021 = vsel %vm938, %v4019, %v4020
        %v4022 = vrot.slane %v4020, 4
        %v4023 = vrot.slane %v3590, 5
        %v4024 = vsel %vm938, %v4022, %v4023
        %v4025 = vrot.slane %v3957, 5
        %v4026 = vrot.slane %v4025, 4
        %v4027 = vrot.slane %v3592, 5
        %v4028 = vsel %vm938, %v4026, %v4027
        %v4029 = vrot.slane %v4027, 4
        %v4030 = vrot.slane %v3593, 5
        %v4031 = vsel %vm938, %v4029, %v4030
        %v4032 = vrot.slane %v3958, 5
        %v4033 = vrot.slane %v4032, 4
        %v4034 = vrot.slane %v3595, 5
        %v4035 = vsel %vm938, %v4033, %v4034
        %v4036 = vrot.slane %v4034, 4
        %v4037 = vrot.slane %v3596, 5
        %v4038 = vsel %vm938, %v4036, %v4037
        %s4039 = scalar_lea.vmem [#allocation3], 320
        %v4040 = vld [vmem:[%s4039] sm:$0xf]
        %v4041 = vld [vmem:[%s4039 + $0x4] sm:$0xf]
        %v4042 = vld [vmem:[%s4039 + $0x8] sm:$0xf]
        %v4043 = vld [vmem:[%s4039 + $0xc] sm:$0xf]
        %v4044 = vld [vmem:[%s4039 + $0x10] sm:$0xf]
        %v4045 = vld [vmem:[%s4039 + $0x14] sm:$0xf]
        %v4046 = vld [vmem:[%s4039 + $0x18] sm:$0xf]
        %v4047 = vld [vmem:[%s4039 + $0x1c] sm:$0xf]
        %v4048 = vld [vmem:[%s4039 + $0x20] sm:$0xf]
        %v4049 = vld [vmem:[%s4039 + $0x24] sm:$0xf]
        %v4050 = vld [vmem:[%s4039 + $0x28] sm:$0xf]
        %v4051 = vld [vmem:[%s4039 + $0x2c] sm:$0xf]
        %v4052 = vld [vmem:[%s4039 + $0x30] sm:$0xf]
        %v4053 = vld [vmem:[%s4039 + $0x34] sm:$0xf]
        %v4054 = vld [vmem:[%s4039 + $0x38] sm:$0xf]
        %v4055 = vld [vmem:[%s4039 + $0x3c] sm:$0xf]
        %v4056 = vunpack.c.l.b16 %v3986
        %v4057 = vunpack.c.l.b16 %v3989
        %v4058 = vunpack.c.l.b16 %v3993
        %v4059 = vunpack.c.l.b16 %v3996
        %v4060 = vunpack.c.l.b16 %v4000
        %v4061 = vunpack.c.l.b16 %v4003
        %v4062 = vunpack.c.l.b16 %v4007
        %v4063 = vunpack.c.l.b16 %v4010
        %v4064 = vunpack.c.l.b16 %v4014
        %v4065 = vunpack.c.l.b16 %v4017
        %v4066 = vunpack.c.l.b16 %v4021
        %v4067 = vunpack.c.l.b16 %v4024
        %v4068 = vunpack.c.l.b16 %v4028
        %v4069 = vunpack.c.l.b16 %v4031
        %v4070 = vunpack.c.l.b16 %v4035
        %v4071 = vunpack.c.l.b16 %v4038
        %v4072 = vpack.c.b16 %v4057, %v4056
        %v4073 = vpack.c.b16 %v4059, %v4058
        %v4074 = vpack.c.b16 %v4061, %v4060
        %v4075 = vpack.c.b16 %v4063, %v4062
        %v4076 = vpack.c.b16 %v4065, %v4064
        %v4077 = vpack.c.b16 %v4067, %v4066
        %v4078 = vpack.c.b16 %v4069, %v4068
        %v4079 = vpack.c.b16 %v4071, %v4070
        %v4104 = vunpack.c.l.b16 %v4040
        %v4105 = vunpack.c.l.b16 %v4041
        %v4106 = vunpack.c.l.b16 %v4042
        %v4107 = vunpack.c.l.b16 %v4043
        %v4108 = vunpack.c.l.b16 %v4044
        %v4109 = vunpack.c.l.b16 %v4045
        %v4110 = vunpack.c.l.b16 %v4046
        %v4111 = vunpack.c.l.b16 %v4047
        %v4112 = vunpack.c.l.b16 %v4048
        %v4113 = vunpack.c.l.b16 %v4049
        %v4114 = vunpack.c.l.b16 %v4050
        %v4115 = vunpack.c.l.b16 %v4051
        %v4116 = vunpack.c.l.b16 %v4052
        %v4117 = vunpack.c.l.b16 %v4053
        %v4118 = vunpack.c.l.b16 %v4054
        %v4119 = vunpack.c.l.b16 %v4055
        %v4120 = vpack.c.b16 %v4105, %v4104
        %v4121 = vpack.c.b16 %v4107, %v4106
        %v4122 = vpack.c.b16 %v4109, %v4108
        %v4123 = vpack.c.b16 %v4111, %v4110
        %v4124 = vpack.c.b16 %v4113, %v4112
        %v4125 = vpack.c.b16 %v4115, %v4114
        %v4126 = vpack.c.b16 %v4117, %v4116
        %v4127 = vpack.c.b16 %v4119, %v4118
        %4136 = vmatpush.bf16.msra.mxu0 %v4127
        %4137 = vmatpush.bf16.msra.mxu0 %v4126
        %4138 = vmatpush.bf16.msra.mxu0 %v4125
        %4139 = vmatpush.bf16.msra.mxu0 %v4124
        %4140 = vmatpush.bf16.msra.mxu0 %v4123
        %4141 = vmatpush.bf16.msra.mxu0 %v4122
        %4142 = vmatpush.bf16.msra.mxu0 %v4121
        %4143 = vmatpush.bf16.msra.mxu0 %v4120
        %4144 = vmatmul.bf16.gmra.mxu0 %v4072
        %v4145 = vpop.f32.mrf.mxu0
        %v4146 = vadd.f32 0.0, %v4145
        %v4147 = vpop.f32.mrf.mxu0
        %v4148 = vadd.f32 0.0, %v4147
        %4149 = vmatmul.bf16.gmra.mxu0 %v4073
        %v4150 = vpop.f32.mrf.mxu0
        %v4151 = vadd.f32 0.0, %v4150
        %v4152 = vpop.f32.mrf.mxu0
        %v4153 = vadd.f32 0.0, %v4152
        %4154 = vmatmul.bf16.gmra.mxu0 %v4074
        %v4155 = vpop.f32.mrf.mxu0
        %v4156 = vadd.f32 0.0, %v4155
        %v4157 = vpop.f32.mrf.mxu0
        %v4158 = vadd.f32 0.0, %v4157
        %4159 = vmatmul.bf16.gmra.mxu0 %v4075
        %v4160 = vpop.f32.mrf.mxu0
        %v4161 = vadd.f32 0.0, %v4160
        %v4162 = vpop.f32.mrf.mxu0
        %v4163 = vadd.f32 0.0, %v4162
        %4164 = vmatmul.bf16.gmra.mxu0 %v4076
        %v4165 = vpop.f32.mrf.mxu0
        %v4166 = vadd.f32 0.0, %v4165
        %v4167 = vpop.f32.mrf.mxu0
        %v4168 = vadd.f32 0.0, %v4167
        %4169 = vmatmul.bf16.gmra.mxu0 %v4077
        %v4170 = vpop.f32.mrf.mxu0
        %v4171 = vadd.f32 0.0, %v4170
        %v4172 = vpop.f32.mrf.mxu0
        %v4173 = vadd.f32 0.0, %v4172
        %4174 = vmatmul.bf16.gmra.mxu0 %v4078
        %v4175 = vpop.f32.mrf.mxu0
        %v4176 = vadd.f32 0.0, %v4175
        %v4177 = vpop.f32.mrf.mxu0
        %v4178 = vadd.f32 0.0, %v4177
        %4179 = vmatmul.bf16.gmra.mxu0 %v4079
        %v4180 = vpop.f32.mrf.mxu0
        %v4181 = vadd.f32 0.0, %v4180
        %v4182 = vpop.f32.mrf.mxu0
        %v4183 = vadd.f32 0.0, %v4182
        %4184 = vdwg.mxu0
        %v4185 = vadd.f32 %v3935, %v4146
        %v4186 = vadd.f32 %v3936, %v4148
        %v4187 = vadd.f32 %v3937, %v4151
        %v4188 = vadd.f32 %v3938, %v4153
        %v4189 = vadd.f32 %v3939, %v4156
        %v4190 = vadd.f32 %v3940, %v4158
        %v4191 = vadd.f32 %v3941, %v4161
        %v4192 = vadd.f32 %v3942, %v4163
        %v4193 = vadd.f32 %v3943, %v4166
        %v4194 = vadd.f32 %v3944, %v4168
        %v4195 = vadd.f32 %v3945, %v4171
        %v4196 = vadd.f32 %v3946, %v4173
        %v4197 = vadd.f32 %v3947, %v4176
        %v4198 = vadd.f32 %v3948, %v4178
        %v4199 = vadd.f32 %v3949, %v4181
        %v4200 = vadd.f32 %v3950, %v4183
        %s4201 = scalar_lea.vmem [#allocation2], 24
        %v4202 = vld [vmem:[%s4201] sm:$0xf]
        %v4203 = vld [vmem:[%s4201 + $0x4] sm:$0xf]
        %v4204 = vld [vmem:[%s4201 + $0xc] sm:$0xf]
        %v4205 = vld [vmem:[%s4201 + $0x10] sm:$0xf]
        %v4206 = vld [vmem:[%s4201 + $0x18] sm:$0xf]
        %v4207 = vld [vmem:[%s4201 + $0x1c] sm:$0xf]
        %v4208 = vld [vmem:[%s4201 + $0x24] sm:$0xf]
        %v4209 = vld [vmem:[%s4201 + $0x28] sm:$0xf]
        %v4210 = vld [vmem:[%s4201 + $0x30] sm:$0xf]
        %v4211 = vld [vmem:[%s4201 + $0x34] sm:$0xf]
        %v4212 = vld [vmem:[%s4201 + $0x3c] sm:$0xf]
        %v4213 = vld [vmem:[%s4201 + $0x40] sm:$0xf]
        %v4214 = vld [vmem:[%s4201 + $0x48] sm:$0xf]
        %v4215 = vld [vmem:[%s4201 + $0x4c] sm:$0xf]
        %v4216 = vld [vmem:[%s4201 + $0x54] sm:$0xf]
        %v4217 = vld [vmem:[%s4201 + $0x58] sm:$0xf]
        %s4218 = scalar_lea.vmem [#allocation3], 384
        %v4219 = vld [vmem:[%s4218] sm:$0xf]
        %v4220 = vld [vmem:[%s4218 + $0x4] sm:$0xf]
        %v4221 = vld [vmem:[%s4218 + $0x8] sm:$0xf]
        %v4222 = vld [vmem:[%s4218 + $0xc] sm:$0xf]
        %v4223 = vld [vmem:[%s4218 + $0x10] sm:$0xf]
        %v4224 = vld [vmem:[%s4218 + $0x14] sm:$0xf]
        %v4225 = vld [vmem:[%s4218 + $0x18] sm:$0xf]
        %v4226 = vld [vmem:[%s4218 + $0x1c] sm:$0xf]
        %v4227 = vld [vmem:[%s4218 + $0x20] sm:$0xf]
        %v4228 = vld [vmem:[%s4218 + $0x24] sm:$0xf]
        %v4229 = vld [vmem:[%s4218 + $0x28] sm:$0xf]
        %v4230 = vld [vmem:[%s4218 + $0x2c] sm:$0xf]
        %v4231 = vld [vmem:[%s4218 + $0x30] sm:$0xf]
        %v4232 = vld [vmem:[%s4218 + $0x34] sm:$0xf]
        %v4233 = vld [vmem:[%s4218 + $0x38] sm:$0xf]
        %v4234 = vld [vmem:[%s4218 + $0x3c] sm:$0xf]
        %v4251 = vunpack.c.l.b16 %v4202
        %v4252 = vunpack.c.l.b16 %v4203
        %v4253 = vunpack.c.l.b16 %v4204
        %v4254 = vunpack.c.l.b16 %v4205
        %v4255 = vunpack.c.l.b16 %v4206
        %v4256 = vunpack.c.l.b16 %v4207
        %v4257 = vunpack.c.l.b16 %v4208
        %v4258 = vunpack.c.l.b16 %v4209
        %v4259 = vunpack.c.l.b16 %v4210
        %v4260 = vunpack.c.l.b16 %v4211
        %v4261 = vunpack.c.l.b16 %v4212
        %v4262 = vunpack.c.l.b16 %v4213
        %v4263 = vunpack.c.l.b16 %v4214
        %v4264 = vunpack.c.l.b16 %v4215
        %v4265 = vunpack.c.l.b16 %v4216
        %v4266 = vunpack.c.l.b16 %v4217
        %v4267 = vpack.c.b16 %v4252, %v4251
        %v4268 = vpack.c.b16 %v4254, %v4253
        %v4269 = vpack.c.b16 %v4256, %v4255
        %v4270 = vpack.c.b16 %v4258, %v4257
        %v4271 = vpack.c.b16 %v4260, %v4259
        %v4272 = vpack.c.b16 %v4262, %v4261
        %v4273 = vpack.c.b16 %v4264, %v4263
        %v4274 = vpack.c.b16 %v4266, %v4265
        %v4299 = vunpack.c.l.b16 %v4219
        %v4300 = vunpack.c.l.b16 %v4220
        %v4301 = vunpack.c.l.b16 %v4221
        %v4302 = vunpack.c.l.b16 %v4222
        %v4303 = vunpack.c.l.b16 %v4223
        %v4304 = vunpack.c.l.b16 %v4224
        %v4305 = vunpack.c.l.b16 %v4225
        %v4306 = vunpack.c.l.b16 %v4226
        %v4307 = vunpack.c.l.b16 %v4227
        %v4308 = vunpack.c.l.b16 %v4228
        %v4309 = vunpack.c.l.b16 %v4229
        %v4310 = vunpack.c.l.b16 %v4230
        %v4311 = vunpack.c.l.b16 %v4231
        %v4312 = vunpack.c.l.b16 %v4232
        %v4313 = vunpack.c.l.b16 %v4233
        %v4314 = vunpack.c.l.b16 %v4234
        %v4315 = vpack.c.b16 %v4300, %v4299
        %v4316 = vpack.c.b16 %v4302, %v4301
        %v4317 = vpack.c.b16 %v4304, %v4303
        %v4318 = vpack.c.b16 %v4306, %v4305
        %v4319 = vpack.c.b16 %v4308, %v4307
        %v4320 = vpack.c.b16 %v4310, %v4309
        %v4321 = vpack.c.b16 %v4312, %v4311
        %v4322 = vpack.c.b16 %v4314, %v4313
        %4331 = vmatpush.bf16.msra.mxu0 %v4322
        %4332 = vmatpush.bf16.msra.mxu0 %v4321
        %4333 = vmatpush.bf16.msra.mxu0 %v4320
        %4334 = vmatpush.bf16.msra.mxu0 %v4319
        %4335 = vmatpush.bf16.msra.mxu0 %v4318
        %4336 = vmatpush.bf16.msra.mxu0 %v4317
        %4337 = vmatpush.bf16.msra.mxu0 %v4316
        %4338 = vmatpush.bf16.msra.mxu0 %v4315
        %4339 = vmatmul.bf16.gmra.mxu0 %v4267
        %v4340 = vpop.f32.mrf.mxu0
        %v4341 = vadd.f32 0.0, %v4340
        %v4342 = vpop.f32.mrf.mxu0
        %v4343 = vadd.f32 0.0, %v4342
        %4344 = vmatmul.bf16.gmra.mxu0 %v4268
        %v4345 = vpop.f32.mrf.mxu0
        %v4346 = vadd.f32 0.0, %v4345
        %v4347 = vpop.f32.mrf.mxu0
        %v4348 = vadd.f32 0.0, %v4347
        %4349 = vmatmul.bf16.gmra.mxu0 %v4269
        %v4350 = vpop.f32.mrf.mxu0
        %v4351 = vadd.f32 0.0, %v4350
        %v4352 = vpop.f32.mrf.mxu0
        %v4353 = vadd.f32 0.0, %v4352
        %4354 = vmatmul.bf16.gmra.mxu0 %v4270
        %v4355 = vpop.f32.mrf.mxu0
        %v4356 = vadd.f32 0.0, %v4355
        %v4357 = vpop.f32.mrf.mxu0
        %v4358 = vadd.f32 0.0, %v4357
        %4359 = vmatmul.bf16.gmra.mxu0 %v4271
        %v4360 = vpop.f32.mrf.mxu0
        %v4361 = vadd.f32 0.0, %v4360
        %v4362 = vpop.f32.mrf.mxu0
        %v4363 = vadd.f32 0.0, %v4362
        %4364 = vmatmul.bf16.gmra.mxu0 %v4272
        %v4365 = vpop.f32.mrf.mxu0
        %v4366 = vadd.f32 0.0, %v4365
        %v4367 = vpop.f32.mrf.mxu0
        %v4368 = vadd.f32 0.0, %v4367
        %4369 = vmatmul.bf16.gmra.mxu0 %v4273
        %v4370 = vpop.f32.mrf.mxu0
        %v4371 = vadd.f32 0.0, %v4370
        %v4372 = vpop.f32.mrf.mxu0
        %v4373 = vadd.f32 0.0, %v4372
        %4374 = vmatmul.bf16.gmra.mxu0 %v4274
        %v4375 = vpop.f32.mrf.mxu0
        %v4376 = vadd.f32 0.0, %v4375
        %v4377 = vpop.f32.mrf.mxu0
        %v4378 = vadd.f32 0.0, %v4377
        %4379 = vdwg.mxu0
        %v4380 = vadd.f32 %v4185, %v4341
        %v4381 = vadd.f32 %v4186, %v4343
        %v4382 = vadd.f32 %v4187, %v4346
        %v4383 = vadd.f32 %v4188, %v4348
        %v4384 = vadd.f32 %v4189, %v4351
        %v4385 = vadd.f32 %v4190, %v4353
        %v4386 = vadd.f32 %v4191, %v4356
        %v4387 = vadd.f32 %v4192, %v4358
        %v4388 = vadd.f32 %v4193, %v4361
        %v4389 = vadd.f32 %v4194, %v4363
        %v4390 = vadd.f32 %v4195, %v4366
        %v4391 = vadd.f32 %v4196, %v4368
        %v4392 = vadd.f32 %v4197, %v4371
        %v4393 = vadd.f32 %v4198, %v4373
        %v4394 = vadd.f32 %v4199, %v4376
        %v4395 = vadd.f32 %v4200, %v4378
        %v4396 = vld [vmem:[%s4201] sm:$0xf]
        %v4397 = vld [vmem:[%s4201 + $0x4] sm:$0xf]
        %v4398 = vld [vmem:[%s4201 + $0x8] sm:$0x1]
        %v4399 = vld [vmem:[%s4201 + $0xc] sm:$0xf]
        %v4400 = vld [vmem:[%s4201 + $0x10] sm:$0xf]
        %v4401 = vld [vmem:[%s4201 + $0x14] sm:$0x1]
        %v4402 = vld [vmem:[%s4201 + $0x18] sm:$0xf]
        %v4403 = vld [vmem:[%s4201 + $0x1c] sm:$0xf]
        %v4404 = vld [vmem:[%s4201 + $0x20] sm:$0x1]
        %v4405 = vld [vmem:[%s4201 + $0x24] sm:$0xf]
        %v4406 = vld [vmem:[%s4201 + $0x28] sm:$0xf]
        %v4407 = vld [vmem:[%s4201 + $0x2c] sm:$0x1]
        %v4408 = vld [vmem:[%s4201 + $0x30] sm:$0xf]
        %v4409 = vld [vmem:[%s4201 + $0x34] sm:$0xf]
        %v4410 = vld [vmem:[%s4201 + $0x38] sm:$0x1]
        %v4411 = vld [vmem:[%s4201 + $0x3c] sm:$0xf]
        %v4412 = vld [vmem:[%s4201 + $0x40] sm:$0xf]
        %v4413 = vld [vmem:[%s4201 + $0x44] sm:$0x1]
        %v4414 = vld [vmem:[%s4201 + $0x48] sm:$0xf]
        %v4415 = vld [vmem:[%s4201 + $0x4c] sm:$0xf]
        %v4416 = vld [vmem:[%s4201 + $0x50] sm:$0x1]
        %v4417 = vld [vmem:[%s4201 + $0x54] sm:$0xf]
        %v4418 = vld [vmem:[%s4201 + $0x58] sm:$0xf]
        %v4419 = vld [vmem:[%s4201 + $0x5c] sm:$0x1]
        %v4421 = vshrl.u32 %v4396, 16
        %v4423 = vrot.slane %v4421, 4
        %v4424 = vshll.u32 %v4396, 16
        %v4426 = vrot.slane %v4424, 5
        %v4427 = vor.u32 %v4423, %v4426
        %v4428 = vrot.slane %v4427, 4
        %v4430 = vshll.u32 %v4397, 16
        %v4432 = vrot.slane %v4430, 5
        %v4433 = vsel %vm354, %v4428, %v4432
        %v4434 = vshrl.u32 %v4397, 16
        %v4436 = vrot.slane %v4434, 4
        %v4437 = vor.u32 %v4436, %v4432
        %v4438 = vrot.slane %v4437, 4
        %v4440 = vshll.u32 %v4398, 16
        %v4442 = vrot.slane %v4440, 5
        %v4443 = vsel %vm354, %v4438, %v4442
        %v4445 = vshrl.u32 %v4399, 16
        %v4447 = vrot.slane %v4445, 4
        %v4448 = vshll.u32 %v4399, 16
        %v4450 = vrot.slane %v4448, 5
        %v4451 = vor.u32 %v4447, %v4450
        %v4452 = vrot.slane %v4451, 4
        %v4454 = vshll.u32 %v4400, 16
        %v4456 = vrot.slane %v4454, 5
        %v4457 = vsel %vm354, %v4452, %v4456
        %v4458 = vshrl.u32 %v4400, 16
        %v4460 = vrot.slane %v4458, 4
        %v4461 = vor.u32 %v4460, %v4456
        %v4462 = vrot.slane %v4461, 4
        %v4464 = vshll.u32 %v4401, 16
        %v4466 = vrot.slane %v4464, 5
        %v4467 = vsel %vm354, %v4462, %v4466
        %v4469 = vshrl.u32 %v4402, 16
        %v4471 = vrot.slane %v4469, 4
        %v4472 = vshll.u32 %v4402, 16
        %v4474 = vrot.slane %v4472, 5
        %v4475 = vor.u32 %v4471, %v4474
        %v4476 = vrot.slane %v4475, 4
        %v4478 = vshll.u32 %v4403, 16
        %v4480 = vrot.slane %v4478, 5
        %v4481 = vsel %vm354, %v4476, %v4480
        %v4482 = vshrl.u32 %v4403, 16
        %v4484 = vrot.slane %v4482, 4
        %v4485 = vor.u32 %v4484, %v4480
        %v4486 = vrot.slane %v4485, 4
        %v4488 = vshll.u32 %v4404, 16
        %v4490 = vrot.slane %v4488, 5
        %v4491 = vsel %vm354, %v4486, %v4490
        %v4493 = vshrl.u32 %v4405, 16
        %v4495 = vrot.slane %v4493, 4
        %v4496 = vshll.u32 %v4405, 16
        %v4498 = vrot.slane %v4496, 5
        %v4499 = vor.u32 %v4495, %v4498
        %v4500 = vrot.slane %v4499, 4
        %v4502 = vshll.u32 %v4406, 16
        %v4504 = vrot.slane %v4502, 5
        %v4505 = vsel %vm354, %v4500, %v4504
        %v4506 = vshrl.u32 %v4406, 16
        %v4508 = vrot.slane %v4506, 4
        %v4509 = vor.u32 %v4508, %v4504
        %v4510 = vrot.slane %v4509, 4
        %v4512 = vshll.u32 %v4407, 16
        %v4514 = vrot.slane %v4512, 5
        %v4515 = vsel %vm354, %v4510, %v4514
        %v4517 = vshrl.u32 %v4408, 16
        %v4519 = vrot.slane %v4517, 4
        %v4520 = vshll.u32 %v4408, 16
        %v4522 = vrot.slane %v4520, 5
        %v4523 = vor.u32 %v4519, %v4522
        %v4524 = vrot.slane %v4523, 4
        %v4526 = vshll.u32 %v4409, 16
        %v4528 = vrot.slane %v4526, 5
        %v4529 = vsel %vm354, %v4524, %v4528
        %v4530 = vshrl.u32 %v4409, 16
        %v4532 = vrot.slane %v4530, 4
        %v4533 = vor.u32 %v4532, %v4528
        %v4534 = vrot.slane %v4533, 4
        %v4536 = vshll.u32 %v4410, 16
        %v4538 = vrot.slane %v4536, 5
        %v4539 = vsel %vm354, %v4534, %v4538
        %v4541 = vshrl.u32 %v4411, 16
        %v4543 = vrot.slane %v4541, 4
        %v4544 = vshll.u32 %v4411, 16
        %v4546 = vrot.slane %v4544, 5
        %v4547 = vor.u32 %v4543, %v4546
        %v4548 = vrot.slane %v4547, 4
        %v4550 = vshll.u32 %v4412, 16
        %v4552 = vrot.slane %v4550, 5
        %v4553 = vsel %vm354, %v4548, %v4552
        %v4554 = vshrl.u32 %v4412, 16
        %v4556 = vrot.slane %v4554, 4
        %v4557 = vor.u32 %v4556, %v4552
        %v4558 = vrot.slane %v4557, 4
        %v4560 = vshll.u32 %v4413, 16
        %v4562 = vrot.slane %v4560, 5
        %v4563 = vsel %vm354, %v4558, %v4562
        %v4565 = vshrl.u32 %v4414, 16
        %v4567 = vrot.slane %v4565, 4
        %v4568 = vshll.u32 %v4414, 16
        %v4570 = vrot.slane %v4568, 5
        %v4571 = vor.u32 %v4567, %v4570
        %v4572 = vrot.slane %v4571, 4
        %v4574 = vshll.u32 %v4415, 16
        %v4576 = vrot.slane %v4574, 5
        %v4577 = vsel %vm354, %v4572, %v4576
        %v4578 = vshrl.u32 %v4415, 16
        %v4580 = vrot.slane %v4578, 4
        %v4581 = vor.u32 %v4580, %v4576
        %v4582 = vrot.slane %v4581, 4
        %v4584 = vshll.u32 %v4416, 16
        %v4586 = vrot.slane %v4584, 5
        %v4587 = vsel %vm354, %v4582, %v4586
        %v4589 = vshrl.u32 %v4417, 16
        %v4591 = vrot.slane %v4589, 4
        %v4592 = vshll.u32 %v4417, 16
        %v4594 = vrot.slane %v4592, 5
        %v4595 = vor.u32 %v4591, %v4594
        %v4596 = vrot.slane %v4595, 4
        %v4598 = vshll.u32 %v4418, 16
        %v4600 = vrot.slane %v4598, 5
        %v4601 = vsel %vm354, %v4596, %v4600
        %v4602 = vshrl.u32 %v4418, 16
        %v4604 = vrot.slane %v4602, 4
        %v4605 = vor.u32 %v4604, %v4600
        %v4606 = vrot.slane %v4605, 4
        %v4608 = vshll.u32 %v4419, 16
        %v4610 = vrot.slane %v4608, 5
        %v4611 = vsel %vm354, %v4606, %v4610
        %s4612 = scalar_lea.vmem [#allocation3], 448
        %v4613 = vld [vmem:[%s4612] sm:$0xf]
        %v4614 = vld [vmem:[%s4612 + $0x4] sm:$0xf]
        %v4615 = vld [vmem:[%s4612 + $0x8] sm:$0xf]
        %v4616 = vld [vmem:[%s4612 + $0xc] sm:$0xf]
        %v4617 = vld [vmem:[%s4612 + $0x10] sm:$0xf]
        %v4618 = vld [vmem:[%s4612 + $0x14] sm:$0xf]
        %v4619 = vld [vmem:[%s4612 + $0x18] sm:$0xf]
        %v4620 = vld [vmem:[%s4612 + $0x1c] sm:$0xf]
        %v4621 = vld [vmem:[%s4612 + $0x20] sm:$0xf]
        %v4622 = vld [vmem:[%s4612 + $0x24] sm:$0xf]
        %v4623 = vld [vmem:[%s4612 + $0x28] sm:$0xf]
        %v4624 = vld [vmem:[%s4612 + $0x2c] sm:$0xf]
        %v4625 = vld [vmem:[%s4612 + $0x30] sm:$0xf]
        %v4626 = vld [vmem:[%s4612 + $0x34] sm:$0xf]
        %v4627 = vld [vmem:[%s4612 + $0x38] sm:$0xf]
        %v4628 = vld [vmem:[%s4612 + $0x3c] sm:$0xf]
        %v4629 = vunpack.c.l.b16 %v4433
        %v4630 = vunpack.c.l.b16 %v4443
        %v4631 = vunpack.c.l.b16 %v4457
        %v4632 = vunpack.c.l.b16 %v4467
        %v4633 = vunpack.c.l.b16 %v4481
        %v4634 = vunpack.c.l.b16 %v4491
        %v4635 = vunpack.c.l.b16 %v4505
        %v4636 = vunpack.c.l.b16 %v4515
        %v4637 = vunpack.c.l.b16 %v4529
        %v4638 = vunpack.c.l.b16 %v4539
        %v4639 = vunpack.c.l.b16 %v4553
        %v4640 = vunpack.c.l.b16 %v4563
        %v4641 = vunpack.c.l.b16 %v4577
        %v4642 = vunpack.c.l.b16 %v4587
        %v4643 = vunpack.c.l.b16 %v4601
        %v4644 = vunpack.c.l.b16 %v4611
        %v4645 = vpack.c.b16 %v4630, %v4629
        %v4646 = vpack.c.b16 %v4632, %v4631
        %v4647 = vpack.c.b16 %v4634, %v4633
        %v4648 = vpack.c.b16 %v4636, %v4635
        %v4649 = vpack.c.b16 %v4638, %v4637
        %v4650 = vpack.c.b16 %v4640, %v4639
        %v4651 = vpack.c.b16 %v4642, %v4641
        %v4652 = vpack.c.b16 %v4644, %v4643
        %v4677 = vunpack.c.l.b16 %v4613
        %v4678 = vunpack.c.l.b16 %v4614
        %v4679 = vunpack.c.l.b16 %v4615
        %v4680 = vunpack.c.l.b16 %v4616
        %v4681 = vunpack.c.l.b16 %v4617
        %v4682 = vunpack.c.l.b16 %v4618
        %v4683 = vunpack.c.l.b16 %v4619
        %v4684 = vunpack.c.l.b16 %v4620
        %v4685 = vunpack.c.l.b16 %v4621
        %v4686 = vunpack.c.l.b16 %v4622
        %v4687 = vunpack.c.l.b16 %v4623
        %v4688 = vunpack.c.l.b16 %v4624
        %v4689 = vunpack.c.l.b16 %v4625
        %v4690 = vunpack.c.l.b16 %v4626
        %v4691 = vunpack.c.l.b16 %v4627
        %v4692 = vunpack.c.l.b16 %v4628
        %v4693 = vpack.c.b16 %v4678, %v4677
        %v4694 = vpack.c.b16 %v4680, %v4679
        %v4695 = vpack.c.b16 %v4682, %v4681
        %v4696 = vpack.c.b16 %v4684, %v4683
        %v4697 = vpack.c.b16 %v4686, %v4685
        %v4698 = vpack.c.b16 %v4688, %v4687
        %v4699 = vpack.c.b16 %v4690, %v4689
        %v4700 = vpack.c.b16 %v4692, %v4691
        %4709 = vmatpush.bf16.msra.mxu0 %v4700
        %4710 = vmatpush.bf16.msra.mxu0 %v4699
        %4711 = vmatpush.bf16.msra.mxu0 %v4698
        %4712 = vmatpush.bf16.msra.mxu0 %v4697
        %4713 = vmatpush.bf16.msra.mxu0 %v4696
        %4714 = vmatpush.bf16.msra.mxu0 %v4695
        %4715 = vmatpush.bf16.msra.mxu0 %v4694
        %4716 = vmatpush.bf16.msra.mxu0 %v4693
        %4717 = vmatmul.bf16.gmra.mxu0 %v4645
        %v4718 = vpop.f32.mrf.mxu0
        %v4719 = vadd.f32 0.0, %v4718
        %v4720 = vpop.f32.mrf.mxu0
        %v4721 = vadd.f32 0.0, %v4720
        %4722 = vmatmul.bf16.gmra.mxu0 %v4646
        %v4723 = vpop.f32.mrf.mxu0
        %v4724 = vadd.f32 0.0, %v4723
        %v4725 = vpop.f32.mrf.mxu0
        %v4726 = vadd.f32 0.0, %v4725
        %4727 = vmatmul.bf16.gmra.mxu0 %v4647
        %v4728 = vpop.f32.mrf.mxu0
        %v4729 = vadd.f32 0.0, %v4728
        %v4730 = vpop.f32.mrf.mxu0
        %v4731 = vadd.f32 0.0, %v4730
        %4732 = vmatmul.bf16.gmra.mxu0 %v4648
        %v4733 = vpop.f32.mrf.mxu0
        %v4734 = vadd.f32 0.0, %v4733
        %v4735 = vpop.f32.mrf.mxu0
        %v4736 = vadd.f32 0.0, %v4735
        %4737 = vmatmul.bf16.gmra.mxu0 %v4649
        %v4738 = vpop.f32.mrf.mxu0
        %v4739 = vadd.f32 0.0, %v4738
        %v4740 = vpop.f32.mrf.mxu0
        %v4741 = vadd.f32 0.0, %v4740
        %4742 = vmatmul.bf16.gmra.mxu0 %v4650
        %v4743 = vpop.f32.mrf.mxu0
        %v4744 = vadd.f32 0.0, %v4743
        %v4745 = vpop.f32.mrf.mxu0
        %v4746 = vadd.f32 0.0, %v4745
        %4747 = vmatmul.bf16.gmra.mxu0 %v4651
        %v4748 = vpop.f32.mrf.mxu0
        %v4749 = vadd.f32 0.0, %v4748
        %v4750 = vpop.f32.mrf.mxu0
        %v4751 = vadd.f32 0.0, %v4750
        %4752 = vmatmul.bf16.gmra.mxu0 %v4652
        %v4753 = vpop.f32.mrf.mxu0
        %v4754 = vadd.f32 0.0, %v4753
        %v4755 = vpop.f32.mrf.mxu0
        %v4756 = vadd.f32 0.0, %v4755
        %4757 = vdwg.mxu0
        %v4758 = vadd.f32 %v4380, %v4719
        %v4759 = vadd.f32 %v4381, %v4721
        %v4760 = vadd.f32 %v4382, %v4724
        %v4761 = vadd.f32 %v4383, %v4726
        %v4762 = vadd.f32 %v4384, %v4729
        %v4763 = vadd.f32 %v4385, %v4731
        %v4764 = vadd.f32 %v4386, %v4734
        %v4765 = vadd.f32 %v4387, %v4736
        %v4766 = vadd.f32 %v4388, %v4739
        %v4767 = vadd.f32 %v4389, %v4741
        %v4768 = vadd.f32 %v4390, %v4744
        %v4769 = vadd.f32 %v4391, %v4746
        %v4770 = vadd.f32 %v4392, %v4749
        %v4771 = vadd.f32 %v4393, %v4751
        %v4772 = vadd.f32 %v4394, %v4754
        %v4773 = vadd.f32 %v4395, %v4756
        %v4774 = vld [vmem:[%s4201] sm:$0xe]
        %v4775 = vld [vmem:[%s4201 + $0xc] sm:$0xe]
        %v4776 = vld [vmem:[%s4201 + $0x18] sm:$0xe]
        %v4777 = vld [vmem:[%s4201 + $0x24] sm:$0xe]
        %v4778 = vld [vmem:[%s4201 + $0x30] sm:$0xe]
        %v4779 = vld [vmem:[%s4201 + $0x3c] sm:$0xe]
        %v4780 = vld [vmem:[%s4201 + $0x48] sm:$0xe]
        %v4781 = vld [vmem:[%s4201 + $0x54] sm:$0xe]
        %v4806 = vrot.slane %v4774, 5
        %v4807 = vrot.slane %v4806, 4
        %v4808 = vrot.slane %v4397, 5
        %v4809 = vsel %vm938, %v4807, %v4808
        %v4810 = vrot.slane %v4808, 4
        %v4811 = vrot.slane %v4398, 5
        %v4812 = vsel %vm938, %v4810, %v4811
        %v4813 = vrot.slane %v4775, 5
        %v4814 = vrot.slane %v4813, 4
        %v4815 = vrot.slane %v4400, 5
        %v4816 = vsel %vm938, %v4814, %v4815
        %v4817 = vrot.slane %v4815, 4
        %v4818 = vrot.slane %v4401, 5
        %v4819 = vsel %vm938, %v4817, %v4818
        %v4820 = vrot.slane %v4776, 5
        %v4821 = vrot.slane %v4820, 4
        %v4822 = vrot.slane %v4403, 5
        %v4823 = vsel %vm938, %v4821, %v4822
        %v4824 = vrot.slane %v4822, 4
        %v4825 = vrot.slane %v4404, 5
        %v4826 = vsel %vm938, %v4824, %v4825
        %v4827 = vrot.slane %v4777, 5
        %v4828 = vrot.slane %v4827, 4
        %v4829 = vrot.slane %v4406, 5
        %v4830 = vsel %vm938, %v4828, %v4829
        %v4831 = vrot.slane %v4829, 4
        %v4832 = vrot.slane %v4407, 5
        %v4833 = vsel %vm938, %v4831, %v4832
        %v4834 = vrot.slane %v4778, 5
        %v4835 = vrot.slane %v4834, 4
        %v4836 = vrot.slane %v4409, 5
        %v4837 = vsel %vm938, %v4835, %v4836
        %v4838 = vrot.slane %v4836, 4
        %v4839 = vrot.slane %v4410, 5
        %v4840 = vsel %vm938, %v4838, %v4839
        %v4841 = vrot.slane %v4779, 5
        %v4842 = vrot.slane %v4841, 4
        %v4843 = vrot.slane %v4412, 5
        %v4844 = vsel %vm938, %v4842, %v4843
        %v4845 = vrot.slane %v4843, 4
        %v4846 = vrot.slane %v4413, 5
        %v4847 = vsel %vm938, %v4845, %v4846
        %v4848 = vrot.slane %v4780, 5
        %v4849 = vrot.slane %v4848, 4
        %v4850 = vrot.slane %v4415, 5
        %v4851 = vsel %vm938, %v4849, %v4850
        %v4852 = vrot.slane %v4850, 4
        %v4853 = vrot.slane %v4416, 5
        %v4854 = vsel %vm938, %v4852, %v4853
        %v4855 = vrot.slane %v4781, 5
        %v4856 = vrot.slane %v4855, 4
        %v4857 = vrot.slane %v4418, 5
        %v4858 = vsel %vm938, %v4856, %v4857
        %v4859 = vrot.slane %v4857, 4
        %v4860 = vrot.slane %v4419, 5
        %v4861 = vsel %vm938, %v4859, %v4860
        %s4862 = scalar_lea.vmem [#allocation3], 512
        %v4863 = vld [vmem:[%s4862] sm:$0xf]
        %v4864 = vld [vmem:[%s4862 + $0x4] sm:$0xf]
        %v4865 = vld [vmem:[%s4862 + $0x8] sm:$0xf]
        %v4866 = vld [vmem:[%s4862 + $0xc] sm:$0xf]
        %v4867 = vld [vmem:[%s4862 + $0x10] sm:$0xf]
        %v4868 = vld [vmem:[%s4862 + $0x14] sm:$0xf]
        %v4869 = vld [vmem:[%s4862 + $0x18] sm:$0xf]
        %v4870 = vld [vmem:[%s4862 + $0x1c] sm:$0xf]
        %v4871 = vld [vmem:[%s4862 + $0x20] sm:$0xf]
        %v4872 = vld [vmem:[%s4862 + $0x24] sm:$0xf]
        %v4873 = vld [vmem:[%s4862 + $0x28] sm:$0xf]
        %v4874 = vld [vmem:[%s4862 + $0x2c] sm:$0xf]
        %v4875 = vld [vmem:[%s4862 + $0x30] sm:$0xf]
        %v4876 = vld [vmem:[%s4862 + $0x34] sm:$0xf]
        %v4877 = vld [vmem:[%s4862 + $0x38] sm:$0xf]
        %v4878 = vld [vmem:[%s4862 + $0x3c] sm:$0xf]
        %v4879 = vunpack.c.l.b16 %v4809
        %v4880 = vunpack.c.l.b16 %v4812
        %v4881 = vunpack.c.l.b16 %v4816
        %v4882 = vunpack.c.l.b16 %v4819
        %v4883 = vunpack.c.l.b16 %v4823
        %v4884 = vunpack.c.l.b16 %v4826
        %v4885 = vunpack.c.l.b16 %v4830
        %v4886 = vunpack.c.l.b16 %v4833
        %v4887 = vunpack.c.l.b16 %v4837
        %v4888 = vunpack.c.l.b16 %v4840
        %v4889 = vunpack.c.l.b16 %v4844
        %v4890 = vunpack.c.l.b16 %v4847
        %v4891 = vunpack.c.l.b16 %v4851
        %v4892 = vunpack.c.l.b16 %v4854
        %v4893 = vunpack.c.l.b16 %v4858
        %v4894 = vunpack.c.l.b16 %v4861
        %v4895 = vpack.c.b16 %v4880, %v4879
        %v4896 = vpack.c.b16 %v4882, %v4881
        %v4897 = vpack.c.b16 %v4884, %v4883
        %v4898 = vpack.c.b16 %v4886, %v4885
        %v4899 = vpack.c.b16 %v4888, %v4887
        %v4900 = vpack.c.b16 %v4890, %v4889
        %v4901 = vpack.c.b16 %v4892, %v4891
        %v4902 = vpack.c.b16 %v4894, %v4893
        %v4927 = vunpack.c.l.b16 %v4863
        %v4928 = vunpack.c.l.b16 %v4864
        %v4929 = vunpack.c.l.b16 %v4865
        %v4930 = vunpack.c.l.b16 %v4866
        %v4931 = vunpack.c.l.b16 %v4867
        %v4932 = vunpack.c.l.b16 %v4868
        %v4933 = vunpack.c.l.b16 %v4869
        %v4934 = vunpack.c.l.b16 %v4870
        %v4935 = vunpack.c.l.b16 %v4871
        %v4936 = vunpack.c.l.b16 %v4872
        %v4937 = vunpack.c.l.b16 %v4873
        %v4938 = vunpack.c.l.b16 %v4874
        %v4939 = vunpack.c.l.b16 %v4875
        %v4940 = vunpack.c.l.b16 %v4876
        %v4941 = vunpack.c.l.b16 %v4877
        %v4942 = vunpack.c.l.b16 %v4878
        %v4943 = vpack.c.b16 %v4928, %v4927
        %v4944 = vpack.c.b16 %v4930, %v4929
        %v4945 = vpack.c.b16 %v4932, %v4931
        %v4946 = vpack.c.b16 %v4934, %v4933
        %v4947 = vpack.c.b16 %v4936, %v4935
        %v4948 = vpack.c.b16 %v4938, %v4937
        %v4949 = vpack.c.b16 %v4940, %v4939
        %v4950 = vpack.c.b16 %v4942, %v4941
        %4959 = vmatpush.bf16.msra.mxu0 %v4950
        %4960 = vmatpush.bf16.msra.mxu0 %v4949
        %4961 = vmatpush.bf16.msra.mxu0 %v4948
        %4962 = vmatpush.bf16.msra.mxu0 %v4947
        %4963 = vmatpush.bf16.msra.mxu0 %v4946
        %4964 = vmatpush.bf16.msra.mxu0 %v4945
        %4965 = vmatpush.bf16.msra.mxu0 %v4944
        %4966 = vmatpush.bf16.msra.mxu0 %v4943
        %4967 = vmatmul.bf16.gmra.mxu0 %v4895
        %v4968 = vpop.f32.mrf.mxu0
        %v4969 = vadd.f32 0.0, %v4968
        %v4970 = vpop.f32.mrf.mxu0
        %v4971 = vadd.f32 0.0, %v4970
        %4972 = vmatmul.bf16.gmra.mxu0 %v4896
        %v4973 = vpop.f32.mrf.mxu0
        %v4974 = vadd.f32 0.0, %v4973
        %v4975 = vpop.f32.mrf.mxu0
        %v4976 = vadd.f32 0.0, %v4975
        %4977 = vmatmul.bf16.gmra.mxu0 %v4897
        %v4978 = vpop.f32.mrf.mxu0
        %v4979 = vadd.f32 0.0, %v4978
        %v4980 = vpop.f32.mrf.mxu0
        %v4981 = vadd.f32 0.0, %v4980
        %4982 = vmatmul.bf16.gmra.mxu0 %v4898
        %v4983 = vpop.f32.mrf.mxu0
        %v4984 = vadd.f32 0.0, %v4983
        %v4985 = vpop.f32.mrf.mxu0
        %v4986 = vadd.f32 0.0, %v4985
        %4987 = vmatmul.bf16.gmra.mxu0 %v4899
        %v4988 = vpop.f32.mrf.mxu0
        %v4989 = vadd.f32 0.0, %v4988
        %v4990 = vpop.f32.mrf.mxu0
        %v4991 = vadd.f32 0.0, %v4990
        %4992 = vmatmul.bf16.gmra.mxu0 %v4900
        %v4993 = vpop.f32.mrf.mxu0
        %v4994 = vadd.f32 0.0, %v4993
        %v4995 = vpop.f32.mrf.mxu0
        %v4996 = vadd.f32 0.0, %v4995
        %4997 = vmatmul.bf16.gmra.mxu0 %v4901
        %v4998 = vpop.f32.mrf.mxu0
        %v4999 = vadd.f32 0.0, %v4998
        %v5000 = vpop.f32.mrf.mxu0
        %v5001 = vadd.f32 0.0, %v5000
        %5002 = vmatmul.bf16.gmra.mxu0 %v4902
        %v5003 = vpop.f32.mrf.mxu0
        %v5004 = vadd.f32 0.0, %v5003
        %v5005 = vpop.f32.mrf.mxu0
        %v5006 = vadd.f32 0.0, %v5005
        %5007 = vdwg.mxu0
        %v5008 = vadd.f32 %v4758, %v4969
        %v5009 = vadd.f32 %v4759, %v4971
        %v5010 = vadd.f32 %v4760, %v4974
        %v5011 = vadd.f32 %v4761, %v4976
        %v5012 = vadd.f32 %v4762, %v4979
        %v5013 = vadd.f32 %v4763, %v4981
        %v5014 = vadd.f32 %v4764, %v4984
        %v5015 = vadd.f32 %v4765, %v4986
        %v5016 = vadd.f32 %v4766, %v4989
        %v5017 = vadd.f32 %v4767, %v4991
        %v5018 = vadd.f32 %v4768, %v4994
        %v5019 = vadd.f32 %v4769, %v4996
        %v5020 = vadd.f32 %v4770, %v4999
        %v5021 = vadd.f32 %v4771, %v5001
        %v5022 = vadd.f32 %v4772, %v5004
        %v5023 = vadd.f32 %v4773, %v5006
        %v5024 = vld [vmem:[%s4] sm:$0x1]
        %v5026 = vperm.slane %v5024, 0
        %v5028 = vadd.f32 %v5008, %v5026
        %v5029 = vadd.f32 %v5009, %v5026
        %v5030 = vadd.f32 %v5010, %v5026
        %v5031 = vadd.f32 %v5011, %v5026
        %v5032 = vadd.f32 %v5012, %v5026
        %v5033 = vadd.f32 %v5013, %v5026
        %v5034 = vadd.f32 %v5014, %v5026
        %v5035 = vadd.f32 %v5015, %v5026
        %v5036 = vadd.f32 %v5016, %v5026
        %v5037 = vadd.f32 %v5017, %v5026
        %v5038 = vadd.f32 %v5018, %v5026
        %v5039 = vadd.f32 %v5019, %v5026
        %v5040 = vadd.f32 %v5020, %v5026
        %v5041 = vadd.f32 %v5021, %v5026
        %v5042 = vadd.f32 %v5022, %v5026
        %v5043 = vadd.f32 %v5023, %v5026
        %v5044 = vpack.c.bf16 %v5028, %v5028
        %v5045 = vpack.c.bf16 %v5029, %v5029
        %v5046 = vpack.c.bf16 %v5030, %v5030
        %v5047 = vpack.c.bf16 %v5031, %v5031
        %v5048 = vpack.c.bf16 %v5032, %v5032
        %v5049 = vpack.c.bf16 %v5033, %v5033
        %v5050 = vpack.c.bf16 %v5034, %v5034
        %v5051 = vpack.c.bf16 %v5035, %v5035
        %v5052 = vpack.c.bf16 %v5036, %v5036
        %v5053 = vpack.c.bf16 %v5037, %v5037
        %v5054 = vpack.c.bf16 %v5038, %v5038
        %v5055 = vpack.c.bf16 %v5039, %v5039
        %v5056 = vpack.c.bf16 %v5040, %v5040
        %v5057 = vpack.c.bf16 %v5041, %v5041
        %v5058 = vpack.c.bf16 %v5042, %v5042
        %v5059 = vpack.c.bf16 %v5043, %v5043
        %5060 = vst [vmem:[%s281] sm:$0xf] %v5044
        %5061 = vst [vmem:[%s281 + $0x4] sm:$0xf] %v5045
        %5062 = vst [vmem:[%s281 + $0x8] sm:$0xf] %v5046
        %5063 = vst [vmem:[%s281 + $0xc] sm:$0xf] %v5047
        %5064 = vst [vmem:[%s281 + $0x10] sm:$0xf] %v5048
        %5065 = vst [vmem:[%s281 + $0x14] sm:$0xf] %v5049
        %5066 = vst [vmem:[%s281 + $0x18] sm:$0xf] %v5050
        %5067 = vst [vmem:[%s281 + $0x1c] sm:$0xf] %v5051
        %5068 = vst [vmem:[%s281 + $0x20] sm:$0xf] %v5052
        %5069 = vst [vmem:[%s281 + $0x24] sm:$0xf] %v5053
        %5070 = vst [vmem:[%s281 + $0x28] sm:$0xf] %v5054
        %5071 = vst [vmem:[%s281 + $0x2c] sm:$0xf] %v5055
        %5072 = vst [vmem:[%s281 + $0x30] sm:$0xf] %v5056
        %5073 = vst [vmem:[%s281 + $0x34] sm:$0xf] %v5057
        %5074 = vst [vmem:[%s281 + $0x38] sm:$0xf] %v5058
        %5075 = vst [vmem:[%s281 + $0x3c] sm:$0xf] %v5059
        %v5076 = vadd.f32 %v5028, %v5029
        %v5077 = vadd.f32 %v5076, %v5030
        %v5078 = vadd.f32 %v5077, %v5031
        %v5079 = vadd.f32 %v5078, %v5032
        %v5080 = vadd.f32 %v5079, %v5033
        %v5081 = vadd.f32 %v5080, %v5034
        %v5082 = vadd.f32 %v5081, %v5035
        %v5083 = vadd.f32 %v5082, %v5036
        %v5084 = vadd.f32 %v5083, %v5037
        %v5085 = vadd.f32 %v5084, %v5038
        %v5086 = vadd.f32 %v5085, %v5039
        %v5087 = vadd.f32 %v5086, %v5040
        %v5088 = vadd.f32 %v5087, %v5041
        %v5089 = vadd.f32 %v5088, %v5042
        %v5090 = vadd.f32 %v5089, %v5043
        %v5091 = vrot.slane %v5090, 4
        %v5092 = vadd.f32 %v5090, %v5091
        %v5093 = vrot.slane %v5092, 2
        %v5094 = vadd.f32 %v5092, %v5093
        %v5095 = vrot.slane %v5094, 1
        %v5096 = vadd.f32 %v5094, %v5095
        %v5097 = vmul.f32 %v5028, %v5028
        %v5098 = vmul.f32 %v5029, %v5029
        %v5099 = vmul.f32 %v5030, %v5030
        %v5100 = vmul.f32 %v5031, %v5031
        %v5101 = vmul.f32 %v5032, %v5032
        %v5102 = vmul.f32 %v5033, %v5033
        %v5103 = vmul.f32 %v5034, %v5034
        %v5104 = vmul.f32 %v5035, %v5035
        %v5105 = vmul.f32 %v5036, %v5036
        %v5106 = vmul.f32 %v5037, %v5037
        %v5107 = vmul.f32 %v5038, %v5038
        %v5108 = vmul.f32 %v5039, %v5039
        %v5109 = vmul.f32 %v5040, %v5040
        %v5110 = vmul.f32 %v5041, %v5041
        %v5111 = vmul.f32 %v5042, %v5042
        %v5112 = vmul.f32 %v5043, %v5043
        %v5113 = vadd.f32 %v5097, %v5098
        %v5114 = vadd.f32 %v5113, %v5099
        %v5115 = vadd.f32 %v5114, %v5100
        %v5116 = vadd.f32 %v5115, %v5101
        %v5117 = vadd.f32 %v5116, %v5102
        %v5118 = vadd.f32 %v5117, %v5103
        %v5119 = vadd.f32 %v5118, %v5104
        %v5120 = vadd.f32 %v5119, %v5105
        %v5121 = vadd.f32 %v5120, %v5106
        %v5122 = vadd.f32 %v5121, %v5107
        %v5123 = vadd.f32 %v5122, %v5108
        %v5124 = vadd.f32 %v5123, %v5109
        %v5125 = vadd.f32 %v5124, %v5110
        %v5126 = vadd.f32 %v5125, %v5111
        %v5127 = vadd.f32 %v5126, %v5112
        %v5128 = vrot.slane %v5127, 4
        %v5129 = vadd.f32 %v5127, %v5128
        %v5130 = vrot.slane %v5129, 2
        %v5131 = vadd.f32 %v5129, %v5130
        %v5132 = vrot.slane %v5131, 1
        %v5133 = vadd.f32 %v5131, %v5132
        %5134 = vst [vmem:[%s288] sm:$0x1] %v5096
        %5135 = vst [vmem:[%s288 + $0x1] sm:$0x1] %v5133
        %s5136 = sand.u32 %s157, 1
        %s5137 = scalar_lea.sflag [#allocation5], %s5136
        %s5138 = sand.u32 %s157, 1
        %s5139 = smul.addr %s5138, 64
        %s5140 = scalar_lea.vmem [#allocation6], %s5139
        %s5141 = sand.u32 %s185, 1
        %s5142 = scalar_lea.sflag [#allocation8], %s5141
        %s5143 = sand.u32 %s185, 1
        %s5144 = smul.addr %s5143, 2
        %s5145 = scalar_lea.vmem [#allocation7], %s5144
        // Predicated region
        $region45: #{tpu_custom_call.1} parent=39 // pred_check
          %p5146 = pneg %p167
        $region46: #{tpu_custom_call.1} parent=39 // pred_check_branch
          %5148 = sbr.rel (%p5146) target = $region48
        $region47: #{tpu_custom_call.1} parent=39 // pred_region
          %s5149 = smul.u32 8, %s30
          %5151 = vsyncadd %s5137, 0
          %s5152 = smul.addr %s5149, 2
          %s5153 = smul.addr %s29, 32
          %s5154 = sadd.s32 %s5152, %s5153
          %s5155 = smul.addr %s5154, 4
          %s5156 = scalar_lea.hbm %s5, %s5155
          %s5157 = sshll.u32 %s5140, 4
          %s5158 = int_to_ptr.vmem [resolvable:$true] %s5157
          %s5159 = sshll.u32 %s5156, 4
          %s5160 = int_to_ptr.hbm [resolvable:$true] %s5159
          %5165 = dma.vmem_to_hbm [thread:$0]  %s5158, 1024, %s5160, %s5137, 64, 64, 4
        $region48: #{tpu_custom_call.1} parent=39 // pred_fallthru
          _
        // Predicated region
        $region49: #{tpu_custom_call.1} parent=39 // pred_check
          %p5166 = pneg %p195
        $region50: #{tpu_custom_call.1} parent=39 // pred_check_branch
          %5168 = sbr.rel (%p5166) target = $region52
        $region51: #{tpu_custom_call.1} parent=39 // pred_region
          %5170 = vsyncadd %s5142, 0
          %s5171 = smul.addr %s29, 2
          %s5172 = sadd.s32 %s30, %s5171
          %s5173 = smul.addr %s5172, 2
          %s5174 = scalar_lea.hbm %s6, %s5173
          %s5176 = sshll.u32 %s5145, 4
          %s5177 = int_to_ptr.vmem [resolvable:$true] %s5176
          %s5178 = sshll.u32 %s5174, 4
          %s5179 = int_to_ptr.hbm [resolvable:$true] %s5178
          %5181 = dma.vmem_to_hbm [thread:$0]  %s5177, 32, %s5179, %s5142
        $region52: #{tpu_custom_call.1} parent=39 // pred_fallthru
          _
      $region40: #{tpu_custom_call.1} parent=5 // pred_fallthru
        _
      %p5182 = scmp.le.s32.totalorder 2, %s20
      // Predicated region
      $region53: #{tpu_custom_call.1} parent=5 // pred_check
        %p5183 = pneg %p5182
      $region54: #{tpu_custom_call.1} parent=5 // pred_check_branch
        %5185 = sbr.rel (%p5183) target = $region56
      $region55: #{tpu_custom_call.1} parent=5 // pred_region
        %s5186 = ssub.s32 %s20, 2
        // Predicated region
        $region57: #{tpu_custom_call.1} parent=55 // pred_check
          %p5187 = pneg %p173
        $region58: #{tpu_custom_call.1} parent=55 // pred_check_branch
          %5189 = sbr.rel (%p5187) target = $region60
        $region59: #{tpu_custom_call.1} parent=55 // pred_region
          %s5190 = sand.u32 %s158, 1
          %s5191 = scalar_lea.sflag [#allocation5], %s5190
          %s5192 = sand.u32 %s158, 1
          %s5193 = smul.addr %s5192, 64
          %s5194 = scalar_lea.vmem [#allocation6], %s5193
          %5196 = dma.done %s5191, 1024
        $region60: #{tpu_custom_call.1} parent=55 // pred_fallthru
          _
        // Predicated region
        $region61: #{tpu_custom_call.1} parent=55 // pred_check
          %p5197 = pneg %p201
        $region62: #{tpu_custom_call.1} parent=55 // pred_check_branch
          %5199 = sbr.rel (%p5197) target = $region64
        $region63: #{tpu_custom_call.1} parent=55 // pred_region
          %s5200 = sand.u32 %s186, 1
          %s5201 = scalar_lea.sflag [#allocation8], %s5200
          %s5202 = sand.u32 %s186, 1
          %s5203 = smul.addr %s5202, 2
          %s5204 = scalar_lea.vmem [#allocation7], %s5203
          %5206 = dma.done %s5201, 32
        $region64: #{tpu_custom_call.1} parent=55 // pred_fallthru
          _
      $region56: #{tpu_custom_call.1} parent=5 // pred_fallthru
        _
    $region6: #{tpu_custom_call.1} parent=1 // loop_footer
      %s24 = sadd.s32 1, %s20
    $region7: #{tpu_custom_call.1} parent=1 // loop_footer_branch
      %19 = sbr.rel target = $region3
    $region8: #{tpu_custom_call.1} parent=1 // loop_exit
      _
    %5207 = vsyncpa [#allocation4], 1
    %s5208 = scalar_lea.sflag [#allocation4], 1
    %5209 = vsyncpa %s5208, 1
    %5210 = vsyncpa [#allocation5], 1
    %s5211 = scalar_lea.sflag [#allocation5], 1
    %5212 = vsyncpa %s5211, 1
    %5213 = vsyncpa [#allocation8], 1
    %s5214 = scalar_lea.sflag [#allocation8], 1
    %5215 = vsyncpa %s5214, 1

</llo_original>
